<compile_context>
chip_gen: v6e
topology: v6e:2x2x1
jax: 0.10.0
libtpu: 0.0.40
codegen_flags: <defaults>
</compile_context>

<pallas_src>
import functools

import jax
import jax.numpy as jnp
from jax.experimental import pallas as pl
from jax.experimental.pallas import tpu as pltpu


def _round_up(x, m):
    return ((x + m - 1) // m) * m


def _nf_kernel(n_flows, b_ref, wu_ref, z_ref, wsel_ref, usel_ref, o_ref, ld_ref):
    # b_ref:    SMEM (n_flows,)          per-flow bias
    # wu_ref:   SMEM (n_flows,)          per-flow scalar  w . u
    # z_ref:    VMEM (TR, L)             lane-dense packed batch tile
    # wsel_ref: VMEM (n_flows, L, P)     block-diagonal copies of w
    # usel_ref: VMEM (n_flows, P, L)     block-diagonal copies of u
    # o_ref:    VMEM (TR, L)             transformed samples (packed)
    # ld_ref:   VMEM (TR, P)             per-row sum of log|det J|
    z = z_ref[...]
    ld = jnp.zeros(ld_ref.shape, jnp.float32)
    for i in range(n_flows):                      # n_flows is small & static
        wsel = wsel_ref[i]                        # (L, P)
        usel = usel_ref[i]                        # (P, L)
        # lin[r, j] = z_row(r*P + j) . w + b
        lin = jnp.dot(z, wsel, preferred_element_type=jnp.float32) + b_ref[i]
        t = jnp.tanh(lin)                         # (TR, P), tanh on the narrow column only
        # log|det J| = log|1 + (1 - tanh^2) * (w . u)|
        ld = ld + jnp.log(jnp.abs(1.0 + (1.0 - t * t) * wu_ref[i]))
        # z <- z + u * tanh(lin)   (broadcast back to lane-dense layout)
        z = z + jnp.dot(t, usel, preferred_element_type=jnp.float32)
    o_ref[...] = z.astype(o_ref.dtype)
    ld_ref[...] = ld


@functools.partial(jax.jit, static_argnames=("tile_rows",))
def normalizing_flow(x, w, u, b, *, tile_rows=512):
    """Fused forward of NormalizingFlow.

    x: (N, D) float32 samples
    w: (n_flows, 1, D), u: (n_flows, 1, D), b: (n_flows, 1)
    returns (transformed (N, D), sum_log_det (N, 1))
    """
    N, D = x.shape
    n_flows = w.shape[0]
    assert w.shape[-1] == D and u.shape[-1] == D

    w2 = w.reshape(n_flows, D).astype(jnp.float32)
    u2 = u.reshape(n_flows, D).astype(jnp.float32)
    b1 = b.reshape(n_flows).astype(jnp.float32)
    wu = jnp.sum(w2 * u2, axis=-1)                       # (n_flows,) exact f32

    # Lane-dense packing: `pack` consecutive rows share one 128-wide lane row.
    pack = 128 // D if (D <= 128 and 128 % D == 0) else 1
    L = pack * D

    rows = -(-N // pack)                                  # packed rows needed
    tr = _round_up(min(tile_rows, _round_up(rows, 8)), 8)
    rows_p = _round_up(rows, tr)
    n_pad = rows_p * pack

    xp = x if n_pad == N else jnp.pad(x, ((0, n_pad - N), (0, 0)))
    z_packed = xp.reshape(rows_p, L)                      # free row-major repack

    # Block-diagonal selector matrices (built once, tiny).
    eye = jnp.eye(pack, dtype=jnp.float32)
    # wsel[f, j*D + d, k] = w[f, d] if j == k else 0      -> (n_flows, L, pack)
    wsel = jnp.einsum("jk,fd->fjdk", eye, w2).reshape(n_flows, L, pack)
    # usel[f, j, k*D + d] = u[f, d] if j == k else 0      -> (n_flows, pack, L)
    usel = jnp.einsum("jk,fd->fjkd", eye, u2).reshape(n_flows, pack, L)

    grid = (rows_p // tr,)
    out_p, ld_p = pl.pallas_call(
        functools.partial(_nf_kernel, n_flows),
        out_shape=(
            jax.ShapeDtypeStruct((rows_p, L), x.dtype),
            jax.ShapeDtypeStruct((rows_p, pack), jnp.float32),
        ),
        grid_spec=pltpu.PrefetchScalarGridSpec(
            num_scalar_prefetch=0,
            grid=grid,
            in_specs=[
                # per-flow scalars: SMEM, untiled
                pl.BlockSpec(memory_space=pltpu.MemorySpace.SMEM),   # b
                pl.BlockSpec(memory_space=pltpu.MemorySpace.SMEM),   # w.u
                # batch tile: lane-dense (tr, 128) block
                pl.BlockSpec((tr, L), lambda i: (i, 0)),
                # selector matrices: whole arrays resident in VMEM (no pipeline)
                pl.BlockSpec(memory_space=pltpu.MemorySpace.VMEM),   # wsel
                pl.BlockSpec(memory_space=pltpu.MemorySpace.VMEM),   # usel
            ],
            out_specs=[
                pl.BlockSpec((tr, L), lambda i: (i, 0)),
                pl.BlockSpec((tr, pack), lambda i: (i, 0)),
            ],
        ),
        compiler_params=pltpu.CompilerParams(
            dimension_semantics=("parallel",),
        ),
    )(b1, wu, z_packed, wsel, usel)

    out = out_p.reshape(n_pad, D)[:N]
    sum_log_det = ld_p.reshape(n_pad, 1)[:N]
    return out, sum_log_det


def normalizing_flow_ref(x, w, u, b):
    """Pure-JAX reference (mirrors the PyTorch module, no matmuls)."""
    n_flows = w.shape[0]
    z = x
    sld = jnp.zeros((x.shape[0], 1), jnp.float32)
    for i in range(n_flows):
        wi, ui, bi = w[i], u[i], b[i]                     # (1,D), (1,D), (1,)
        lin = jnp.sum(z * wi, axis=-1, keepdims=True) + bi
        t = jnp.tanh(lin)
        psi = (1.0 - t * t) * wi
        inner = 1.0 + jnp.sum(psi * ui, axis=-1, keepdims=True)
        sld = sld + jnp.log(jnp.abs(inner))
        z = z + ui * t
    return z, sld


if __name__ == "__main__":
    key = jax.random.PRNGKey(0)
    kx, kw, ku, kb, kx2 = jax.random.split(key, 5)

    D = 32          # flow dimension (PlanarFlow __init__ D)
    n_flows = 2     # NormalizingFlow default
    N = 4096        # base samples; 2 grid steps of 512 packed (2048 raw) rows

    # Parameters (use a wider range than the +-0.01 init so the check is
    # numerically discriminative; semantics are identical).
    w = jax.random.uniform(kw, (n_flows, 1, D), jnp.float32, minval=-0.1, maxval=0.1)
    u = jax.random.uniform(ku, (n_flows, 1, D), jnp.float32, minval=-0.1, maxval=0.1)
    b = jax.random.uniform(kb, (n_flows, 1), jnp.float32, minval=-0.1, maxval=0.1)
    x = jax.random.normal(kx, (N, D), jnp.float32)

    out, sld = normalizing_flow(x, w, u, b)
    out, sld = jax.block_until_ready((out, sld))

    ref_out, ref_sld = normalizing_flow_ref(x, w, u, b)
    assert out.shape == (N, D) and sld.shape == (N, 1)
    assert jnp.allclose(out, ref_out, atol=2e-3, rtol=1e-3), "transformed samples mismatch"
    assert jnp.allclose(sld, ref_sld, atol=1e-3, rtol=1e-3), "sum_log_det mismatch"

    # Ragged batch: exercises the padding / tile-cap path (N not divisible by pack*tile).
    x2 = jax.random.normal(kx2, (37, D), jnp.float32)
    out2, sld2 = jax.block_until_ready(normalizing_flow(x2, w, u, b))
    ref_out2, ref_sld2 = normalizing_flow_ref(x2, w, u, b)
    assert out2.shape == (37, D) and sld2.shape == (37, 1)
    assert jnp.allclose(out2, ref_out2, atol=2e-3, rtol=1e-3), "ragged transformed mismatch"
    assert jnp.allclose(sld2, ref_sld2, atol=1e-3, rtol=1e-3), "ragged sum_log_det mismatch"

    print("KERNEL_OK")
</pallas_src>

<mosaic_0001>
module attributes {stable_mosaic.version = 11 : i64} {
  func.func @_nf_kernel(%arg0: i32, %arg1: memref<2xf32, #tpu.memory_space<smem>>, %arg2: memref<2xf32, #tpu.memory_space<smem>>, %arg3: memref<512x128xf32, #tpu.memory_space<vmem>>, %arg4: memref<2x128x4xf32, #tpu.memory_space<vmem>>, %arg5: memref<2x4x128xf32, #tpu.memory_space<vmem>>, %arg6: memref<512x128xf32, #tpu.memory_space<vmem>>, %arg7: memref<512x4xf32, #tpu.memory_space<vmem>>) attributes {dimension_semantics = [#tpu.dimension_semantics<parallel>], iteration_bounds = array<i64: 2>, scalar_prefetch = 0 : i64, scratch_operands = 0 : i64, tpu.core_type = #tpu.core_type<tc>, window_params = [{transform_indices = @transform_0, window_bounds = array<i64: 2>}, {transform_indices = @transform_1, window_bounds = array<i64: 2>}, {transform_indices = @transform_2, window_bounds = array<i64: 512, 128>}, {pipeline_mode = #tpu.pipeline_mode<synchronous>, transform_indices = @transform_3, window_bounds = array<i64: 2, 128, 4>}, {pipeline_mode = #tpu.pipeline_mode<synchronous>, transform_indices = @transform_4, window_bounds = array<i64: 2, 4, 128>}, {transform_indices = @transform_5, window_bounds = array<i64: 512, 128>}, {transform_indices = @transform_6, window_bounds = array<i64: 512, 4>}]} {
    %c0 = arith.constant 0 : index
    %c0_0 = arith.constant 0 : index
    %0 = vector.load %arg3[%c0, %c0_0] : memref<512x128xf32, #tpu.memory_space<vmem>>, vector<512x128xf32>
    %cst = arith.constant 0.000000e+00 : f32
    %1 = vector.broadcast %cst : f32 to vector<512x4xf32>
    %c0_1 = arith.constant 0 : index
    %c0_2 = arith.constant 0 : index
    %c0_3 = arith.constant 0 : index
    %2 = vector.load %arg4[%c0_1, %c0_2, %c0_3] : memref<2x128x4xf32, #tpu.memory_space<vmem>>, vector<1x128x4xf32>
    %3 = vector.shape_cast %2 : vector<1x128x4xf32> to vector<128x4xf32>
    %c0_4 = arith.constant 0 : index
    %c0_5 = arith.constant 0 : index
    %c0_6 = arith.constant 0 : index
    %4 = vector.load %arg5[%c0_4, %c0_5, %c0_6] : memref<2x4x128xf32, #tpu.memory_space<vmem>>, vector<1x4x128xf32>
    %5 = vector.shape_cast %4 : vector<1x4x128xf32> to vector<4x128xf32>
    %cst_7 = arith.constant dense<0.000000e+00> : vector<512x4xf32>
    %6 = tpu.matmul %0, %3, %cst_7 {dimension_numbers = #tpu.dot_dimension_numbers<[1], [0], [0], [1], [0, 0, 1, 1], [], []>} : vector<512x128xf32>, vector<128x4xf32>, vector<512x4xf32> -> vector<512x4xf32>
    %c0_8 = arith.constant 0 : index
    %7 = memref.load %arg1[%c0_8] : memref<2xf32, #tpu.memory_space<smem>>
    %8 = vector.broadcast %7 : f32 to vector<512x4xf32>
    %9 = arith.addf %6, %8 : vector<512x4xf32>
    %10 = math.tanh %9 : vector<512x4xf32>
    %11 = arith.mulf %10, %10 : vector<512x4xf32>
    %cst_9 = arith.constant 1.000000e+00 : f32
    %12 = vector.broadcast %cst_9 : f32 to vector<512x4xf32>
    %13 = arith.subf %12, %11 : vector<512x4xf32>
    %c0_10 = arith.constant 0 : index
    %14 = memref.load %arg2[%c0_10] : memref<2xf32, #tpu.memory_space<smem>>
    %15 = vector.broadcast %14 : f32 to vector<512x4xf32>
    %16 = arith.mulf %13, %15 : vector<512x4xf32>
    %cst_11 = arith.constant 1.000000e+00 : f32
    %17 = vector.broadcast %cst_11 : f32 to vector<512x4xf32>
    %18 = arith.addf %17, %16 : vector<512x4xf32>
    %19 = math.absf %18 : vector<512x4xf32>
    %20 = math.log %19 : vector<512x4xf32>
    %21 = arith.addf %1, %20 : vector<512x4xf32>
    %cst_12 = arith.constant dense<0.000000e+00> : vector<512x128xf32>
    %22 = tpu.matmul %10, %5, %cst_12 {dimension_numbers = #tpu.dot_dimension_numbers<[1], [0], [0], [1], [0, 0, 1, 1], [], []>} : vector<512x4xf32>, vector<4x128xf32>, vector<512x128xf32> -> vector<512x128xf32>
    %23 = arith.addf %0, %22 : vector<512x128xf32>
    %c1 = arith.constant 1 : index
    %c0_13 = arith.constant 0 : index
    %c0_14 = arith.constant 0 : index
    %24 = vector.load %arg4[%c1, %c0_13, %c0_14] : memref<2x128x4xf32, #tpu.memory_space<vmem>>, vector<1x128x4xf32>
    %25 = vector.shape_cast %24 : vector<1x128x4xf32> to vector<128x4xf32>
    %c1_15 = arith.constant 1 : index
    %c0_16 = arith.constant 0 : index
    %c0_17 = arith.constant 0 : index
    %26 = vector.load %arg5[%c1_15, %c0_16, %c0_17] : memref<2x4x128xf32, #tpu.memory_space<vmem>>, vector<1x4x128xf32>
    %27 = vector.shape_cast %26 : vector<1x4x128xf32> to vector<4x128xf32>
    %cst_18 = arith.constant dense<0.000000e+00> : vector<512x4xf32>
    %28 = tpu.matmul %23, %25, %cst_18 {dimension_numbers = #tpu.dot_dimension_numbers<[1], [0], [0], [1], [0, 0, 1, 1], [], []>} : vector<512x128xf32>, vector<128x4xf32>, vector<512x4xf32> -> vector<512x4xf32>
    %c1_19 = arith.constant 1 : index
    %29 = memref.load %arg1[%c1_19] : memref<2xf32, #tpu.memory_space<smem>>
    %30 = vector.broadcast %29 : f32 to vector<512x4xf32>
    %31 = arith.addf %28, %30 : vector<512x4xf32>
    %32 = math.tanh %31 : vector<512x4xf32>
    %33 = arith.mulf %32, %32 : vector<512x4xf32>
    %cst_20 = arith.constant 1.000000e+00 : f32
    %34 = vector.broadcast %cst_20 : f32 to vector<512x4xf32>
    %35 = arith.subf %34, %33 : vector<512x4xf32>
    %c1_21 = arith.constant 1 : index
    %36 = memref.load %arg2[%c1_21] : memref<2xf32, #tpu.memory_space<smem>>
    %37 = vector.broadcast %36 : f32 to vector<512x4xf32>
    %38 = arith.mulf %35, %37 : vector<512x4xf32>
    %cst_22 = arith.constant 1.000000e+00 : f32
    %39 = vector.broadcast %cst_22 : f32 to vector<512x4xf32>
    %40 = arith.addf %39, %38 : vector<512x4xf32>
    %41 = math.absf %40 : vector<512x4xf32>
    %42 = math.log %41 : vector<512x4xf32>
    %43 = arith.addf %21, %42 : vector<512x4xf32>
    %cst_23 = arith.constant dense<0.000000e+00> : vector<512x128xf32>
    %44 = tpu.matmul %32, %27, %cst_23 {dimension_numbers = #tpu.dot_dimension_numbers<[1], [0], [0], [1], [0, 0, 1, 1], [], []>} : vector<512x4xf32>, vector<4x128xf32>, vector<512x128xf32> -> vector<512x128xf32>
    %45 = arith.addf %23, %44 : vector<512x128xf32>
    %c0_24 = arith.constant 0 : index
    %c0_25 = arith.constant 0 : index
    %46 = vector.load %arg6[%c0_24, %c0_25] : memref<512x128xf32, #tpu.memory_space<vmem>>, vector<512x128xf32>
    tpu.vector_store %arg6[%c0_24, %c0_25], %45 {strides = array<i32>} : memref<512x128xf32, #tpu.memory_space<vmem>>, vector<512x128xf32>,
    %c0_26 = arith.constant 0 : index
    %c0_27 = arith.constant 0 : index
    %47 = vector.load %arg7[%c0_26, %c0_27] : memref<512x4xf32, #tpu.memory_space<vmem>>, vector<512x4xf32>
    tpu.vector_store %arg7[%c0_26, %c0_27], %43 {strides = array<i32>} : memref<512x4xf32, #tpu.memory_space<vmem>>, vector<512x4xf32>,
    return
  }
  func.func @transform_0(%arg0: i32) -> i32 {
    %c0_i32 = arith.constant 0 : i32
    %c0_i32_0 = arith.constant 0 : i32
    return %c0_i32 : i32
  }
  func.func @transform_1(%arg0: i32) -> i32 {
    %c0_i32 = arith.constant 0 : i32
    %c0_i32_0 = arith.constant 0 : i32
    return %c0_i32 : i32
  }
  func.func @transform_2(%arg0: i32) -> (i32, i32) {
    %c0_i32 = arith.constant 0 : i32
    %c0_i32_0 = arith.constant 0 : i32
    return %arg0, %c0_i32 : i32, i32
  }
  func.func @transform_3(%arg0: i32) -> (i32, i32, i32) {
    %c0_i32 = arith.constant 0 : i32
    %c0_i32_0 = arith.constant 0 : i32
    %c0_i32_1 = arith.constant 0 : i32
    %c0_i32_2 = arith.constant 0 : i32
    return %c0_i32, %c0_i32_0, %c0_i32_1 : i32, i32, i32
  }
  func.func @transform_4(%arg0: i32) -> (i32, i32, i32) {
    %c0_i32 = arith.constant 0 : i32
    %c0_i32_0 = arith.constant 0 : i32
    %c0_i32_1 = arith.constant 0 : i32
    %c0_i32_2 = arith.constant 0 : i32
    return %c0_i32, %c0_i32_0, %c0_i32_1 : i32, i32, i32
  }
  func.func @transform_5(%arg0: i32) -> (i32, i32) {
    %c0_i32 = arith.constant 0 : i32
    %c0_i32_0 = arith.constant 0 : i32
    return %arg0, %c0_i32 : i32, i32
  }
  func.func @transform_6(%arg0: i32) -> (i32, i32) {
    %c0_i32 = arith.constant 0 : i32
    %c0_i32_0 = arith.constant 0 : i32
    return %arg0, %c0_i32 : i32, i32
  }
}

</mosaic_0001>

<llo_original>
// kernel: normalizing_flow.1
$region0: #{normalizing_flow.1}
  #allocation0 [shape = 'u32[]', space=smem, size = 0x4, offset = 0x4, fixed_abs, tag = 'smem constant byte address 0x4 - core index']
  #allocation1 [shape = 'u32[144,128]{1,0:T(1,128)}', space=vmem, size = 0x12000, scoped, tag = 'internal scratch']
  %s0 = inlined_call_operand.vmem [shape: f32[2], index: 0, kind: input, shape index: {}]
  %s1 = inlined_call_operand.vmem [shape: f32[2], index: 1, kind: input, shape index: {}]
  %s2 = inlined_call_operand.vmem [shape: f32[1024,128], index: 2, kind: input, shape index: {}]
  %s3 = inlined_call_operand.vmem [shape: f32[2,128,4], index: 3, kind: input, shape index: {}]
  %s4 = inlined_call_operand.vmem [shape: f32[2,4,128], index: 4, kind: input, shape index: {}]
  %s5 = inlined_call_operand.vmem [shape: f32[1024,128], index: 5, kind: output, shape index: {0}]
  %s6 = inlined_call_operand.vmem [shape: f32[1024,4], index: 6, kind: output, shape index: {1}]
  %7 = xla_tuple %s5, %s6
  %s8 = sld [smem:[#allocation0]]
  $region69: #{normalizing_flow.1} parent=0
    _
  %s10 = ssub.s32 1, %s8
  %s11 = scalar_select 0, %s10, %s8
  $region1: #{normalizing_flow.1} parent=0
    #allocation2 [shape = 'u8[512]{0}', space=smem, size = 0x200, scoped, tag = 'input window, operand 0, single buffered']
    #allocation3 [shape = 's32[2]{0}', space=sflag, size = 0x8, scoped, tag = 'scoped memory for normalizing_flow.1']
    #allocation4 [shape = 'u8[512]{0}', space=smem, size = 0x200, scoped, tag = 'input window, operand 1, single buffered']
    #allocation5 [shape = 's32[1]{0}', space=sflag, size = 0x4, scoped, tag = 'scoped memory for normalizing_flow.1']
    %12 = vsyncpa [#allocation3], 0
    %13 = vsyncpa [#allocation5], 0
    loop: start=0, step=1, limit=4
    $region2: #{normalizing_flow.1} parent=1 // loop_pre_header
      _
    $region3: #{normalizing_flow.1} parent=1 // loop_header
      %s15 = sphi 0, %s19
      %p16 = scmp.ge.s32.totalorder %s15, 4
      %s23 = sphi 0, %s23
      %s25 = sphi 0, %s23
      %s26 = sphi 0, %s25
      %s40 = sphi 0, %s26
      %s44 = sphi 0, %s44
      %s46 = sphi 0, %s44
      %s47 = sphi 0, %s46
      %s61 = sphi 0, %s47
      %s67 = sphi 0, %s69
      %s70 = sphi 0, %s67
      %s71 = sphi 0, %s70
      %s87 = sphi 0, %s71
      %s91 = sphi 0, %s91
      %s93 = sphi 0, %s91
      %s94 = sphi 0, %s93
      %s108 = sphi 0, %s94
      %s112 = sphi 0, %s112
      %s114 = sphi 0, %s112
      %s115 = sphi 0, %s114
      %s129 = sphi 0, %s115
      %s135 = sphi 0, %s137
      %s138 = sphi 0, %s135
      %s139 = sphi 0, %s138
      %s155 = sphi 0, %s139
      %s161 = sphi 0, %s163
      %s164 = sphi 0, %s161
      %s165 = sphi 0, %s164
      %s181 = sphi 0, %s165
    $region4: #{normalizing_flow.1} parent=1 // loop_header_branch
      %18 = sbr.rel (%p16) target = $region8
    $region5: #{normalizing_flow.1} parent=1 // loop_body
      %s20 = ssub.s32 %s15, 1
      %s21 = ssub.s32 %s15, 2
      %s22 = sadd.s32 %s15, 1
      %s24 = sadd.s32 %s23, 1
      %p27 = scmp.eq.s32.totalorder %s15, 1
      %p28 = scmp.ne.s32.totalorder %s23, %s25
      %p29 = scmp.eq.s32.totalorder %s15, 0
      %p30 = por %p28, %p29
      %p31 = scmp.ne.s32.totalorder %s23, %s25
      %p32 = scmp.eq.s32.totalorder %s20, 1
      %p33 = por %p31, %p32
      %p34 = scmp.ne.s32.totalorder %s25, %s26
      %p35 = scmp.eq.s32.totalorder %s20, 0
      %p36 = por %p34, %p35
      %p37 = scmp.ne.s32.totalorder %s25, %s26
      %p38 = scmp.eq.s32.totalorder %s21, 1
      %p39 = por %p37, %p38
      %p41 = scmp.ne.s32.totalorder %s26, %s40
      %p42 = scmp.eq.s32.totalorder %s21, 0
      %p43 = por %p41, %p42
      %s45 = sadd.s32 %s44, 1
      %p48 = scmp.eq.s32.totalorder %s15, 1
      %p49 = scmp.ne.s32.totalorder %s44, %s46
      %p50 = scmp.eq.s32.totalorder %s15, 0
      %p51 = por %p49, %p50
      %p52 = scmp.ne.s32.totalorder %s44, %s46
      %p53 = scmp.eq.s32.totalorder %s20, 1
      %p54 = por %p52, %p53
      %p55 = scmp.ne.s32.totalorder %s46, %s47
      %p56 = scmp.eq.s32.totalorder %s20, 0
      %p57 = por %p55, %p56
      %p58 = scmp.ne.s32.totalorder %s46, %s47
      %p59 = scmp.eq.s32.totalorder %s21, 1
      %p60 = por %p58, %p59
      %p62 = scmp.ne.s32.totalorder %s47, %s61
      %p63 = scmp.eq.s32.totalorder %s21, 0
      %p64 = por %p62, %p63
      %s65 = ssub.s32 %s15, %s22
      %p66 = scmp.eq.s32.totalorder %s65, 0
      %s68 = sadd.s32 %s67, 1
      %s69 = scalar_select %p66, %s67, %s68
      %p72 = pneg %p66
      %p73 = scmp.eq.s32.totalorder %s15, 1
      %p74 = por %p72, %p73
      %p75 = scmp.ne.s32.totalorder %s67, %s70
      %p76 = scmp.eq.s32.totalorder %s15, 0
      %p77 = por %p75, %p76
      %p78 = scmp.ne.s32.totalorder %s67, %s70
      %p79 = scmp.eq.s32.totalorder %s20, 1
      %p80 = por %p78, %p79
      %p81 = scmp.ne.s32.totalorder %s70, %s71
      %p82 = scmp.eq.s32.totalorder %s20, 0
      %p83 = por %p81, %p82
      %p84 = scmp.ne.s32.totalorder %s70, %s71
      %p85 = scmp.eq.s32.totalorder %s21, 1
      %p86 = por %p84, %p85
      %p88 = scmp.ne.s32.totalorder %s71, %s87
      %p89 = scmp.eq.s32.totalorder %s21, 0
      %p90 = por %p88, %p89
      %s92 = sadd.s32 %s91, 1
      %p95 = scmp.eq.s32.totalorder %s15, 1
      %p96 = scmp.ne.s32.totalorder %s91, %s93
      %p97 = scmp.eq.s32.totalorder %s15, 0
      %p98 = por %p96, %p97
      %p99 = scmp.ne.s32.totalorder %s91, %s93
      %p100 = scmp.eq.s32.totalorder %s20, 1
      %p101 = por %p99, %p100
      %p102 = scmp.ne.s32.totalorder %s93, %s94
      %p103 = scmp.eq.s32.totalorder %s20, 0
      %p104 = por %p102, %p103
      %p105 = scmp.ne.s32.totalorder %s93, %s94
      %p106 = scmp.eq.s32.totalorder %s21, 1
      %p107 = por %p105, %p106
      %p109 = scmp.ne.s32.totalorder %s94, %s108
      %p110 = scmp.eq.s32.totalorder %s21, 0
      %p111 = por %p109, %p110
      %s113 = sadd.s32 %s112, 1
      %p116 = scmp.eq.s32.totalorder %s15, 1
      %p117 = scmp.ne.s32.totalorder %s112, %s114
      %p118 = scmp.eq.s32.totalorder %s15, 0
      %p119 = por %p117, %p118
      %p120 = scmp.ne.s32.totalorder %s112, %s114
      %p121 = scmp.eq.s32.totalorder %s20, 1
      %p122 = por %p120, %p121
      %p123 = scmp.ne.s32.totalorder %s114, %s115
      %p124 = scmp.eq.s32.totalorder %s20, 0
      %p125 = por %p123, %p124
      %p126 = scmp.ne.s32.totalorder %s114, %s115
      %p127 = scmp.eq.s32.totalorder %s21, 1
      %p128 = por %p126, %p127
      %p130 = scmp.ne.s32.totalorder %s115, %s129
      %p131 = scmp.eq.s32.totalorder %s21, 0
      %p132 = por %p130, %p131
      %s133 = ssub.s32 %s15, %s22
      %p134 = scmp.eq.s32.totalorder %s133, 0
      %s136 = sadd.s32 %s135, 1
      %s137 = scalar_select %p134, %s135, %s136
      %p140 = pneg %p134
      %p141 = scmp.eq.s32.totalorder %s15, 1
      %p142 = por %p140, %p141
      %p143 = scmp.ne.s32.totalorder %s135, %s138
      %p144 = scmp.eq.s32.totalorder %s15, 0
      %p145 = por %p143, %p144
      %p146 = scmp.ne.s32.totalorder %s135, %s138
      %p147 = scmp.eq.s32.totalorder %s20, 1
      %p148 = por %p146, %p147
      %p149 = scmp.ne.s32.totalorder %s138, %s139
      %p150 = scmp.eq.s32.totalorder %s20, 0
      %p151 = por %p149, %p150
      %p152 = scmp.ne.s32.totalorder %s138, %s139
      %p153 = scmp.eq.s32.totalorder %s21, 1
      %p154 = por %p152, %p153
      %p156 = scmp.ne.s32.totalorder %s139, %s155
      %p157 = scmp.eq.s32.totalorder %s21, 0
      %p158 = por %p156, %p157
      %s159 = ssub.s32 %s15, %s22
      %p160 = scmp.eq.s32.totalorder %s159, 0
      %s162 = sadd.s32 %s161, 1
      %s163 = scalar_select %p160, %s161, %s162
      %p166 = pneg %p160
      %p167 = scmp.eq.s32.totalorder %s15, 1
      %p168 = por %p166, %p167
      %p169 = scmp.ne.s32.totalorder %s161, %s164
      %p170 = scmp.eq.s32.totalorder %s15, 0
      %p171 = por %p169, %p170
      %p172 = scmp.ne.s32.totalorder %s161, %s164
      %p173 = scmp.eq.s32.totalorder %s20, 1
      %p174 = por %p172, %p173
      %p175 = scmp.ne.s32.totalorder %s164, %s165
      %p176 = scmp.eq.s32.totalorder %s20, 0
      %p177 = por %p175, %p176
      %p178 = scmp.ne.s32.totalorder %s164, %s165
      %p179 = scmp.eq.s32.totalorder %s21, 1
      %p180 = por %p178, %p179
      %p182 = scmp.ne.s32.totalorder %s165, %s181
      %p183 = scmp.eq.s32.totalorder %s21, 0
      %p184 = por %p182, %p183
      %p185 = scmp.le.s32.totalorder 1, %s15
      %p186 = scmp.lt.s32.totalorder %s15, 3
      %p187 = pnand %p185, %p186
      %p188 = pneg %p187
      // Predicated region
      $region9: #{normalizing_flow.1} parent=5 // pred_check
        _
      $region10: #{normalizing_flow.1} parent=5 // pred_check_branch
        %190 = sbr.rel (%p187) target = $region12
      $region11: #{normalizing_flow.1} parent=5 // pred_region
        %s191 = ssub.s32 %s15, 1
        // Predicated region
        $region13: #{normalizing_flow.1} parent=11 // pred_check
          %p192 = pneg %p36
        $region14: #{normalizing_flow.1} parent=11 // pred_check_branch
          %194 = sbr.rel (%p192) target = $region16
        $region15: #{normalizing_flow.1} parent=11 // pred_region
          %s196 = ssub.s32 16, 16
          %197 = vsyncadd [#allocation3], %s196
          %s199 = sshll.u32 %s0, 4
          %s200 = int_to_ptr.vmem [resolvable:$true] %s199
          %202 = dma.vmem_to_smem %s200, 16, [#allocation2], [#allocation3]
        $region16: #{normalizing_flow.1} parent=11 // pred_fallthru
          _
        // Predicated region
        $region17: #{normalizing_flow.1} parent=11 // pred_check
          %p203 = pneg %p57
        $region18: #{normalizing_flow.1} parent=11 // pred_check_branch
          %205 = sbr.rel (%p203) target = $region20
        $region19: #{normalizing_flow.1} parent=11 // pred_region
          %s207 = ssub.s32 16, 16
          %208 = vsyncadd [#allocation5], %s207
          %s210 = sshll.u32 %s1, 4
          %s211 = int_to_ptr.vmem [resolvable:$true] %s210
          %213 = dma.vmem_to_smem %s211, 16, [#allocation4], [#allocation5]
        $region20: #{normalizing_flow.1} parent=11 // pred_fallthru
          _
        // Predicated region
        $region21: #{normalizing_flow.1} parent=11 // pred_check
          %p214 = pneg %p104
        $region22: #{normalizing_flow.1} parent=11 // pred_check_branch
          %216 = sbr.rel (%p214) target = $region24
        $region23: #{normalizing_flow.1} parent=11 // pred_region
          _
        $region24: #{normalizing_flow.1} parent=11 // pred_fallthru
          _
        // Predicated region
        $region25: #{normalizing_flow.1} parent=11 // pred_check
          %p217 = pneg %p125
        $region26: #{normalizing_flow.1} parent=11 // pred_check_branch
          %219 = sbr.rel (%p217) target = $region28
        $region27: #{normalizing_flow.1} parent=11 // pred_region
          _
        $region28: #{normalizing_flow.1} parent=11 // pred_fallthru
          _
      $region12: #{normalizing_flow.1} parent=5 // pred_fallthru
        _
      %p220 = scmp.lt.s32.totalorder %s15, 2
      // Predicated region
      $region29: #{normalizing_flow.1} parent=5 // pred_check
        %p221 = pneg %p220
      $region30: #{normalizing_flow.1} parent=5 // pred_check_branch
        %223 = sbr.rel (%p221) target = $region32
      $region31: #{normalizing_flow.1} parent=5 // pred_region
        // Predicated region
        $region33: #{normalizing_flow.1} parent=31 // pred_check
          %p224 = pneg %p77
        $region34: #{normalizing_flow.1} parent=31 // pred_check_branch
          %226 = sbr.rel (%p224) target = $region36
        $region35: #{normalizing_flow.1} parent=31 // pred_region
          %s227 = smul.u32 64, %s15
          %p228 = scmp.lt.s32.totalorder %s227, 127
          %s229 = scalar_select %p228, %s227, 127
          %s230 = smul.addr %s229, 8
          %s231 = scalar_lea.vmem %s2, %s230
          %s232 = smul.u32 64, %s15
        $region36: #{normalizing_flow.1} parent=31 // pred_fallthru
          _
      $region32: #{normalizing_flow.1} parent=5 // pred_fallthru
        _
      %p233 = scmp.le.s32.totalorder 1, %s15
      %p234 = scmp.lt.s32.totalorder %s15, 3
      %p235 = pnand %p233, %p234
      %p236 = pneg %p235
      // Predicated region
      $region37: #{normalizing_flow.1} parent=5 // pred_check
        _
      $region38: #{normalizing_flow.1} parent=5 // pred_check_branch
        %238 = sbr.rel (%p235) target = $region40
      $region39: #{normalizing_flow.1} parent=5 // pred_region
        %s239 = ssub.s32 %s15, 1
        // Predicated region
        $region41: #{normalizing_flow.1} parent=39 // pred_check
          %p240 = pneg %p36
        $region42: #{normalizing_flow.1} parent=39 // pred_check_branch
          %242 = sbr.rel (%p240) target = $region44
        $region43: #{normalizing_flow.1} parent=39 // pred_region
          %243 = dma.done [#allocation3], 16
        $region44: #{normalizing_flow.1} parent=39 // pred_fallthru
          _
        // Predicated region
        $region45: #{normalizing_flow.1} parent=39 // pred_check
          %p244 = pneg %p57
        $region46: #{normalizing_flow.1} parent=39 // pred_check_branch
          %246 = sbr.rel (%p244) target = $region48
        $region47: #{normalizing_flow.1} parent=39 // pred_region
          %247 = dma.done [#allocation5], 16
        $region48: #{normalizing_flow.1} parent=39 // pred_fallthru
          _
        %248 = sfence
        %p249 = pneg %p36
        %p250 = pneg %p33
        %p251 = pneg %p57
        %p252 = pneg %p54
        %s253 = smul.u32 64, %s20
        %p254 = scmp.lt.s32.totalorder %s253, 127
        %s255 = scalar_select %p254, %s253, 127
        %s256 = smul.addr %s255, 8
        %s257 = scalar_lea.vmem %s2, %s256
        %p258 = pneg %p83
        %p259 = pneg %p80
        %p260 = pneg %p104
        %p261 = pneg %p101
        %p262 = pneg %p125
        %p263 = pneg %p122
        %p264 = pneg %p151
        %p265 = pneg %p148
        %s266 = smul.u32 64, %s20
        %p267 = scmp.lt.s32.totalorder %s266, 127
        %s268 = scalar_select %p267, %s266, 127
        %s269 = smul.addr %s268, 8
        %s270 = scalar_lea.vmem %s5, %s269
        %p271 = pneg %p177
        %p272 = pneg %p174
        %s273 = smul.u32 64, %s20
        %p274 = scmp.lt.s32.totalorder %s273, 127
        %s275 = scalar_select %p274, %s273, 127
        %s276 = smul.addr %s275, 8
        %s277 = scalar_lea.vmem %s6, %s276
        %s278 = smul.u32 64, %s20
        %p279 = scmp.lt.s32.totalorder %s278, 127
        %s280 = scalar_select %p279, %s278, 127
        %s281 = smul.addr %s280, 8
        %s282 = scalar_lea.vmem %s2, %s281
        %s283 = smul.u32 64, %s20
        %s284 = smul.u32 64, %s20
        %p285 = scmp.lt.s32.totalorder %s284, 127
        %s286 = scalar_select %p285, %s284, 127
        %s287 = smul.addr %s286, 8
        %s288 = scalar_lea.vmem %s5, %s287
        %s289 = smul.u32 64, %s20
        %s290 = smul.u32 64, %s20
        %p291 = scmp.lt.s32.totalorder %s290, 127
        %s292 = scalar_select %p291, %s290, 127
        %s293 = smul.addr %s292, 8
        %s294 = scalar_lea.vmem %s6, %s293
        %s295 = smul.u32 64, %s20
        %v296 = vld [vmem:[%s282] sm:$0xff]
        %v297 = vld [vmem:[%s282 + $0x8] sm:$0xff]
        %v298 = vld [vmem:[%s282 + $0x10] sm:$0xff]
        %v299 = vld [vmem:[%s282 + $0x18] sm:$0xff]
        %v300 = vld [vmem:[%s282 + $0x20] sm:$0xff]
        %v301 = vld [vmem:[%s282 + $0x28] sm:$0xff]
        %v302 = vld [vmem:[%s282 + $0x30] sm:$0xff]
        %v303 = vld [vmem:[%s282 + $0x38] sm:$0xff]
        %v304 = vld [vmem:[%s282 + $0x40] sm:$0xff]
        %v305 = vld [vmem:[%s282 + $0x48] sm:$0xff]
        %v306 = vld [vmem:[%s282 + $0x50] sm:$0xff]
        %v307 = vld [vmem:[%s282 + $0x58] sm:$0xff]
        %v308 = vld [vmem:[%s282 + $0x60] sm:$0xff]
        %v309 = vld [vmem:[%s282 + $0x68] sm:$0xff]
        %v310 = vld [vmem:[%s282 + $0x70] sm:$0xff]
        %v311 = vld [vmem:[%s282 + $0x78] sm:$0xff]
        %v312 = vld [vmem:[%s282 + $0x80] sm:$0xff]
        %v313 = vld [vmem:[%s282 + $0x88] sm:$0xff]
        %v314 = vld [vmem:[%s282 + $0x90] sm:$0xff]
        %v315 = vld [vmem:[%s282 + $0x98] sm:$0xff]
        %v316 = vld [vmem:[%s282 + $0xa0] sm:$0xff]
        %v317 = vld [vmem:[%s282 + $0xa8] sm:$0xff]
        %v318 = vld [vmem:[%s282 + $0xb0] sm:$0xff]
        %v319 = vld [vmem:[%s282 + $0xb8] sm:$0xff]
        %v320 = vld [vmem:[%s282 + $0xc0] sm:$0xff]
        %v321 = vld [vmem:[%s282 + $0xc8] sm:$0xff]
        %v322 = vld [vmem:[%s282 + $0xd0] sm:$0xff]
        %v323 = vld [vmem:[%s282 + $0xd8] sm:$0xff]
        %v324 = vld [vmem:[%s282 + $0xe0] sm:$0xff]
        %v325 = vld [vmem:[%s282 + $0xe8] sm:$0xff]
        %v326 = vld [vmem:[%s282 + $0xf0] sm:$0xff]
        %v327 = vld [vmem:[%s282 + $0xf8] sm:$0xff]
        %v328 = vld [vmem:[%s282 + $0x100] sm:$0xff]
        %v329 = vld [vmem:[%s282 + $0x108] sm:$0xff]
        %v330 = vld [vmem:[%s282 + $0x110] sm:$0xff]
        %v331 = vld [vmem:[%s282 + $0x118] sm:$0xff]
        %v332 = vld [vmem:[%s282 + $0x120] sm:$0xff]
        %v333 = vld [vmem:[%s282 + $0x128] sm:$0xff]
        %v334 = vld [vmem:[%s282 + $0x130] sm:$0xff]
        %v335 = vld [vmem:[%s282 + $0x138] sm:$0xff]
        %v336 = vld [vmem:[%s282 + $0x140] sm:$0xff]
        %v337 = vld [vmem:[%s282 + $0x148] sm:$0xff]
        %v338 = vld [vmem:[%s282 + $0x150] sm:$0xff]
        %v339 = vld [vmem:[%s282 + $0x158] sm:$0xff]
        %v340 = vld [vmem:[%s282 + $0x160] sm:$0xff]
        %v341 = vld [vmem:[%s282 + $0x168] sm:$0xff]
        %v342 = vld [vmem:[%s282 + $0x170] sm:$0xff]
        %v343 = vld [vmem:[%s282 + $0x178] sm:$0xff]
        %v344 = vld [vmem:[%s282 + $0x180] sm:$0xff]
        %v345 = vld [vmem:[%s282 + $0x188] sm:$0xff]
        %v346 = vld [vmem:[%s282 + $0x190] sm:$0xff]
        %v347 = vld [vmem:[%s282 + $0x198] sm:$0xff]
        %v348 = vld [vmem:[%s282 + $0x1a0] sm:$0xff]
        %v349 = vld [vmem:[%s282 + $0x1a8] sm:$0xff]
        %v350 = vld [vmem:[%s282 + $0x1b0] sm:$0xff]
        %v351 = vld [vmem:[%s282 + $0x1b8] sm:$0xff]
        %v352 = vld [vmem:[%s282 + $0x1c0] sm:$0xff]
        %v353 = vld [vmem:[%s282 + $0x1c8] sm:$0xff]
        %v354 = vld [vmem:[%s282 + $0x1d0] sm:$0xff]
        %v355 = vld [vmem:[%s282 + $0x1d8] sm:$0xff]
        %v356 = vld [vmem:[%s282 + $0x1e0] sm:$0xff]
        %v357 = vld [vmem:[%s282 + $0x1e8] sm:$0xff]
        %v358 = vld [vmem:[%s282 + $0x1f0] sm:$0xff]
        %v359 = vld [vmem:[%s282 + $0x1f8] sm:$0xff]
        %v360 = vld [vmem:[%s3] sm:$0xff]
        %v361 = vld [vmem:[%s3 + $0x8] sm:$0xff]
        %v362 = vld [vmem:[%s3 + $0x10] sm:$0xff]
        %v363 = vld [vmem:[%s3 + $0x18] sm:$0xff]
        %v364 = vld [vmem:[%s3 + $0x20] sm:$0xff]
        %v365 = vld [vmem:[%s3 + $0x28] sm:$0xff]
        %v366 = vld [vmem:[%s3 + $0x30] sm:$0xff]
        %v367 = vld [vmem:[%s3 + $0x38] sm:$0xff]
        %v368 = vld [vmem:[%s3 + $0x40] sm:$0xff]
        %v369 = vld [vmem:[%s3 + $0x48] sm:$0xff]
        %v370 = vld [vmem:[%s3 + $0x50] sm:$0xff]
        %v371 = vld [vmem:[%s3 + $0x58] sm:$0xff]
        %v372 = vld [vmem:[%s3 + $0x60] sm:$0xff]
        %v373 = vld [vmem:[%s3 + $0x68] sm:$0xff]
        %v374 = vld [vmem:[%s3 + $0x70] sm:$0xff]
        %v375 = vld [vmem:[%s3 + $0x78] sm:$0xff]
        %v376 = vld [vmem:[%s4] sm:$0xf]
        %s377 = sld [smem:[#allocation2]]
        %v378 = vstv %s377
        %379 = vmatprep.subr.mxu0 0.0
        %380 = vmatpush1.msra.mxu0 %v375
        %381 = vmatprep.subr.mxu0 0.0
        %382 = vmatpush1.msra.mxu0 %v374
        %383 = vmatprep.subr.mxu0 0.0
        %384 = vmatpush1.msra.mxu0 %v373
        %385 = vmatprep.subr.mxu0 0.0
        %386 = vmatpush1.msra.mxu0 %v372
        %387 = vmatprep.subr.mxu0 0.0
        %388 = vmatpush1.msra.mxu0 %v371
        %389 = vmatprep.subr.mxu0 0.0
        %390 = vmatpush1.msra.mxu0 %v370
        %391 = vmatprep.subr.mxu0 0.0
        %392 = vmatpush1.msra.mxu0 %v369
        %393 = vmatprep.subr.mxu0 0.0
        %394 = vmatpush1.msra.mxu0 %v368
        %395 = vmatprep.subr.mxu0 0.0
        %396 = vmatpush1.msra.mxu0 %v367
        %397 = vmatprep.subr.mxu0 0.0
        %398 = vmatpush1.msra.mxu0 %v366
        %399 = vmatprep.subr.mxu0 0.0
        %400 = vmatpush1.msra.mxu0 %v365
        %401 = vmatprep.subr.mxu0 0.0
        %402 = vmatpush1.msra.mxu0 %v364
        %403 = vmatprep.subr.mxu0 0.0
        %404 = vmatpush1.msra.mxu0 %v363
        %405 = vmatprep.subr.mxu0 0.0
        %406 = vmatpush1.msra.mxu0 %v362
        %407 = vmatprep.subr.mxu0 0.0
        %408 = vmatpush1.msra.mxu0 %v361
        %409 = vmatprep.subr.mxu0 0.0
        %410 = vmatpush1.msra.mxu0 %v360
        %411 = vmatprep.subr.mxu0 0.0
        %412 = vmatpush2.msra.mxu0 0.0
        %413 = vmatprep.subr.mxu0 0.0
        %414 = vmatpush2.msra.mxu0 0.0
        %415 = vmatprep.subr.mxu0 0.0
        %416 = vmatpush2.msra.mxu0 0.0
        %417 = vmatprep.subr.mxu0 0.0
        %418 = vmatpush2.msra.mxu0 0.0
        %419 = vmatprep.subr.mxu0 0.0
        %420 = vmatpush2.msra.mxu0 0.0
        %421 = vmatprep.subr.mxu0 0.0
        %422 = vmatpush2.msra.mxu0 0.0
        %423 = vmatprep.subr.mxu0 0.0
        %424 = vmatpush2.msra.mxu0 0.0
        %425 = vmatprep.subr.mxu0 0.0
        %426 = vmatpush2.msra.mxu0 0.0
        %427 = vmatprep.subr.mxu0 0.0
        %428 = vmatpush2.msra.mxu0 0.0
        %429 = vmatprep.subr.mxu0 0.0
        %430 = vmatpush2.msra.mxu0 0.0
        %431 = vmatprep.subr.mxu0 0.0
        %432 = vmatpush2.msra.mxu0 0.0
        %433 = vmatprep.subr.mxu0 0.0
        %434 = vmatpush2.msra.mxu0 0.0
        %435 = vmatprep.subr.mxu0 0.0
        %436 = vmatpush2.msra.mxu0 0.0
        %437 = vmatprep.subr.mxu0 0.0
        %438 = vmatpush2.msra.mxu0 0.0
        %439 = vmatprep.subr.mxu0 0.0
        %440 = vmatpush2.msra.mxu0 0.0
        %441 = vmatprep.subr.mxu0 0.0
        %442 = vmatpush2.msra.mxu0 0.0
        %443 = vmatprep.mubr.f32.mxu0 0.0
        %444 = vmatmul.mubr.f32.gmra.mxu0 %v296
        %v445 = vpop.f32.mrf.mxu0
        %v446 = vadd.f32 %v378, %v445
        %v447 = vpop.f32.mrf.mxu0
        %448 = vmatprep.mubr.f32.mxu0 0.0
        %449 = vmatmul.mubr.f32.gmra.mxu0 %v297
        %v450 = vpop.f32.mrf.mxu0
        %v451 = vadd.f32 %v378, %v450
        %v452 = vpop.f32.mrf.mxu0
        %453 = vmatprep.mubr.f32.mxu0 0.0
        %454 = vmatmul.mubr.f32.gmra.mxu0 %v298
        %v455 = vpop.f32.mrf.mxu0
        %v456 = vadd.f32 %v378, %v455
        %v457 = vpop.f32.mrf.mxu0
        %458 = vmatprep.mubr.f32.mxu0 0.0
        %459 = vmatmul.mubr.f32.gmra.mxu0 %v299
        %v460 = vpop.f32.mrf.mxu0
        %v461 = vadd.f32 %v378, %v460
        %v462 = vpop.f32.mrf.mxu0
        %463 = vmatprep.mubr.f32.mxu0 0.0
        %464 = vmatmul.mubr.f32.gmra.mxu0 %v300
        %v465 = vpop.f32.mrf.mxu0
        %v466 = vadd.f32 %v378, %v465
        %v467 = vpop.f32.mrf.mxu0
        %468 = vmatprep.mubr.f32.mxu0 0.0
        %469 = vmatmul.mubr.f32.gmra.mxu0 %v301
        %v470 = vpop.f32.mrf.mxu0
        %v471 = vadd.f32 %v378, %v470
        %v472 = vpop.f32.mrf.mxu0
        %473 = vmatprep.mubr.f32.mxu0 0.0
        %474 = vmatmul.mubr.f32.gmra.mxu0 %v302
        %v475 = vpop.f32.mrf.mxu0
        %v476 = vadd.f32 %v378, %v475
        %v477 = vpop.f32.mrf.mxu0
        %478 = vmatprep.mubr.f32.mxu0 0.0
        %479 = vmatmul.mubr.f32.gmra.mxu0 %v303
        %v480 = vpop.f32.mrf.mxu0
        %v481 = vadd.f32 %v378, %v480
        %v482 = vpop.f32.mrf.mxu0
        %483 = vmatprep.mubr.f32.mxu0 0.0
        %484 = vmatmul.mubr.f32.gmra.mxu0 %v304
        %v485 = vpop.f32.mrf.mxu0
        %v486 = vadd.f32 %v378, %v485
        %v487 = vpop.f32.mrf.mxu0
        %488 = vmatprep.mubr.f32.mxu0 0.0
        %489 = vmatmul.mubr.f32.gmra.mxu0 %v305
        %v490 = vpop.f32.mrf.mxu0
        %v491 = vadd.f32 %v378, %v490
        %v492 = vpop.f32.mrf.mxu0
        %493 = vmatprep.mubr.f32.mxu0 0.0
        %494 = vmatmul.mubr.f32.gmra.mxu0 %v306
        %v495 = vpop.f32.mrf.mxu0
        %v496 = vadd.f32 %v378, %v495
        %v497 = vpop.f32.mrf.mxu0
        %498 = vmatprep.mubr.f32.mxu0 0.0
        %499 = vmatmul.mubr.f32.gmra.mxu0 %v307
        %v500 = vpop.f32.mrf.mxu0
        %v501 = vadd.f32 %v378, %v500
        %v502 = vpop.f32.mrf.mxu0
        %503 = vmatprep.mubr.f32.mxu0 0.0
        %504 = vmatmul.mubr.f32.gmra.mxu0 %v308
        %v505 = vpop.f32.mrf.mxu0
        %v506 = vadd.f32 %v378, %v505
        %v507 = vpop.f32.mrf.mxu0
        %508 = vmatprep.mubr.f32.mxu0 0.0
        %509 = vmatmul.mubr.f32.gmra.mxu0 %v309
        %v510 = vpop.f32.mrf.mxu0
        %v511 = vadd.f32 %v378, %v510
        %v512 = vpop.f32.mrf.mxu0
        %513 = vmatprep.mubr.f32.mxu0 0.0
        %514 = vmatmul.mubr.f32.gmra.mxu0 %v310
        %v515 = vpop.f32.mrf.mxu0
        %v516 = vadd.f32 %v378, %v515
        %v517 = vpop.f32.mrf.mxu0
        %518 = vmatprep.mubr.f32.mxu0 0.0
        %519 = vmatmul.mubr.f32.gmra.mxu0 %v311
        %v520 = vpop.f32.mrf.mxu0
        %v521 = vadd.f32 %v378, %v520
        %v522 = vpop.f32.mrf.mxu0
        %523 = vmatprep.mubr.f32.mxu0 0.0
        %524 = vmatmul.mubr.f32.gmra.mxu0 %v312
        %v525 = vpop.f32.mrf.mxu0
        %v526 = vadd.f32 %v378, %v525
        %v527 = vpop.f32.mrf.mxu0
        %528 = vmatprep.mubr.f32.mxu0 0.0
        %529 = vmatmul.mubr.f32.gmra.mxu0 %v313
        %v530 = vpop.f32.mrf.mxu0
        %v531 = vadd.f32 %v378, %v530
        %v532 = vpop.f32.mrf.mxu0
        %533 = vmatprep.mubr.f32.mxu0 0.0
        %534 = vmatmul.mubr.f32.gmra.mxu0 %v314
        %v535 = vpop.f32.mrf.mxu0
        %v536 = vadd.f32 %v378, %v535
        %v537 = vpop.f32.mrf.mxu0
        %538 = vmatprep.mubr.f32.mxu0 0.0
        %539 = vmatmul.mubr.f32.gmra.mxu0 %v315
        %v540 = vpop.f32.mrf.mxu0
        %v541 = vadd.f32 %v378, %v540
        %v542 = vpop.f32.mrf.mxu0
        %543 = vmatprep.mubr.f32.mxu0 0.0
        %544 = vmatmul.mubr.f32.gmra.mxu0 %v316
        %v545 = vpop.f32.mrf.mxu0
        %v546 = vadd.f32 %v378, %v545
        %v547 = vpop.f32.mrf.mxu0
        %548 = vmatprep.mubr.f32.mxu0 0.0
        %549 = vmatmul.mubr.f32.gmra.mxu0 %v317
        %v550 = vpop.f32.mrf.mxu0
        %v551 = vadd.f32 %v378, %v550
        %v552 = vpop.f32.mrf.mxu0
        %553 = vmatprep.mubr.f32.mxu0 0.0
        %554 = vmatmul.mubr.f32.gmra.mxu0 %v318
        %v555 = vpop.f32.mrf.mxu0
        %v556 = vadd.f32 %v378, %v555
        %v557 = vpop.f32.mrf.mxu0
        %558 = vmatprep.mubr.f32.mxu0 0.0
        %559 = vmatmul.mubr.f32.gmra.mxu0 %v319
        %v560 = vpop.f32.mrf.mxu0
        %v561 = vadd.f32 %v378, %v560
        %v562 = vpop.f32.mrf.mxu0
        %563 = vmatprep.mubr.f32.mxu0 0.0
        %564 = vmatmul.mubr.f32.gmra.mxu0 %v320
        %v565 = vpop.f32.mrf.mxu0
        %v566 = vadd.f32 %v378, %v565
        %v567 = vpop.f32.mrf.mxu0
        %568 = vmatprep.mubr.f32.mxu0 0.0
        %569 = vmatmul.mubr.f32.gmra.mxu0 %v321
        %v570 = vpop.f32.mrf.mxu0
        %v571 = vadd.f32 %v378, %v570
        %v572 = vpop.f32.mrf.mxu0
        %573 = vmatprep.mubr.f32.mxu0 0.0
        %574 = vmatmul.mubr.f32.gmra.mxu0 %v322
        %v575 = vpop.f32.mrf.mxu0
        %v576 = vadd.f32 %v378, %v575
        %v577 = vpop.f32.mrf.mxu0
        %578 = vmatprep.mubr.f32.mxu0 0.0
        %579 = vmatmul.mubr.f32.gmra.mxu0 %v323
        %v580 = vpop.f32.mrf.mxu0
        %v581 = vadd.f32 %v378, %v580
        %v582 = vpop.f32.mrf.mxu0
        %583 = vmatprep.mubr.f32.mxu0 0.0
        %584 = vmatmul.mubr.f32.gmra.mxu0 %v324
        %v585 = vpop.f32.mrf.mxu0
        %v586 = vadd.f32 %v378, %v585
        %v587 = vpop.f32.mrf.mxu0
        %588 = vmatprep.mubr.f32.mxu0 0.0
        %589 = vmatmul.mubr.f32.gmra.mxu0 %v325
        %v590 = vpop.f32.mrf.mxu0
        %v591 = vadd.f32 %v378, %v590
        %v592 = vpop.f32.mrf.mxu0
        %593 = vmatprep.mubr.f32.mxu0 0.0
        %594 = vmatmul.mubr.f32.gmra.mxu0 %v326
        %v595 = vpop.f32.mrf.mxu0
        %v596 = vadd.f32 %v378, %v595
        %v597 = vpop.f32.mrf.mxu0
        %598 = vmatprep.mubr.f32.mxu0 0.0
        %599 = vmatmul.mubr.f32.gmra.mxu0 %v327
        %v600 = vpop.f32.mrf.mxu0
        %v601 = vadd.f32 %v378, %v600
        %v602 = vpop.f32.mrf.mxu0
        %603 = vmatprep.mubr.f32.mxu0 0.0
        %604 = vmatmul.mubr.f32.gmra.mxu0 %v328
        %v605 = vpop.f32.mrf.mxu0
        %v606 = vadd.f32 %v378, %v605
        %v607 = vpop.f32.mrf.mxu0
        %608 = vmatprep.mubr.f32.mxu0 0.0
        %609 = vmatmul.mubr.f32.gmra.mxu0 %v329
        %v610 = vpop.f32.mrf.mxu0
        %v611 = vadd.f32 %v378, %v610
        %v612 = vpop.f32.mrf.mxu0
        %613 = vmatprep.mubr.f32.mxu0 0.0
        %614 = vmatmul.mubr.f32.gmra.mxu0 %v330
        %v615 = vpop.f32.mrf.mxu0
        %v616 = vadd.f32 %v378, %v615
        %v617 = vpop.f32.mrf.mxu0
        %618 = vmatprep.mubr.f32.mxu0 0.0
        %619 = vmatmul.mubr.f32.gmra.mxu0 %v331
        %v620 = vpop.f32.mrf.mxu0
        %v621 = vadd.f32 %v378, %v620
        %v622 = vpop.f32.mrf.mxu0
        %623 = vmatprep.mubr.f32.mxu0 0.0
        %624 = vmatmul.mubr.f32.gmra.mxu0 %v332
        %v625 = vpop.f32.mrf.mxu0
        %v626 = vadd.f32 %v378, %v625
        %v627 = vpop.f32.mrf.mxu0
        %628 = vmatprep.mubr.f32.mxu0 0.0
        %629 = vmatmul.mubr.f32.gmra.mxu0 %v333
        %v630 = vpop.f32.mrf.mxu0
        %v631 = vadd.f32 %v378, %v630
        %v632 = vpop.f32.mrf.mxu0
        %633 = vmatprep.mubr.f32.mxu0 0.0
        %634 = vmatmul.mubr.f32.gmra.mxu0 %v334
        %v635 = vpop.f32.mrf.mxu0
        %v636 = vadd.f32 %v378, %v635
        %v637 = vpop.f32.mrf.mxu0
        %638 = vmatprep.mubr.f32.mxu0 0.0
        %639 = vmatmul.mubr.f32.gmra.mxu0 %v335
        %v640 = vpop.f32.mrf.mxu0
        %v641 = vadd.f32 %v378, %v640
        %v642 = vpop.f32.mrf.mxu0
        %643 = vmatprep.mubr.f32.mxu0 0.0
        %644 = vmatmul.mubr.f32.gmra.mxu0 %v336
        %v645 = vpop.f32.mrf.mxu0
        %v646 = vadd.f32 %v378, %v645
        %v647 = vpop.f32.mrf.mxu0
        %648 = vmatprep.mubr.f32.mxu0 0.0
        %649 = vmatmul.mubr.f32.gmra.mxu0 %v337
        %v650 = vpop.f32.mrf.mxu0
        %v651 = vadd.f32 %v378, %v650
        %v652 = vpop.f32.mrf.mxu0
        %653 = vmatprep.mubr.f32.mxu0 0.0
        %654 = vmatmul.mubr.f32.gmra.mxu0 %v338
        %v655 = vpop.f32.mrf.mxu0
        %v656 = vadd.f32 %v378, %v655
        %v657 = vpop.f32.mrf.mxu0
        %658 = vmatprep.mubr.f32.mxu0 0.0
        %659 = vmatmul.mubr.f32.gmra.mxu0 %v339
        %v660 = vpop.f32.mrf.mxu0
        %v661 = vadd.f32 %v378, %v660
        %v662 = vpop.f32.mrf.mxu0
        %663 = vmatprep.mubr.f32.mxu0 0.0
        %664 = vmatmul.mubr.f32.gmra.mxu0 %v340
        %v665 = vpop.f32.mrf.mxu0
        %v666 = vadd.f32 %v378, %v665
        %v667 = vpop.f32.mrf.mxu0
        %668 = vmatprep.mubr.f32.mxu0 0.0
        %669 = vmatmul.mubr.f32.gmra.mxu0 %v341
        %v670 = vpop.f32.mrf.mxu0
        %v671 = vadd.f32 %v378, %v670
        %v672 = vpop.f32.mrf.mxu0
        %673 = vmatprep.mubr.f32.mxu0 0.0
        %674 = vmatmul.mubr.f32.gmra.mxu0 %v342
        %v675 = vpop.f32.mrf.mxu0
        %v676 = vadd.f32 %v378, %v675
        %v677 = vpop.f32.mrf.mxu0
        %678 = vmatprep.mubr.f32.mxu0 0.0
        %679 = vmatmul.mubr.f32.gmra.mxu0 %v343
        %v680 = vpop.f32.mrf.mxu0
        %v681 = vadd.f32 %v378, %v680
        %v682 = vpop.f32.mrf.mxu0
        %683 = vmatprep.mubr.f32.mxu0 0.0
        %684 = vmatmul.mubr.f32.gmra.mxu0 %v344
        %v685 = vpop.f32.mrf.mxu0
        %v686 = vadd.f32 %v378, %v685
        %v687 = vpop.f32.mrf.mxu0
        %688 = vmatprep.mubr.f32.mxu0 0.0
        %689 = vmatmul.mubr.f32.gmra.mxu0 %v345
        %v690 = vpop.f32.mrf.mxu0
        %v691 = vadd.f32 %v378, %v690
        %v692 = vpop.f32.mrf.mxu0
        %693 = vmatprep.mubr.f32.mxu0 0.0
        %694 = vmatmul.mubr.f32.gmra.mxu0 %v346
        %v695 = vpop.f32.mrf.mxu0
        %v696 = vadd.f32 %v378, %v695
        %v697 = vpop.f32.mrf.mxu0
        %698 = vmatprep.mubr.f32.mxu0 0.0
        %699 = vmatmul.mubr.f32.gmra.mxu0 %v347
        %v700 = vpop.f32.mrf.mxu0
        %v701 = vadd.f32 %v378, %v700
        %v702 = vpop.f32.mrf.mxu0
        %703 = vmatprep.mubr.f32.mxu0 0.0
        %704 = vmatmul.mubr.f32.gmra.mxu0 %v348
        %v705 = vpop.f32.mrf.mxu0
        %v706 = vadd.f32 %v378, %v705
        %v707 = vpop.f32.mrf.mxu0
        %708 = vmatprep.mubr.f32.mxu0 0.0
        %709 = vmatmul.mubr.f32.gmra.mxu0 %v349
        %v710 = vpop.f32.mrf.mxu0
        %v711 = vadd.f32 %v378, %v710
        %v712 = vpop.f32.mrf.mxu0
        %713 = vmatprep.mubr.f32.mxu0 0.0
        %714 = vmatmul.mubr.f32.gmra.mxu0 %v350
        %v715 = vpop.f32.mrf.mxu0
        %v716 = vadd.f32 %v378, %v715
        %v717 = vpop.f32.mrf.mxu0
        %718 = vmatprep.mubr.f32.mxu0 0.0
        %719 = vmatmul.mubr.f32.gmra.mxu0 %v351
        %v720 = vpop.f32.mrf.mxu0
        %v721 = vadd.f32 %v378, %v720
        %v722 = vpop.f32.mrf.mxu0
        %723 = vmatprep.mubr.f32.mxu0 0.0
        %724 = vmatmul.mubr.f32.gmra.mxu0 %v352
        %v725 = vpop.f32.mrf.mxu0
        %v726 = vadd.f32 %v378, %v725
        %v727 = vpop.f32.mrf.mxu0
        %728 = vmatprep.mubr.f32.mxu0 0.0
        %729 = vmatmul.mubr.f32.gmra.mxu0 %v353
        %v730 = vpop.f32.mrf.mxu0
        %v731 = vadd.f32 %v378, %v730
        %v732 = vpop.f32.mrf.mxu0
        %733 = vmatprep.mubr.f32.mxu0 0.0
        %734 = vmatmul.mubr.f32.gmra.mxu0 %v354
        %v735 = vpop.f32.mrf.mxu0
        %v736 = vadd.f32 %v378, %v735
        %v737 = vpop.f32.mrf.mxu0
        %738 = vmatprep.mubr.f32.mxu0 0.0
        %739 = vmatmul.mubr.f32.gmra.mxu0 %v355
        %v740 = vpop.f32.mrf.mxu0
        %v741 = vadd.f32 %v378, %v740
        %v742 = vpop.f32.mrf.mxu0
        %743 = vmatprep.mubr.f32.mxu0 0.0
        %744 = vmatmul.mubr.f32.gmra.mxu0 %v356
        %v745 = vpop.f32.mrf.mxu0
        %v746 = vadd.f32 %v378, %v745
        %v747 = vpop.f32.mrf.mxu0
        %748 = vmatprep.mubr.f32.mxu0 0.0
        %749 = vmatmul.mubr.f32.gmra.mxu0 %v357
        %v750 = vpop.f32.mrf.mxu0
        %v751 = vadd.f32 %v378, %v750
        %v752 = vpop.f32.mrf.mxu0
        %753 = vmatprep.mubr.f32.mxu0 0.0
        %754 = vmatmul.mubr.f32.gmra.mxu0 %v358
        %v755 = vpop.f32.mrf.mxu0
        %v756 = vadd.f32 %v378, %v755
        %v757 = vpop.f32.mrf.mxu0
        %758 = vmatprep.mubr.f32.mxu0 0.0
        %759 = vmatmul.mubr.f32.gmra.mxu0 %v359
        %v760 = vpop.f32.mrf.mxu0
        %v761 = vadd.f32 %v378, %v760
        %v762 = vpop.f32.mrf.mxu0
        %763 = vdwg.mxu0
        %v764 = vtanh.pop %v446
        %v765 = vtanh.pop %v451
        %v766 = vtanh.pop %v456
        %v767 = vtanh.pop %v461
        %v768 = vtanh.pop %v466
        %v769 = vtanh.pop %v471
        %v770 = vtanh.pop %v476
        %v771 = vtanh.pop %v481
        %v772 = vtanh.pop %v486
        %v773 = vtanh.pop %v491
        %v774 = vtanh.pop %v496
        %v775 = vtanh.pop %v501
        %v776 = vtanh.pop %v506
        %v777 = vtanh.pop %v511
        %v778 = vtanh.pop %v516
        %v779 = vtanh.pop %v521
        %v780 = vtanh.pop %v526
        %v781 = vtanh.pop %v531
        %v782 = vtanh.pop %v536
        %v783 = vtanh.pop %v541
        %v784 = vtanh.pop %v546
        %v785 = vtanh.pop %v551
        %v786 = vtanh.pop %v556
        %v787 = vtanh.pop %v561
        %v788 = vtanh.pop %v566
        %v789 = vtanh.pop %v571
        %v790 = vtanh.pop %v576
        %v791 = vtanh.pop %v581
        %v792 = vtanh.pop %v586
        %v793 = vtanh.pop %v591
        %v794 = vtanh.pop %v596
        %v795 = vtanh.pop %v601
        %v796 = vtanh.pop %v606
        %v797 = vtanh.pop %v611
        %v798 = vtanh.pop %v616
        %v799 = vtanh.pop %v621
        %v800 = vtanh.pop %v626
        %v801 = vtanh.pop %v631
        %v802 = vtanh.pop %v636
        %v803 = vtanh.pop %v641
        %v804 = vtanh.pop %v646
        %v805 = vtanh.pop %v651
        %v806 = vtanh.pop %v656
        %v807 = vtanh.pop %v661
        %v808 = vtanh.pop %v666
        %v809 = vtanh.pop %v671
        %v810 = vtanh.pop %v676
        %v811 = vtanh.pop %v681
        %v812 = vtanh.pop %v686
        %v813 = vtanh.pop %v691
        %v814 = vtanh.pop %v696
        %v815 = vtanh.pop %v701
        %v816 = vtanh.pop %v706
        %v817 = vtanh.pop %v711
        %v818 = vtanh.pop %v716
        %v819 = vtanh.pop %v721
        %v820 = vtanh.pop %v726
        %v821 = vtanh.pop %v731
        %v822 = vtanh.pop %v736
        %v823 = vtanh.pop %v741
        %v824 = vtanh.pop %v746
        %v825 = vtanh.pop %v751
        %v826 = vtanh.pop %v756
        %v827 = vtanh.pop %v761
        %v828 = vmul.f32 %v764, %v764
        %v829 = vmul.f32 %v765, %v765
        %v830 = vmul.f32 %v766, %v766
        %v831 = vmul.f32 %v767, %v767
        %v832 = vmul.f32 %v768, %v768
        %v833 = vmul.f32 %v769, %v769
        %v834 = vmul.f32 %v770, %v770
        %v835 = vmul.f32 %v771, %v771
        %v836 = vmul.f32 %v772, %v772
        %v837 = vmul.f32 %v773, %v773
        %v838 = vmul.f32 %v774, %v774
        %v839 = vmul.f32 %v775, %v775
        %v840 = vmul.f32 %v776, %v776
        %v841 = vmul.f32 %v777, %v777
        %v842 = vmul.f32 %v778, %v778
        %v843 = vmul.f32 %v779, %v779
        %v844 = vmul.f32 %v780, %v780
        %v845 = vmul.f32 %v781, %v781
        %v846 = vmul.f32 %v782, %v782
        %v847 = vmul.f32 %v783, %v783
        %v848 = vmul.f32 %v784, %v784
        %v849 = vmul.f32 %v785, %v785
        %v850 = vmul.f32 %v786, %v786
        %v851 = vmul.f32 %v787, %v787
        %v852 = vmul.f32 %v788, %v788
        %v853 = vmul.f32 %v789, %v789
        %v854 = vmul.f32 %v790, %v790
        %v855 = vmul.f32 %v791, %v791
        %v856 = vmul.f32 %v792, %v792
        %v857 = vmul.f32 %v793, %v793
        %v858 = vmul.f32 %v794, %v794
        %v859 = vmul.f32 %v795, %v795
        %v860 = vmul.f32 %v796, %v796
        %v861 = vmul.f32 %v797, %v797
        %v862 = vmul.f32 %v798, %v798
        %v863 = vmul.f32 %v799, %v799
        %v864 = vmul.f32 %v800, %v800
        %v865 = vmul.f32 %v801, %v801
        %v866 = vmul.f32 %v802, %v802
        %v867 = vmul.f32 %v803, %v803
        %v868 = vmul.f32 %v804, %v804
        %v869 = vmul.f32 %v805, %v805
        %v870 = vmul.f32 %v806, %v806
        %v871 = vmul.f32 %v807, %v807
        %v872 = vmul.f32 %v808, %v808
        %v873 = vmul.f32 %v809, %v809
        %v874 = vmul.f32 %v810, %v810
        %v875 = vmul.f32 %v811, %v811
        %v876 = vmul.f32 %v812, %v812
        %v877 = vmul.f32 %v813, %v813
        %v878 = vmul.f32 %v814, %v814
        %v879 = vmul.f32 %v815, %v815
        %v880 = vmul.f32 %v816, %v816
        %v881 = vmul.f32 %v817, %v817
        %v882 = vmul.f32 %v818, %v818
        %v883 = vmul.f32 %v819, %v819
        %v884 = vmul.f32 %v820, %v820
        %v885 = vmul.f32 %v821, %v821
        %v886 = vmul.f32 %v822, %v822
        %v887 = vmul.f32 %v823, %v823
        %v888 = vmul.f32 %v824, %v824
        %v889 = vmul.f32 %v825, %v825
        %v890 = vmul.f32 %v826, %v826
        %v891 = vmul.f32 %v827, %v827
        %v892 = vsub.f32 1.0, %v828
        %v893 = vsub.f32 1.0, %v829
        %v894 = vsub.f32 1.0, %v830
        %v895 = vsub.f32 1.0, %v831
        %v896 = vsub.f32 1.0, %v832
        %v897 = vsub.f32 1.0, %v833
        %v898 = vsub.f32 1.0, %v834
        %v899 = vsub.f32 1.0, %v835
        %v900 = vsub.f32 1.0, %v836
        %v901 = vsub.f32 1.0, %v837
        %v902 = vsub.f32 1.0, %v838
        %v903 = vsub.f32 1.0, %v839
        %v904 = vsub.f32 1.0, %v840
        %v905 = vsub.f32 1.0, %v841
        %v906 = vsub.f32 1.0, %v842
        %v907 = vsub.f32 1.0, %v843
        %v908 = vsub.f32 1.0, %v844
        %v909 = vsub.f32 1.0, %v845
        %v910 = vsub.f32 1.0, %v846
        %v911 = vsub.f32 1.0, %v847
        %v912 = vsub.f32 1.0, %v848
        %v913 = vsub.f32 1.0, %v849
        %v914 = vsub.f32 1.0, %v850
        %v915 = vsub.f32 1.0, %v851
        %v916 = vsub.f32 1.0, %v852
        %v917 = vsub.f32 1.0, %v853
        %v918 = vsub.f32 1.0, %v854
        %v919 = vsub.f32 1.0, %v855
        %v920 = vsub.f32 1.0, %v856
        %v921 = vsub.f32 1.0, %v857
        %v922 = vsub.f32 1.0, %v858
        %v923 = vsub.f32 1.0, %v859
        %v924 = vsub.f32 1.0, %v860
        %v925 = vsub.f32 1.0, %v861
        %v926 = vsub.f32 1.0, %v862
        %v927 = vsub.f32 1.0, %v863
        %v928 = vsub.f32 1.0, %v864
        %v929 = vsub.f32 1.0, %v865
        %v930 = vsub.f32 1.0, %v866
        %v931 = vsub.f32 1.0, %v867
        %v932 = vsub.f32 1.0, %v868
        %v933 = vsub.f32 1.0, %v869
        %v934 = vsub.f32 1.0, %v870
        %v935 = vsub.f32 1.0, %v871
        %v936 = vsub.f32 1.0, %v872
        %v937 = vsub.f32 1.0, %v873
        %v938 = vsub.f32 1.0, %v874
        %v939 = vsub.f32 1.0, %v875
        %v940 = vsub.f32 1.0, %v876
        %v941 = vsub.f32 1.0, %v877
        %v942 = vsub.f32 1.0, %v878
        %v943 = vsub.f32 1.0, %v879
        %v944 = vsub.f32 1.0, %v880
        %v945 = vsub.f32 1.0, %v881
        %v946 = vsub.f32 1.0, %v882
        %v947 = vsub.f32 1.0, %v883
        %v948 = vsub.f32 1.0, %v884
        %v949 = vsub.f32 1.0, %v885
        %v950 = vsub.f32 1.0, %v886
        %v951 = vsub.f32 1.0, %v887
        %v952 = vsub.f32 1.0, %v888
        %v953 = vsub.f32 1.0, %v889
        %v954 = vsub.f32 1.0, %v890
        %v955 = vsub.f32 1.0, %v891
        %s956 = sld [smem:[#allocation4]]
        %v957 = vstv %s956
        %v958 = vmul.f32 %v892, %v957
        %v959 = vmul.f32 %v893, %v957
        %v960 = vmul.f32 %v894, %v957
        %v961 = vmul.f32 %v895, %v957
        %v962 = vmul.f32 %v896, %v957
        %v963 = vmul.f32 %v897, %v957
        %v964 = vmul.f32 %v898, %v957
        %v965 = vmul.f32 %v899, %v957
        %v966 = vmul.f32 %v900, %v957
        %v967 = vmul.f32 %v901, %v957
        %v968 = vmul.f32 %v902, %v957
        %v969 = vmul.f32 %v903, %v957
        %v970 = vmul.f32 %v904, %v957
        %v971 = vmul.f32 %v905, %v957
        %v972 = vmul.f32 %v906, %v957
        %v973 = vmul.f32 %v907, %v957
        %v974 = vmul.f32 %v908, %v957
        %v975 = vmul.f32 %v909, %v957
        %v976 = vmul.f32 %v910, %v957
        %v977 = vmul.f32 %v911, %v957
        %v978 = vmul.f32 %v912, %v957
        %v979 = vmul.f32 %v913, %v957
        %v980 = vmul.f32 %v914, %v957
        %v981 = vmul.f32 %v915, %v957
        %v982 = vmul.f32 %v916, %v957
        %v983 = vmul.f32 %v917, %v957
        %v984 = vmul.f32 %v918, %v957
        %v985 = vmul.f32 %v919, %v957
        %v986 = vmul.f32 %v920, %v957
        %v987 = vmul.f32 %v921, %v957
        %v988 = vmul.f32 %v922, %v957
        %v989 = vmul.f32 %v923, %v957
        %v990 = vmul.f32 %v924, %v957
        %v991 = vmul.f32 %v925, %v957
        %v992 = vmul.f32 %v926, %v957
        %v993 = vmul.f32 %v927, %v957
        %v994 = vmul.f32 %v928, %v957
        %v995 = vmul.f32 %v929, %v957
        %v996 = vmul.f32 %v930, %v957
        %v997 = vmul.f32 %v931, %v957
        %v998 = vmul.f32 %v932, %v957
        %v999 = vmul.f32 %v933, %v957
        %v1000 = vmul.f32 %v934, %v957
        %v1001 = vmul.f32 %v935, %v957
        %v1002 = vmul.f32 %v936, %v957
        %v1003 = vmul.f32 %v937, %v957
        %v1004 = vmul.f32 %v938, %v957
        %v1005 = vmul.f32 %v939, %v957
        %v1006 = vmul.f32 %v940, %v957
        %v1007 = vmul.f32 %v941, %v957
        %v1008 = vmul.f32 %v942, %v957
        %v1009 = vmul.f32 %v943, %v957
        %v1010 = vmul.f32 %v944, %v957
        %v1011 = vmul.f32 %v945, %v957
        %v1012 = vmul.f32 %v946, %v957
        %v1013 = vmul.f32 %v947, %v957
        %v1014 = vmul.f32 %v948, %v957
        %v1015 = vmul.f32 %v949, %v957
        %v1016 = vmul.f32 %v950, %v957
        %v1017 = vmul.f32 %v951, %v957
        %v1018 = vmul.f32 %v952, %v957
        %v1019 = vmul.f32 %v953, %v957
        %v1020 = vmul.f32 %v954, %v957
        %v1021 = vmul.f32 %v955, %v957
        %v1022 = vadd.f32 %v958, 1.0
        %v1023 = vadd.f32 %v959, 1.0
        %v1024 = vadd.f32 %v960, 1.0
        %v1025 = vadd.f32 %v961, 1.0
        %v1026 = vadd.f32 %v962, 1.0
        %v1027 = vadd.f32 %v963, 1.0
        %v1028 = vadd.f32 %v964, 1.0
        %v1029 = vadd.f32 %v965, 1.0
        %v1030 = vadd.f32 %v966, 1.0
        %v1031 = vadd.f32 %v967, 1.0
        %v1032 = vadd.f32 %v968, 1.0
        %v1033 = vadd.f32 %v969, 1.0
        %v1034 = vadd.f32 %v970, 1.0
        %v1035 = vadd.f32 %v971, 1.0
        %v1036 = vadd.f32 %v972, 1.0
        %v1037 = vadd.f32 %v973, 1.0
        %v1038 = vadd.f32 %v974, 1.0
        %v1039 = vadd.f32 %v975, 1.0
        %v1040 = vadd.f32 %v976, 1.0
        %v1041 = vadd.f32 %v977, 1.0
        %v1042 = vadd.f32 %v978, 1.0
        %v1043 = vadd.f32 %v979, 1.0
        %v1044 = vadd.f32 %v980, 1.0
        %v1045 = vadd.f32 %v981, 1.0
        %v1046 = vadd.f32 %v982, 1.0
        %v1047 = vadd.f32 %v983, 1.0
        %v1048 = vadd.f32 %v984, 1.0
        %v1049 = vadd.f32 %v985, 1.0
        %v1050 = vadd.f32 %v986, 1.0
        %v1051 = vadd.f32 %v987, 1.0
        %v1052 = vadd.f32 %v988, 1.0
        %v1053 = vadd.f32 %v989, 1.0
        %v1054 = vadd.f32 %v990, 1.0
        %v1055 = vadd.f32 %v991, 1.0
        %v1056 = vadd.f32 %v992, 1.0
        %v1057 = vadd.f32 %v993, 1.0
        %v1058 = vadd.f32 %v994, 1.0
        %v1059 = vadd.f32 %v995, 1.0
        %v1060 = vadd.f32 %v996, 1.0
        %v1061 = vadd.f32 %v997, 1.0
        %v1062 = vadd.f32 %v998, 1.0
        %v1063 = vadd.f32 %v999, 1.0
        %v1064 = vadd.f32 %v1000, 1.0
        %v1065 = vadd.f32 %v1001, 1.0
        %v1066 = vadd.f32 %v1002, 1.0
        %v1067 = vadd.f32 %v1003, 1.0
        %v1068 = vadd.f32 %v1004, 1.0
        %v1069 = vadd.f32 %v1005, 1.0
        %v1070 = vadd.f32 %v1006, 1.0
        %v1071 = vadd.f32 %v1007, 1.0
        %v1072 = vadd.f32 %v1008, 1.0
        %v1073 = vadd.f32 %v1009, 1.0
        %v1074 = vadd.f32 %v1010, 1.0
        %v1075 = vadd.f32 %v1011, 1.0
        %v1076 = vadd.f32 %v1012, 1.0
        %v1077 = vadd.f32 %v1013, 1.0
        %v1078 = vadd.f32 %v1014, 1.0
        %v1079 = vadd.f32 %v1015, 1.0
        %v1080 = vadd.f32 %v1016, 1.0
        %v1081 = vadd.f32 %v1017, 1.0
        %v1082 = vadd.f32 %v1018, 1.0
        %v1083 = vadd.f32 %v1019, 1.0
        %v1084 = vadd.f32 %v1020, 1.0
        %v1085 = vadd.f32 %v1021, 1.0
        %v1086 = vand.u32 2147483647, %v1022
        %v1087 = vand.u32 2147483647, %v1023
        %v1088 = vand.u32 2147483647, %v1024
        %v1089 = vand.u32 2147483647, %v1025
        %v1090 = vand.u32 2147483647, %v1026
        %v1091 = vand.u32 2147483647, %v1027
        %v1092 = vand.u32 2147483647, %v1028
        %v1093 = vand.u32 2147483647, %v1029
        %v1094 = vand.u32 2147483647, %v1030
        %v1095 = vand.u32 2147483647, %v1031
        %v1096 = vand.u32 2147483647, %v1032
        %v1097 = vand.u32 2147483647, %v1033
        %v1098 = vand.u32 2147483647, %v1034
        %v1099 = vand.u32 2147483647, %v1035
        %v1100 = vand.u32 2147483647, %v1036
        %v1101 = vand.u32 2147483647, %v1037
        %v1102 = vand.u32 2147483647, %v1038
        %v1103 = vand.u32 2147483647, %v1039
        %v1104 = vand.u32 2147483647, %v1040
        %v1105 = vand.u32 2147483647, %v1041
        %v1106 = vand.u32 2147483647, %v1042
        %v1107 = vand.u32 2147483647, %v1043
        %v1108 = vand.u32 2147483647, %v1044
        %v1109 = vand.u32 2147483647, %v1045
        %v1110 = vand.u32 2147483647, %v1046
        %v1111 = vand.u32 2147483647, %v1047
        %v1112 = vand.u32 2147483647, %v1048
        %v1113 = vand.u32 2147483647, %v1049
        %v1114 = vand.u32 2147483647, %v1050
        %v1115 = vand.u32 2147483647, %v1051
        %v1116 = vand.u32 2147483647, %v1052
        %v1117 = vand.u32 2147483647, %v1053
        %v1118 = vand.u32 2147483647, %v1054
        %v1119 = vand.u32 2147483647, %v1055
        %v1120 = vand.u32 2147483647, %v1056
        %v1121 = vand.u32 2147483647, %v1057
        %v1122 = vand.u32 2147483647, %v1058
        %v1123 = vand.u32 2147483647, %v1059
        %v1124 = vand.u32 2147483647, %v1060
        %v1125 = vand.u32 2147483647, %v1061
        %v1126 = vand.u32 2147483647, %v1062
        %v1127 = vand.u32 2147483647, %v1063
        %v1128 = vand.u32 2147483647, %v1064
        %v1129 = vand.u32 2147483647, %v1065
        %v1130 = vand.u32 2147483647, %v1066
        %v1131 = vand.u32 2147483647, %v1067
        %v1132 = vand.u32 2147483647, %v1068
        %v1133 = vand.u32 2147483647, %v1069
        %v1134 = vand.u32 2147483647, %v1070
        %v1135 = vand.u32 2147483647, %v1071
        %v1136 = vand.u32 2147483647, %v1072
        %v1137 = vand.u32 2147483647, %v1073
        %v1138 = vand.u32 2147483647, %v1074
        %v1139 = vand.u32 2147483647, %v1075
        %v1140 = vand.u32 2147483647, %v1076
        %v1141 = vand.u32 2147483647, %v1077
        %v1142 = vand.u32 2147483647, %v1078
        %v1143 = vand.u32 2147483647, %v1079
        %v1144 = vand.u32 2147483647, %v1080
        %v1145 = vand.u32 2147483647, %v1081
        %v1146 = vand.u32 2147483647, %v1082
        %v1147 = vand.u32 2147483647, %v1083
        %v1148 = vand.u32 2147483647, %v1084
        %v1149 = vand.u32 2147483647, %v1085
        %v1150 = vlog2.pop %v1086
        %v1151 = vmul.f32 %v1150, 0.6931472
        %v1152 = vlog2.pop %v1087
        %v1153 = vmul.f32 %v1152, 0.6931472
        %v1154 = vlog2.pop %v1088
        %v1155 = vmul.f32 %v1154, 0.6931472
        %v1156 = vlog2.pop %v1089
        %v1157 = vmul.f32 %v1156, 0.6931472
        %v1158 = vlog2.pop %v1090
        %v1159 = vmul.f32 %v1158, 0.6931472
        %v1160 = vlog2.pop %v1091
        %v1161 = vmul.f32 %v1160, 0.6931472
        %v1162 = vlog2.pop %v1092
        %v1163 = vmul.f32 %v1162, 0.6931472
        %v1164 = vlog2.pop %v1093
        %v1165 = vmul.f32 %v1164, 0.6931472
        %v1166 = vlog2.pop %v1094
        %v1167 = vmul.f32 %v1166, 0.6931472
        %v1168 = vlog2.pop %v1095
        %v1169 = vmul.f32 %v1168, 0.6931472
        %v1170 = vlog2.pop %v1096
        %v1171 = vmul.f32 %v1170, 0.6931472
        %v1172 = vlog2.pop %v1097
        %v1173 = vmul.f32 %v1172, 0.6931472
        %v1174 = vlog2.pop %v1098
        %v1175 = vmul.f32 %v1174, 0.6931472
        %v1176 = vlog2.pop %v1099
        %v1177 = vmul.f32 %v1176, 0.6931472
        %v1178 = vlog2.pop %v1100
        %v1179 = vmul.f32 %v1178, 0.6931472
        %v1180 = vlog2.pop %v1101
        %v1181 = vmul.f32 %v1180, 0.6931472
        %v1182 = vlog2.pop %v1102
        %v1183 = vmul.f32 %v1182, 0.6931472
        %v1184 = vlog2.pop %v1103
        %v1185 = vmul.f32 %v1184, 0.6931472
        %v1186 = vlog2.pop %v1104
        %v1187 = vmul.f32 %v1186, 0.6931472
        %v1188 = vlog2.pop %v1105
        %v1189 = vmul.f32 %v1188, 0.6931472
        %v1190 = vlog2.pop %v1106
        %v1191 = vmul.f32 %v1190, 0.6931472
        %v1192 = vlog2.pop %v1107
        %v1193 = vmul.f32 %v1192, 0.6931472
        %v1194 = vlog2.pop %v1108
        %v1195 = vmul.f32 %v1194, 0.6931472
        %v1196 = vlog2.pop %v1109
        %v1197 = vmul.f32 %v1196, 0.6931472
        %v1198 = vlog2.pop %v1110
        %v1199 = vmul.f32 %v1198, 0.6931472
        %v1200 = vlog2.pop %v1111
        %v1201 = vmul.f32 %v1200, 0.6931472
        %v1202 = vlog2.pop %v1112
        %v1203 = vmul.f32 %v1202, 0.6931472
        %v1204 = vlog2.pop %v1113
        %v1205 = vmul.f32 %v1204, 0.6931472
        %v1206 = vlog2.pop %v1114
        %v1207 = vmul.f32 %v1206, 0.6931472
        %v1208 = vlog2.pop %v1115
        %v1209 = vmul.f32 %v1208, 0.6931472
        %v1210 = vlog2.pop %v1116
        %v1211 = vmul.f32 %v1210, 0.6931472
        %v1212 = vlog2.pop %v1117
        %v1213 = vmul.f32 %v1212, 0.6931472
        %v1214 = vlog2.pop %v1118
        %v1215 = vmul.f32 %v1214, 0.6931472
        %v1216 = vlog2.pop %v1119
        %v1217 = vmul.f32 %v1216, 0.6931472
        %v1218 = vlog2.pop %v1120
        %v1219 = vmul.f32 %v1218, 0.6931472
        %v1220 = vlog2.pop %v1121
        %v1221 = vmul.f32 %v1220, 0.6931472
        %v1222 = vlog2.pop %v1122
        %v1223 = vmul.f32 %v1222, 0.6931472
        %v1224 = vlog2.pop %v1123
        %v1225 = vmul.f32 %v1224, 0.6931472
        %v1226 = vlog2.pop %v1124
        %v1227 = vmul.f32 %v1226, 0.6931472
        %v1228 = vlog2.pop %v1125
        %v1229 = vmul.f32 %v1228, 0.6931472
        %v1230 = vlog2.pop %v1126
        %v1231 = vmul.f32 %v1230, 0.6931472
        %v1232 = vlog2.pop %v1127
        %v1233 = vmul.f32 %v1232, 0.6931472
        %v1234 = vlog2.pop %v1128
        %v1235 = vmul.f32 %v1234, 0.6931472
        %v1236 = vlog2.pop %v1129
        %v1237 = vmul.f32 %v1236, 0.6931472
        %v1238 = vlog2.pop %v1130
        %v1239 = vmul.f32 %v1238, 0.6931472
        %v1240 = vlog2.pop %v1131
        %v1241 = vmul.f32 %v1240, 0.6931472
        %v1242 = vlog2.pop %v1132
        %v1243 = vmul.f32 %v1242, 0.6931472
        %v1244 = vlog2.pop %v1133
        %v1245 = vmul.f32 %v1244, 0.6931472
        %v1246 = vlog2.pop %v1134
        %v1247 = vmul.f32 %v1246, 0.6931472
        %v1248 = vlog2.pop %v1135
        %v1249 = vmul.f32 %v1248, 0.6931472
        %v1250 = vlog2.pop %v1136
        %v1251 = vmul.f32 %v1250, 0.6931472
        %v1252 = vlog2.pop %v1137
        %v1253 = vmul.f32 %v1252, 0.6931472
        %v1254 = vlog2.pop %v1138
        %v1255 = vmul.f32 %v1254, 0.6931472
        %v1256 = vlog2.pop %v1139
        %v1257 = vmul.f32 %v1256, 0.6931472
        %v1258 = vlog2.pop %v1140
        %v1259 = vmul.f32 %v1258, 0.6931472
        %v1260 = vlog2.pop %v1141
        %v1261 = vmul.f32 %v1260, 0.6931472
        %v1262 = vlog2.pop %v1142
        %v1263 = vmul.f32 %v1262, 0.6931472
        %v1264 = vlog2.pop %v1143
        %v1265 = vmul.f32 %v1264, 0.6931472
        %v1266 = vlog2.pop %v1144
        %v1267 = vmul.f32 %v1266, 0.6931472
        %v1268 = vlog2.pop %v1145
        %v1269 = vmul.f32 %v1268, 0.6931472
        %v1270 = vlog2.pop %v1146
        %v1271 = vmul.f32 %v1270, 0.6931472
        %v1272 = vlog2.pop %v1147
        %v1273 = vmul.f32 %v1272, 0.6931472
        %v1274 = vlog2.pop %v1148
        %v1275 = vmul.f32 %v1274, 0.6931472
        %v1276 = vlog2.pop %v1149
        %v1277 = vmul.f32 %v1276, 0.6931472
        %v1278 = vadd.f32 %v1151, 0.0
        %v1279 = vadd.f32 %v1153, 0.0
        %v1280 = vadd.f32 %v1155, 0.0
        %v1281 = vadd.f32 %v1157, 0.0
        %v1282 = vadd.f32 %v1159, 0.0
        %v1283 = vadd.f32 %v1161, 0.0
        %v1284 = vadd.f32 %v1163, 0.0
        %v1285 = vadd.f32 %v1165, 0.0
        %v1286 = vadd.f32 %v1167, 0.0
        %v1287 = vadd.f32 %v1169, 0.0
        %v1288 = vadd.f32 %v1171, 0.0
        %v1289 = vadd.f32 %v1173, 0.0
        %v1290 = vadd.f32 %v1175, 0.0
        %v1291 = vadd.f32 %v1177, 0.0
        %v1292 = vadd.f32 %v1179, 0.0
        %v1293 = vadd.f32 %v1181, 0.0
        %v1294 = vadd.f32 %v1183, 0.0
        %v1295 = vadd.f32 %v1185, 0.0
        %v1296 = vadd.f32 %v1187, 0.0
        %v1297 = vadd.f32 %v1189, 0.0
        %v1298 = vadd.f32 %v1191, 0.0
        %v1299 = vadd.f32 %v1193, 0.0
        %v1300 = vadd.f32 %v1195, 0.0
        %v1301 = vadd.f32 %v1197, 0.0
        %v1302 = vadd.f32 %v1199, 0.0
        %v1303 = vadd.f32 %v1201, 0.0
        %v1304 = vadd.f32 %v1203, 0.0
        %v1305 = vadd.f32 %v1205, 0.0
        %v1306 = vadd.f32 %v1207, 0.0
        %v1307 = vadd.f32 %v1209, 0.0
        %v1308 = vadd.f32 %v1211, 0.0
        %v1309 = vadd.f32 %v1213, 0.0
        %v1310 = vadd.f32 %v1215, 0.0
        %v1311 = vadd.f32 %v1217, 0.0
        %v1312 = vadd.f32 %v1219, 0.0
        %v1313 = vadd.f32 %v1221, 0.0
        %v1314 = vadd.f32 %v1223, 0.0
        %v1315 = vadd.f32 %v1225, 0.0
        %v1316 = vadd.f32 %v1227, 0.0
        %v1317 = vadd.f32 %v1229, 0.0
        %v1318 = vadd.f32 %v1231, 0.0
        %v1319 = vadd.f32 %v1233, 0.0
        %v1320 = vadd.f32 %v1235, 0.0
        %v1321 = vadd.f32 %v1237, 0.0
        %v1322 = vadd.f32 %v1239, 0.0
        %v1323 = vadd.f32 %v1241, 0.0
        %v1324 = vadd.f32 %v1243, 0.0
        %v1325 = vadd.f32 %v1245, 0.0
        %v1326 = vadd.f32 %v1247, 0.0
        %v1327 = vadd.f32 %v1249, 0.0
        %v1328 = vadd.f32 %v1251, 0.0
        %v1329 = vadd.f32 %v1253, 0.0
        %v1330 = vadd.f32 %v1255, 0.0
        %v1331 = vadd.f32 %v1257, 0.0
        %v1332 = vadd.f32 %v1259, 0.0
        %v1333 = vadd.f32 %v1261, 0.0
        %v1334 = vadd.f32 %v1263, 0.0
        %v1335 = vadd.f32 %v1265, 0.0
        %v1336 = vadd.f32 %v1267, 0.0
        %v1337 = vadd.f32 %v1269, 0.0
        %v1338 = vadd.f32 %v1271, 0.0
        %v1339 = vadd.f32 %v1273, 0.0
        %v1340 = vadd.f32 %v1275, 0.0
        %v1341 = vadd.f32 %v1277, 0.0
        %vm1342 = vcmask 31744
        %v1344 = vsel %vm1342, %v764, 0
        %v1347 = vsel %vm1342, %v765, 0
        %v1350 = vsel %vm1342, %v766, 0
        %v1353 = vsel %vm1342, %v767, 0
        %v1356 = vsel %vm1342, %v768, 0
        %v1359 = vsel %vm1342, %v769, 0
        %v1362 = vsel %vm1342, %v770, 0
        %v1365 = vsel %vm1342, %v771, 0
        %v1368 = vsel %vm1342, %v772, 0
        %v1371 = vsel %vm1342, %v773, 0
        %v1374 = vsel %vm1342, %v774, 0
        %v1377 = vsel %vm1342, %v775, 0
        %v1380 = vsel %vm1342, %v776, 0
        %v1383 = vsel %vm1342, %v777, 0
        %v1386 = vsel %vm1342, %v778, 0
        %v1389 = vsel %vm1342, %v779, 0
        %v1392 = vsel %vm1342, %v780, 0
        %v1395 = vsel %vm1342, %v781, 0
        %v1398 = vsel %vm1342, %v782, 0
        %v1401 = vsel %vm1342, %v783, 0
        %v1404 = vsel %vm1342, %v784, 0
        %v1407 = vsel %vm1342, %v785, 0
        %v1410 = vsel %vm1342, %v786, 0
        %v1413 = vsel %vm1342, %v787, 0
        %v1416 = vsel %vm1342, %v788, 0
        %v1419 = vsel %vm1342, %v789, 0
        %v1422 = vsel %vm1342, %v790, 0
        %v1425 = vsel %vm1342, %v791, 0
        %v1428 = vsel %vm1342, %v792, 0
        %v1431 = vsel %vm1342, %v793, 0
        %v1434 = vsel %vm1342, %v794, 0
        %v1437 = vsel %vm1342, %v795, 0
        %v1440 = vsel %vm1342, %v796, 0
        %v1443 = vsel %vm1342, %v797, 0
        %v1446 = vsel %vm1342, %v798, 0
        %v1449 = vsel %vm1342, %v799, 0
        %v1452 = vsel %vm1342, %v800, 0
        %v1455 = vsel %vm1342, %v801, 0
        %v1458 = vsel %vm1342, %v802, 0
        %v1461 = vsel %vm1342, %v803, 0
        %v1464 = vsel %vm1342, %v804, 0
        %v1467 = vsel %vm1342, %v805, 0
        %v1470 = vsel %vm1342, %v806, 0
        %v1473 = vsel %vm1342, %v807, 0
        %v1476 = vsel %vm1342, %v808, 0
        %v1479 = vsel %vm1342, %v809, 0
        %v1482 = vsel %vm1342, %v810, 0
        %v1485 = vsel %vm1342, %v811, 0
        %v1488 = vsel %vm1342, %v812, 0
        %v1491 = vsel %vm1342, %v813, 0
        %v1494 = vsel %vm1342, %v814, 0
        %v1497 = vsel %vm1342, %v815, 0
        %v1500 = vsel %vm1342, %v816, 0
        %v1503 = vsel %vm1342, %v817, 0
        %v1506 = vsel %vm1342, %v818, 0
        %v1509 = vsel %vm1342, %v819, 0
        %v1512 = vsel %vm1342, %v820, 0
        %v1515 = vsel %vm1342, %v821, 0
        %v1518 = vsel %vm1342, %v822, 0
        %v1521 = vsel %vm1342, %v823, 0
        %v1524 = vsel %vm1342, %v824, 0
        %v1527 = vsel %vm1342, %v825, 0
        %v1530 = vsel %vm1342, %v826, 0
        %v1533 = vsel %vm1342, %v827, 0
        %vm1535 = vcmask 1043456
        %v1537 = vsel %vm1535, %v376, 0
        %1539 = vmatprep.subr.mxu0 0.0
        %1540 = vmatpush1.msra.mxu0 0.0
        %1541 = vmatprep.subr.mxu0 0.0
        %1542 = vmatpush1.msra.mxu0 0.0
        %1543 = vmatprep.subr.mxu0 0.0
        %1544 = vmatpush1.msra.mxu0 0.0
        %1545 = vmatprep.subr.mxu0 0.0
        %1546 = vmatpush1.msra.mxu0 0.0
        %1547 = vmatprep.subr.mxu0 0.0
        %1548 = vmatpush1.msra.mxu0 0.0
        %1549 = vmatprep.subr.mxu0 0.0
        %1550 = vmatpush1.msra.mxu0 0.0
        %1551 = vmatprep.subr.mxu0 0.0
        %1552 = vmatpush1.msra.mxu0 0.0
        %1553 = vmatprep.subr.mxu0 0.0
        %1554 = vmatpush1.msra.mxu0 0.0
        %1555 = vmatprep.subr.mxu0 0.0
        %1556 = vmatpush1.msra.mxu0 0.0
        %1557 = vmatprep.subr.mxu0 0.0
        %1558 = vmatpush1.msra.mxu0 0.0
        %1559 = vmatprep.subr.mxu0 0.0
        %1560 = vmatpush1.msra.mxu0 0.0
        %1561 = vmatprep.subr.mxu0 0.0
        %1562 = vmatpush1.msra.mxu0 0.0
        %1563 = vmatprep.subr.mxu0 0.0
        %1564 = vmatpush1.msra.mxu0 0.0
        %1565 = vmatprep.subr.mxu0 0.0
        %1566 = vmatpush1.msra.mxu0 0.0
        %1567 = vmatprep.subr.mxu0 0.0
        %1568 = vmatpush1.msra.mxu0 0.0
        %1569 = vmatprep.subr.mxu0 0.0
        %1570 = vmatpush1.msra.mxu0 %v1537
        %1571 = vmatprep.subr.mxu0 0.0
        %1572 = vmatpush2.msra.mxu0 0.0
        %1573 = vmatprep.subr.mxu0 0.0
        %1574 = vmatpush2.msra.mxu0 0.0
        %1575 = vmatprep.subr.mxu0 0.0
        %1576 = vmatpush2.msra.mxu0 0.0
        %1577 = vmatprep.subr.mxu0 0.0
        %1578 = vmatpush2.msra.mxu0 0.0
        %1579 = vmatprep.subr.mxu0 0.0
        %1580 = vmatpush2.msra.mxu0 0.0
        %1581 = vmatprep.subr.mxu0 0.0
        %1582 = vmatpush2.msra.mxu0 0.0
        %1583 = vmatprep.subr.mxu0 0.0
        %1584 = vmatpush2.msra.mxu0 0.0
        %1585 = vmatprep.subr.mxu0 0.0
        %1586 = vmatpush2.msra.mxu0 0.0
        %1587 = vmatprep.subr.mxu0 0.0
        %1588 = vmatpush2.msra.mxu0 0.0
        %1589 = vmatprep.subr.mxu0 0.0
        %1590 = vmatpush2.msra.mxu0 0.0
        %1591 = vmatprep.subr.mxu0 0.0
        %1592 = vmatpush2.msra.mxu0 0.0
        %1593 = vmatprep.subr.mxu0 0.0
        %1594 = vmatpush2.msra.mxu0 0.0
        %1595 = vmatprep.subr.mxu0 0.0
        %1596 = vmatpush2.msra.mxu0 0.0
        %1597 = vmatprep.subr.mxu0 0.0
        %1598 = vmatpush2.msra.mxu0 0.0
        %1599 = vmatprep.subr.mxu0 0.0
        %1600 = vmatpush2.msra.mxu0 0.0
        %1601 = vmatprep.subr.mxu0 0.0
        %1602 = vmatpush2.msra.mxu0 0.0
        %1603 = vmatprep.mubr.f32.mxu0 0.0
        %1604 = vmatmul.mubr.f32.gmra.mxu0 %v1344
        %v1605 = vpop.f32.mrf.mxu0
        %v1606 = vadd.f32 0.0, %v1605
        %v1607 = vpop.f32.mrf.mxu0
        %1608 = vmatprep.mubr.f32.mxu0 0.0
        %1609 = vmatmul.mubr.f32.gmra.mxu0 %v1347
        %v1610 = vpop.f32.mrf.mxu0
        %v1611 = vadd.f32 0.0, %v1610
        %v1612 = vpop.f32.mrf.mxu0
        %1613 = vmatprep.mubr.f32.mxu0 0.0
        %1614 = vmatmul.mubr.f32.gmra.mxu0 %v1350
        %v1615 = vpop.f32.mrf.mxu0
        %v1616 = vadd.f32 0.0, %v1615
        %v1617 = vpop.f32.mrf.mxu0
        %1618 = vmatprep.mubr.f32.mxu0 0.0
        %1619 = vmatmul.mubr.f32.gmra.mxu0 %v1353
        %v1620 = vpop.f32.mrf.mxu0
        %v1621 = vadd.f32 0.0, %v1620
        %v1622 = vpop.f32.mrf.mxu0
        %1623 = vmatprep.mubr.f32.mxu0 0.0
        %1624 = vmatmul.mubr.f32.gmra.mxu0 %v1356
        %v1625 = vpop.f32.mrf.mxu0
        %v1626 = vadd.f32 0.0, %v1625
        %v1627 = vpop.f32.mrf.mxu0
        %1628 = vmatprep.mubr.f32.mxu0 0.0
        %1629 = vmatmul.mubr.f32.gmra.mxu0 %v1359
        %v1630 = vpop.f32.mrf.mxu0
        %v1631 = vadd.f32 0.0, %v1630
        %v1632 = vpop.f32.mrf.mxu0
        %1633 = vmatprep.mubr.f32.mxu0 0.0
        %1634 = vmatmul.mubr.f32.gmra.mxu0 %v1362
        %v1635 = vpop.f32.mrf.mxu0
        %v1636 = vadd.f32 0.0, %v1635
        %v1637 = vpop.f32.mrf.mxu0
        %1638 = vmatprep.mubr.f32.mxu0 0.0
        %1639 = vmatmul.mubr.f32.gmra.mxu0 %v1365
        %v1640 = vpop.f32.mrf.mxu0
        %v1641 = vadd.f32 0.0, %v1640
        %v1642 = vpop.f32.mrf.mxu0
        %1643 = vmatprep.mubr.f32.mxu0 0.0
        %1644 = vmatmul.mubr.f32.gmra.mxu0 %v1368
        %v1645 = vpop.f32.mrf.mxu0
        %v1646 = vadd.f32 0.0, %v1645
        %v1647 = vpop.f32.mrf.mxu0
        %1648 = vmatprep.mubr.f32.mxu0 0.0
        %1649 = vmatmul.mubr.f32.gmra.mxu0 %v1371
        %v1650 = vpop.f32.mrf.mxu0
        %v1651 = vadd.f32 0.0, %v1650
        %v1652 = vpop.f32.mrf.mxu0
        %1653 = vmatprep.mubr.f32.mxu0 0.0
        %1654 = vmatmul.mubr.f32.gmra.mxu0 %v1374
        %v1655 = vpop.f32.mrf.mxu0
        %v1656 = vadd.f32 0.0, %v1655
        %v1657 = vpop.f32.mrf.mxu0
        %1658 = vmatprep.mubr.f32.mxu0 0.0
        %1659 = vmatmul.mubr.f32.gmra.mxu0 %v1377
        %v1660 = vpop.f32.mrf.mxu0
        %v1661 = vadd.f32 0.0, %v1660
        %v1662 = vpop.f32.mrf.mxu0
        %1663 = vmatprep.mubr.f32.mxu0 0.0
        %1664 = vmatmul.mubr.f32.gmra.mxu0 %v1380
        %v1665 = vpop.f32.mrf.mxu0
        %v1666 = vadd.f32 0.0, %v1665
        %v1667 = vpop.f32.mrf.mxu0
        %1668 = vmatprep.mubr.f32.mxu0 0.0
        %1669 = vmatmul.mubr.f32.gmra.mxu0 %v1383
        %v1670 = vpop.f32.mrf.mxu0
        %v1671 = vadd.f32 0.0, %v1670
        %v1672 = vpop.f32.mrf.mxu0
        %1673 = vmatprep.mubr.f32.mxu0 0.0
        %1674 = vmatmul.mubr.f32.gmra.mxu0 %v1386
        %v1675 = vpop.f32.mrf.mxu0
        %v1676 = vadd.f32 0.0, %v1675
        %v1677 = vpop.f32.mrf.mxu0
        %1678 = vmatprep.mubr.f32.mxu0 0.0
        %1679 = vmatmul.mubr.f32.gmra.mxu0 %v1389
        %v1680 = vpop.f32.mrf.mxu0
        %v1681 = vadd.f32 0.0, %v1680
        %v1682 = vpop.f32.mrf.mxu0
        %1683 = vmatprep.mubr.f32.mxu0 0.0
        %1684 = vmatmul.mubr.f32.gmra.mxu0 %v1392
        %v1685 = vpop.f32.mrf.mxu0
        %v1686 = vadd.f32 0.0, %v1685
        %v1687 = vpop.f32.mrf.mxu0
        %1688 = vmatprep.mubr.f32.mxu0 0.0
        %1689 = vmatmul.mubr.f32.gmra.mxu0 %v1395
        %v1690 = vpop.f32.mrf.mxu0
        %v1691 = vadd.f32 0.0, %v1690
        %v1692 = vpop.f32.mrf.mxu0
        %1693 = vmatprep.mubr.f32.mxu0 0.0
        %1694 = vmatmul.mubr.f32.gmra.mxu0 %v1398
        %v1695 = vpop.f32.mrf.mxu0
        %v1696 = vadd.f32 0.0, %v1695
        %v1697 = vpop.f32.mrf.mxu0
        %1698 = vmatprep.mubr.f32.mxu0 0.0
        %1699 = vmatmul.mubr.f32.gmra.mxu0 %v1401
        %v1700 = vpop.f32.mrf.mxu0
        %v1701 = vadd.f32 0.0, %v1700
        %v1702 = vpop.f32.mrf.mxu0
        %1703 = vmatprep.mubr.f32.mxu0 0.0
        %1704 = vmatmul.mubr.f32.gmra.mxu0 %v1404
        %v1705 = vpop.f32.mrf.mxu0
        %v1706 = vadd.f32 0.0, %v1705
        %v1707 = vpop.f32.mrf.mxu0
        %1708 = vmatprep.mubr.f32.mxu0 0.0
        %1709 = vmatmul.mubr.f32.gmra.mxu0 %v1407
        %v1710 = vpop.f32.mrf.mxu0
        %v1711 = vadd.f32 0.0, %v1710
        %v1712 = vpop.f32.mrf.mxu0
        %1713 = vmatprep.mubr.f32.mxu0 0.0
        %1714 = vmatmul.mubr.f32.gmra.mxu0 %v1410
        %v1715 = vpop.f32.mrf.mxu0
        %v1716 = vadd.f32 0.0, %v1715
        %v1717 = vpop.f32.mrf.mxu0
        %1718 = vmatprep.mubr.f32.mxu0 0.0
        %1719 = vmatmul.mubr.f32.gmra.mxu0 %v1413
        %v1720 = vpop.f32.mrf.mxu0
        %v1721 = vadd.f32 0.0, %v1720
        %v1722 = vpop.f32.mrf.mxu0
        %1723 = vmatprep.mubr.f32.mxu0 0.0
        %1724 = vmatmul.mubr.f32.gmra.mxu0 %v1416
        %v1725 = vpop.f32.mrf.mxu0
        %v1726 = vadd.f32 0.0, %v1725
        %v1727 = vpop.f32.mrf.mxu0
        %1728 = vmatprep.mubr.f32.mxu0 0.0
        %1729 = vmatmul.mubr.f32.gmra.mxu0 %v1419
        %v1730 = vpop.f32.mrf.mxu0
        %v1731 = vadd.f32 0.0, %v1730
        %v1732 = vpop.f32.mrf.mxu0
        %1733 = vmatprep.mubr.f32.mxu0 0.0
        %1734 = vmatmul.mubr.f32.gmra.mxu0 %v1422
        %v1735 = vpop.f32.mrf.mxu0
        %v1736 = vadd.f32 0.0, %v1735
        %v1737 = vpop.f32.mrf.mxu0
        %1738 = vmatprep.mubr.f32.mxu0 0.0
        %1739 = vmatmul.mubr.f32.gmra.mxu0 %v1425
        %v1740 = vpop.f32.mrf.mxu0
        %v1741 = vadd.f32 0.0, %v1740
        %v1742 = vpop.f32.mrf.mxu0
        %1743 = vmatprep.mubr.f32.mxu0 0.0
        %1744 = vmatmul.mubr.f32.gmra.mxu0 %v1428
        %v1745 = vpop.f32.mrf.mxu0
        %v1746 = vadd.f32 0.0, %v1745
        %v1747 = vpop.f32.mrf.mxu0
        %1748 = vmatprep.mubr.f32.mxu0 0.0
        %1749 = vmatmul.mubr.f32.gmra.mxu0 %v1431
        %v1750 = vpop.f32.mrf.mxu0
        %v1751 = vadd.f32 0.0, %v1750
        %v1752 = vpop.f32.mrf.mxu0
        %1753 = vmatprep.mubr.f32.mxu0 0.0
        %1754 = vmatmul.mubr.f32.gmra.mxu0 %v1434
        %v1755 = vpop.f32.mrf.mxu0
        %v1756 = vadd.f32 0.0, %v1755
        %v1757 = vpop.f32.mrf.mxu0
        %1758 = vmatprep.mubr.f32.mxu0 0.0
        %1759 = vmatmul.mubr.f32.gmra.mxu0 %v1437
        %v1760 = vpop.f32.mrf.mxu0
        %v1761 = vadd.f32 0.0, %v1760
        %v1762 = vpop.f32.mrf.mxu0
        %1763 = vmatprep.mubr.f32.mxu0 0.0
        %1764 = vmatmul.mubr.f32.gmra.mxu0 %v1440
        %v1765 = vpop.f32.mrf.mxu0
        %v1766 = vadd.f32 0.0, %v1765
        %v1767 = vpop.f32.mrf.mxu0
        %1768 = vmatprep.mubr.f32.mxu0 0.0
        %1769 = vmatmul.mubr.f32.gmra.mxu0 %v1443
        %v1770 = vpop.f32.mrf.mxu0
        %v1771 = vadd.f32 0.0, %v1770
        %v1772 = vpop.f32.mrf.mxu0
        %1773 = vmatprep.mubr.f32.mxu0 0.0
        %1774 = vmatmul.mubr.f32.gmra.mxu0 %v1446
        %v1775 = vpop.f32.mrf.mxu0
        %v1776 = vadd.f32 0.0, %v1775
        %v1777 = vpop.f32.mrf.mxu0
        %1778 = vmatprep.mubr.f32.mxu0 0.0
        %1779 = vmatmul.mubr.f32.gmra.mxu0 %v1449
        %v1780 = vpop.f32.mrf.mxu0
        %v1781 = vadd.f32 0.0, %v1780
        %v1782 = vpop.f32.mrf.mxu0
        %1783 = vmatprep.mubr.f32.mxu0 0.0
        %1784 = vmatmul.mubr.f32.gmra.mxu0 %v1452
        %v1785 = vpop.f32.mrf.mxu0
        %v1786 = vadd.f32 0.0, %v1785
        %v1787 = vpop.f32.mrf.mxu0
        %1788 = vmatprep.mubr.f32.mxu0 0.0
        %1789 = vmatmul.mubr.f32.gmra.mxu0 %v1455
        %v1790 = vpop.f32.mrf.mxu0
        %v1791 = vadd.f32 0.0, %v1790
        %v1792 = vpop.f32.mrf.mxu0
        %1793 = vmatprep.mubr.f32.mxu0 0.0
        %1794 = vmatmul.mubr.f32.gmra.mxu0 %v1458
        %v1795 = vpop.f32.mrf.mxu0
        %v1796 = vadd.f32 0.0, %v1795
        %v1797 = vpop.f32.mrf.mxu0
        %1798 = vmatprep.mubr.f32.mxu0 0.0
        %1799 = vmatmul.mubr.f32.gmra.mxu0 %v1461
        %v1800 = vpop.f32.mrf.mxu0
        %v1801 = vadd.f32 0.0, %v1800
        %v1802 = vpop.f32.mrf.mxu0
        %1803 = vmatprep.mubr.f32.mxu0 0.0
        %1804 = vmatmul.mubr.f32.gmra.mxu0 %v1464
        %v1805 = vpop.f32.mrf.mxu0
        %v1806 = vadd.f32 0.0, %v1805
        %v1807 = vpop.f32.mrf.mxu0
        %1808 = vmatprep.mubr.f32.mxu0 0.0
        %1809 = vmatmul.mubr.f32.gmra.mxu0 %v1467
        %v1810 = vpop.f32.mrf.mxu0
        %v1811 = vadd.f32 0.0, %v1810
        %v1812 = vpop.f32.mrf.mxu0
        %1813 = vmatprep.mubr.f32.mxu0 0.0
        %1814 = vmatmul.mubr.f32.gmra.mxu0 %v1470
        %v1815 = vpop.f32.mrf.mxu0
        %v1816 = vadd.f32 0.0, %v1815
        %v1817 = vpop.f32.mrf.mxu0
        %1818 = vmatprep.mubr.f32.mxu0 0.0
        %1819 = vmatmul.mubr.f32.gmra.mxu0 %v1473
        %v1820 = vpop.f32.mrf.mxu0
        %v1821 = vadd.f32 0.0, %v1820
        %v1822 = vpop.f32.mrf.mxu0
        %1823 = vmatprep.mubr.f32.mxu0 0.0
        %1824 = vmatmul.mubr.f32.gmra.mxu0 %v1476
        %v1825 = vpop.f32.mrf.mxu0
        %v1826 = vadd.f32 0.0, %v1825
        %v1827 = vpop.f32.mrf.mxu0
        %1828 = vmatprep.mubr.f32.mxu0 0.0
        %1829 = vmatmul.mubr.f32.gmra.mxu0 %v1479
        %v1830 = vpop.f32.mrf.mxu0
        %v1831 = vadd.f32 0.0, %v1830
        %v1832 = vpop.f32.mrf.mxu0
        %1833 = vmatprep.mubr.f32.mxu0 0.0
        %1834 = vmatmul.mubr.f32.gmra.mxu0 %v1482
        %v1835 = vpop.f32.mrf.mxu0
        %v1836 = vadd.f32 0.0, %v1835
        %v1837 = vpop.f32.mrf.mxu0
        %1838 = vmatprep.mubr.f32.mxu0 0.0
        %1839 = vmatmul.mubr.f32.gmra.mxu0 %v1485
        %v1840 = vpop.f32.mrf.mxu0
        %v1841 = vadd.f32 0.0, %v1840
        %v1842 = vpop.f32.mrf.mxu0
        %1843 = vmatprep.mubr.f32.mxu0 0.0
        %1844 = vmatmul.mubr.f32.gmra.mxu0 %v1488
        %v1845 = vpop.f32.mrf.mxu0
        %v1846 = vadd.f32 0.0, %v1845
        %v1847 = vpop.f32.mrf.mxu0
        %1848 = vmatprep.mubr.f32.mxu0 0.0
        %1849 = vmatmul.mubr.f32.gmra.mxu0 %v1491
        %v1850 = vpop.f32.mrf.mxu0
        %v1851 = vadd.f32 0.0, %v1850
        %v1852 = vpop.f32.mrf.mxu0
        %1853 = vmatprep.mubr.f32.mxu0 0.0
        %1854 = vmatmul.mubr.f32.gmra.mxu0 %v1494
        %v1855 = vpop.f32.mrf.mxu0
        %v1856 = vadd.f32 0.0, %v1855
        %v1857 = vpop.f32.mrf.mxu0
        %1858 = vmatprep.mubr.f32.mxu0 0.0
        %1859 = vmatmul.mubr.f32.gmra.mxu0 %v1497
        %v1860 = vpop.f32.mrf.mxu0
        %v1861 = vadd.f32 0.0, %v1860
        %v1862 = vpop.f32.mrf.mxu0
        %1863 = vmatprep.mubr.f32.mxu0 0.0
        %1864 = vmatmul.mubr.f32.gmra.mxu0 %v1500
        %v1865 = vpop.f32.mrf.mxu0
        %v1866 = vadd.f32 0.0, %v1865
        %v1867 = vpop.f32.mrf.mxu0
        %1868 = vmatprep.mubr.f32.mxu0 0.0
        %1869 = vmatmul.mubr.f32.gmra.mxu0 %v1503
        %v1870 = vpop.f32.mrf.mxu0
        %v1871 = vadd.f32 0.0, %v1870
        %v1872 = vpop.f32.mrf.mxu0
        %1873 = vmatprep.mubr.f32.mxu0 0.0
        %1874 = vmatmul.mubr.f32.gmra.mxu0 %v1506
        %v1875 = vpop.f32.mrf.mxu0
        %v1876 = vadd.f32 0.0, %v1875
        %v1877 = vpop.f32.mrf.mxu0
        %1878 = vmatprep.mubr.f32.mxu0 0.0
        %1879 = vmatmul.mubr.f32.gmra.mxu0 %v1509
        %v1880 = vpop.f32.mrf.mxu0
        %v1881 = vadd.f32 0.0, %v1880
        %v1882 = vpop.f32.mrf.mxu0
        %1883 = vmatprep.mubr.f32.mxu0 0.0
        %1884 = vmatmul.mubr.f32.gmra.mxu0 %v1512
        %v1885 = vpop.f32.mrf.mxu0
        %v1886 = vadd.f32 0.0, %v1885
        %v1887 = vpop.f32.mrf.mxu0
        %1888 = vmatprep.mubr.f32.mxu0 0.0
        %1889 = vmatmul.mubr.f32.gmra.mxu0 %v1515
        %v1890 = vpop.f32.mrf.mxu0
        %v1891 = vadd.f32 0.0, %v1890
        %v1892 = vpop.f32.mrf.mxu0
        %1893 = vmatprep.mubr.f32.mxu0 0.0
        %1894 = vmatmul.mubr.f32.gmra.mxu0 %v1518
        %v1895 = vpop.f32.mrf.mxu0
        %v1896 = vadd.f32 0.0, %v1895
        %v1897 = vpop.f32.mrf.mxu0
        %1898 = vmatprep.mubr.f32.mxu0 0.0
        %1899 = vmatmul.mubr.f32.gmra.mxu0 %v1521
        %v1900 = vpop.f32.mrf.mxu0
        %v1901 = vadd.f32 0.0, %v1900
        %v1902 = vpop.f32.mrf.mxu0
        %1903 = vmatprep.mubr.f32.mxu0 0.0
        %1904 = vmatmul.mubr.f32.gmra.mxu0 %v1524
        %v1905 = vpop.f32.mrf.mxu0
        %v1906 = vadd.f32 0.0, %v1905
        %v1907 = vpop.f32.mrf.mxu0
        %1908 = vmatprep.mubr.f32.mxu0 0.0
        %1909 = vmatmul.mubr.f32.gmra.mxu0 %v1527
        %v1910 = vpop.f32.mrf.mxu0
        %v1911 = vadd.f32 0.0, %v1910
        %v1912 = vpop.f32.mrf.mxu0
        %1913 = vmatprep.mubr.f32.mxu0 0.0
        %1914 = vmatmul.mubr.f32.gmra.mxu0 %v1530
        %v1915 = vpop.f32.mrf.mxu0
        %v1916 = vadd.f32 0.0, %v1915
        %v1917 = vpop.f32.mrf.mxu0
        %1918 = vmatprep.mubr.f32.mxu0 0.0
        %1919 = vmatmul.mubr.f32.gmra.mxu0 %v1533
        %v1920 = vpop.f32.mrf.mxu0
        %v1921 = vadd.f32 0.0, %v1920
        %v1922 = vpop.f32.mrf.mxu0
        %1923 = vdwg.mxu0
        %v1924 = vadd.f32 %v296, %v1606
        %v1925 = vadd.f32 %v297, %v1611
        %v1926 = vadd.f32 %v298, %v1616
        %v1927 = vadd.f32 %v299, %v1621
        %v1928 = vadd.f32 %v300, %v1626
        %v1929 = vadd.f32 %v301, %v1631
        %v1930 = vadd.f32 %v302, %v1636
        %v1931 = vadd.f32 %v303, %v1641
        %v1932 = vadd.f32 %v304, %v1646
        %v1933 = vadd.f32 %v305, %v1651
        %v1934 = vadd.f32 %v306, %v1656
        %v1935 = vadd.f32 %v307, %v1661
        %v1936 = vadd.f32 %v308, %v1666
        %v1937 = vadd.f32 %v309, %v1671
        %v1938 = vadd.f32 %v310, %v1676
        %v1939 = vadd.f32 %v311, %v1681
        %v1940 = vadd.f32 %v312, %v1686
        %v1941 = vadd.f32 %v313, %v1691
        %v1942 = vadd.f32 %v314, %v1696
        %v1943 = vadd.f32 %v315, %v1701
        %v1944 = vadd.f32 %v316, %v1706
        %v1945 = vadd.f32 %v317, %v1711
        %v1946 = vadd.f32 %v318, %v1716
        %v1947 = vadd.f32 %v319, %v1721
        %v1948 = vadd.f32 %v320, %v1726
        %v1949 = vadd.f32 %v321, %v1731
        %v1950 = vadd.f32 %v322, %v1736
        %v1951 = vadd.f32 %v323, %v1741
        %v1952 = vadd.f32 %v324, %v1746
        %v1953 = vadd.f32 %v325, %v1751
        %v1954 = vadd.f32 %v326, %v1756
        %v1955 = vadd.f32 %v327, %v1761
        %v1956 = vadd.f32 %v328, %v1766
        %v1957 = vadd.f32 %v329, %v1771
        %v1958 = vadd.f32 %v330, %v1776
        %v1959 = vadd.f32 %v331, %v1781
        %v1960 = vadd.f32 %v332, %v1786
        %v1961 = vadd.f32 %v333, %v1791
        %v1962 = vadd.f32 %v334, %v1796
        %v1963 = vadd.f32 %v335, %v1801
        %v1964 = vadd.f32 %v336, %v1806
        %v1965 = vadd.f32 %v337, %v1811
        %v1966 = vadd.f32 %v338, %v1816
        %v1967 = vadd.f32 %v339, %v1821
        %v1968 = vadd.f32 %v340, %v1826
        %v1969 = vadd.f32 %v341, %v1831
        %v1970 = vadd.f32 %v342, %v1836
        %v1971 = vadd.f32 %v343, %v1841
        %v1972 = vadd.f32 %v344, %v1846
        %v1973 = vadd.f32 %v345, %v1851
        %v1974 = vadd.f32 %v346, %v1856
        %v1975 = vadd.f32 %v347, %v1861
        %v1976 = vadd.f32 %v348, %v1866
        %v1977 = vadd.f32 %v349, %v1871
        %v1978 = vadd.f32 %v350, %v1876
        %v1979 = vadd.f32 %v351, %v1881
        %v1980 = vadd.f32 %v352, %v1886
        %v1981 = vadd.f32 %v353, %v1891
        %v1982 = vadd.f32 %v354, %v1896
        %v1983 = vadd.f32 %v355, %v1901
        %v1984 = vadd.f32 %v356, %v1906
        %v1985 = vadd.f32 %v357, %v1911
        %v1986 = vadd.f32 %v358, %v1916
        %v1987 = vadd.f32 %v359, %v1921
        %s1988 = scalar_lea.vmem %s3, 128
        %v1989 = vld [vmem:[%s1988] sm:$0xff]
        %v1990 = vld [vmem:[%s1988 + $0x8] sm:$0xff]
        %v1991 = vld [vmem:[%s1988 + $0x10] sm:$0xff]
        %v1992 = vld [vmem:[%s1988 + $0x18] sm:$0xff]
        %v1993 = vld [vmem:[%s1988 + $0x20] sm:$0xff]
        %v1994 = vld [vmem:[%s1988 + $0x28] sm:$0xff]
        %v1995 = vld [vmem:[%s1988 + $0x30] sm:$0xff]
        %v1996 = vld [vmem:[%s1988 + $0x38] sm:$0xff]
        %v1997 = vld [vmem:[%s1988 + $0x40] sm:$0xff]
        %v1998 = vld [vmem:[%s1988 + $0x48] sm:$0xff]
        %v1999 = vld [vmem:[%s1988 + $0x50] sm:$0xff]
        %v2000 = vld [vmem:[%s1988 + $0x58] sm:$0xff]
        %v2001 = vld [vmem:[%s1988 + $0x60] sm:$0xff]
        %v2002 = vld [vmem:[%s1988 + $0x68] sm:$0xff]
        %v2003 = vld [vmem:[%s1988 + $0x70] sm:$0xff]
        %v2004 = vld [vmem:[%s1988 + $0x78] sm:$0xff]
        %s2005 = scalar_lea.vmem %s4, 4
        %v2006 = vld [vmem:[%s2005] sm:$0xf]
        %s2007 = sld [smem:[#allocation2 + $0x1]]
        %v2008 = vstv %s2007
        %2009 = vmatprep.subr.mxu0 0.0
        %2010 = vmatpush1.msra.mxu0 %v2004
        %2011 = vmatprep.subr.mxu0 0.0
        %2012 = vmatpush1.msra.mxu0 %v2003
        %2013 = vmatprep.subr.mxu0 0.0
        %2014 = vmatpush1.msra.mxu0 %v2002
        %2015 = vmatprep.subr.mxu0 0.0
        %2016 = vmatpush1.msra.mxu0 %v2001
        %2017 = vmatprep.subr.mxu0 0.0
        %2018 = vmatpush1.msra.mxu0 %v2000
        %2019 = vmatprep.subr.mxu0 0.0
        %2020 = vmatpush1.msra.mxu0 %v1999
        %2021 = vmatprep.subr.mxu0 0.0
        %2022 = vmatpush1.msra.mxu0 %v1998
        %2023 = vmatprep.subr.mxu0 0.0
        %2024 = vmatpush1.msra.mxu0 %v1997
        %2025 = vmatprep.subr.mxu0 0.0
        %2026 = vmatpush1.msra.mxu0 %v1996
        %2027 = vmatprep.subr.mxu0 0.0
        %2028 = vmatpush1.msra.mxu0 %v1995
        %2029 = vmatprep.subr.mxu0 0.0
        %2030 = vmatpush1.msra.mxu0 %v1994
        %2031 = vmatprep.subr.mxu0 0.0
        %2032 = vmatpush1.msra.mxu0 %v1993
        %2033 = vmatprep.subr.mxu0 0.0
        %2034 = vmatpush1.msra.mxu0 %v1992
        %2035 = vmatprep.subr.mxu0 0.0
        %2036 = vmatpush1.msra.mxu0 %v1991
        %2037 = vmatprep.subr.mxu0 0.0
        %2038 = vmatpush1.msra.mxu0 %v1990
        %2039 = vmatprep.subr.mxu0 0.0
        %2040 = vmatpush1.msra.mxu0 %v1989
        %2041 = vmatprep.subr.mxu0 0.0
        %2042 = vmatpush2.msra.mxu0 0.0
        %2043 = vmatprep.subr.mxu0 0.0
        %2044 = vmatpush2.msra.mxu0 0.0
        %2045 = vmatprep.subr.mxu0 0.0
        %2046 = vmatpush2.msra.mxu0 0.0
        %2047 = vmatprep.subr.mxu0 0.0
        %2048 = vmatpush2.msra.mxu0 0.0
        %2049 = vmatprep.subr.mxu0 0.0
        %2050 = vmatpush2.msra.mxu0 0.0
        %2051 = vmatprep.subr.mxu0 0.0
        %2052 = vmatpush2.msra.mxu0 0.0
        %2053 = vmatprep.subr.mxu0 0.0
        %2054 = vmatpush2.msra.mxu0 0.0
        %2055 = vmatprep.subr.mxu0 0.0
        %2056 = vmatpush2.msra.mxu0 0.0
        %2057 = vmatprep.subr.mxu0 0.0
        %2058 = vmatpush2.msra.mxu0 0.0
        %2059 = vmatprep.subr.mxu0 0.0
        %2060 = vmatpush2.msra.mxu0 0.0
        %2061 = vmatprep.subr.mxu0 0.0
        %2062 = vmatpush2.msra.mxu0 0.0
        %2063 = vmatprep.subr.mxu0 0.0
        %2064 = vmatpush2.msra.mxu0 0.0
        %2065 = vmatprep.subr.mxu0 0.0
        %2066 = vmatpush2.msra.mxu0 0.0
        %2067 = vmatprep.subr.mxu0 0.0
        %2068 = vmatpush2.msra.mxu0 0.0
        %2069 = vmatprep.subr.mxu0 0.0
        %2070 = vmatpush2.msra.mxu0 0.0
        %2071 = vmatprep.subr.mxu0 0.0
        %2072 = vmatpush2.msra.mxu0 0.0
        %2073 = vmatprep.mubr.f32.mxu0 0.0
        %2074 = vmatmul.mubr.f32.gmra.mxu0 %v1924
        %v2075 = vpop.f32.mrf.mxu0
        %v2076 = vadd.f32 %v2008, %v2075
        %v2077 = vpop.f32.mrf.mxu0
        %2078 = vmatprep.mubr.f32.mxu0 0.0
        %2079 = vmatmul.mubr.f32.gmra.mxu0 %v1925
        %v2080 = vpop.f32.mrf.mxu0
        %v2081 = vadd.f32 %v2008, %v2080
        %v2082 = vpop.f32.mrf.mxu0
        %2083 = vmatprep.mubr.f32.mxu0 0.0
        %2084 = vmatmul.mubr.f32.gmra.mxu0 %v1926
        %v2085 = vpop.f32.mrf.mxu0
        %v2086 = vadd.f32 %v2008, %v2085
        %v2087 = vpop.f32.mrf.mxu0
        %2088 = vmatprep.mubr.f32.mxu0 0.0
        %2089 = vmatmul.mubr.f32.gmra.mxu0 %v1927
        %v2090 = vpop.f32.mrf.mxu0
        %v2091 = vadd.f32 %v2008, %v2090
        %v2092 = vpop.f32.mrf.mxu0
        %2093 = vmatprep.mubr.f32.mxu0 0.0
        %2094 = vmatmul.mubr.f32.gmra.mxu0 %v1928
        %v2095 = vpop.f32.mrf.mxu0
        %v2096 = vadd.f32 %v2008, %v2095
        %v2097 = vpop.f32.mrf.mxu0
        %2098 = vmatprep.mubr.f32.mxu0 0.0
        %2099 = vmatmul.mubr.f32.gmra.mxu0 %v1929
        %v2100 = vpop.f32.mrf.mxu0
        %v2101 = vadd.f32 %v2008, %v2100
        %v2102 = vpop.f32.mrf.mxu0
        %2103 = vmatprep.mubr.f32.mxu0 0.0
        %2104 = vmatmul.mubr.f32.gmra.mxu0 %v1930
        %v2105 = vpop.f32.mrf.mxu0
        %v2106 = vadd.f32 %v2008, %v2105
        %v2107 = vpop.f32.mrf.mxu0
        %2108 = vmatprep.mubr.f32.mxu0 0.0
        %2109 = vmatmul.mubr.f32.gmra.mxu0 %v1931
        %v2110 = vpop.f32.mrf.mxu0
        %v2111 = vadd.f32 %v2008, %v2110
        %v2112 = vpop.f32.mrf.mxu0
        %2113 = vmatprep.mubr.f32.mxu0 0.0
        %2114 = vmatmul.mubr.f32.gmra.mxu0 %v1932
        %v2115 = vpop.f32.mrf.mxu0
        %v2116 = vadd.f32 %v2008, %v2115
        %v2117 = vpop.f32.mrf.mxu0
        %2118 = vmatprep.mubr.f32.mxu0 0.0
        %2119 = vmatmul.mubr.f32.gmra.mxu0 %v1933
        %v2120 = vpop.f32.mrf.mxu0
        %v2121 = vadd.f32 %v2008, %v2120
        %v2122 = vpop.f32.mrf.mxu0
        %2123 = vmatprep.mubr.f32.mxu0 0.0
        %2124 = vmatmul.mubr.f32.gmra.mxu0 %v1934
        %v2125 = vpop.f32.mrf.mxu0
        %v2126 = vadd.f32 %v2008, %v2125
        %v2127 = vpop.f32.mrf.mxu0
        %2128 = vmatprep.mubr.f32.mxu0 0.0
        %2129 = vmatmul.mubr.f32.gmra.mxu0 %v1935
        %v2130 = vpop.f32.mrf.mxu0
        %v2131 = vadd.f32 %v2008, %v2130
        %v2132 = vpop.f32.mrf.mxu0
        %2133 = vmatprep.mubr.f32.mxu0 0.0
        %2134 = vmatmul.mubr.f32.gmra.mxu0 %v1936
        %v2135 = vpop.f32.mrf.mxu0
        %v2136 = vadd.f32 %v2008, %v2135
        %v2137 = vpop.f32.mrf.mxu0
        %2138 = vmatprep.mubr.f32.mxu0 0.0
        %2139 = vmatmul.mubr.f32.gmra.mxu0 %v1937
        %v2140 = vpop.f32.mrf.mxu0
        %v2141 = vadd.f32 %v2008, %v2140
        %v2142 = vpop.f32.mrf.mxu0
        %2143 = vmatprep.mubr.f32.mxu0 0.0
        %2144 = vmatmul.mubr.f32.gmra.mxu0 %v1938
        %v2145 = vpop.f32.mrf.mxu0
        %v2146 = vadd.f32 %v2008, %v2145
        %v2147 = vpop.f32.mrf.mxu0
        %2148 = vmatprep.mubr.f32.mxu0 0.0
        %2149 = vmatmul.mubr.f32.gmra.mxu0 %v1939
        %v2150 = vpop.f32.mrf.mxu0
        %v2151 = vadd.f32 %v2008, %v2150
        %v2152 = vpop.f32.mrf.mxu0
        %2153 = vmatprep.mubr.f32.mxu0 0.0
        %2154 = vmatmul.mubr.f32.gmra.mxu0 %v1940
        %v2155 = vpop.f32.mrf.mxu0
        %v2156 = vadd.f32 %v2008, %v2155
        %v2157 = vpop.f32.mrf.mxu0
        %2158 = vmatprep.mubr.f32.mxu0 0.0
        %2159 = vmatmul.mubr.f32.gmra.mxu0 %v1941
        %v2160 = vpop.f32.mrf.mxu0
        %v2161 = vadd.f32 %v2008, %v2160
        %v2162 = vpop.f32.mrf.mxu0
        %2163 = vmatprep.mubr.f32.mxu0 0.0
        %2164 = vmatmul.mubr.f32.gmra.mxu0 %v1942
        %v2165 = vpop.f32.mrf.mxu0
        %v2166 = vadd.f32 %v2008, %v2165
        %v2167 = vpop.f32.mrf.mxu0
        %2168 = vmatprep.mubr.f32.mxu0 0.0
        %2169 = vmatmul.mubr.f32.gmra.mxu0 %v1943
        %v2170 = vpop.f32.mrf.mxu0
        %v2171 = vadd.f32 %v2008, %v2170
        %v2172 = vpop.f32.mrf.mxu0
        %2173 = vmatprep.mubr.f32.mxu0 0.0
        %2174 = vmatmul.mubr.f32.gmra.mxu0 %v1944
        %v2175 = vpop.f32.mrf.mxu0
        %v2176 = vadd.f32 %v2008, %v2175
        %v2177 = vpop.f32.mrf.mxu0
        %2178 = vmatprep.mubr.f32.mxu0 0.0
        %2179 = vmatmul.mubr.f32.gmra.mxu0 %v1945
        %v2180 = vpop.f32.mrf.mxu0
        %v2181 = vadd.f32 %v2008, %v2180
        %v2182 = vpop.f32.mrf.mxu0
        %2183 = vmatprep.mubr.f32.mxu0 0.0
        %2184 = vmatmul.mubr.f32.gmra.mxu0 %v1946
        %v2185 = vpop.f32.mrf.mxu0
        %v2186 = vadd.f32 %v2008, %v2185
        %v2187 = vpop.f32.mrf.mxu0
        %2188 = vmatprep.mubr.f32.mxu0 0.0
        %2189 = vmatmul.mubr.f32.gmra.mxu0 %v1947
        %v2190 = vpop.f32.mrf.mxu0
        %v2191 = vadd.f32 %v2008, %v2190
        %v2192 = vpop.f32.mrf.mxu0
        %2193 = vmatprep.mubr.f32.mxu0 0.0
        %2194 = vmatmul.mubr.f32.gmra.mxu0 %v1948
        %v2195 = vpop.f32.mrf.mxu0
        %v2196 = vadd.f32 %v2008, %v2195
        %v2197 = vpop.f32.mrf.mxu0
        %2198 = vmatprep.mubr.f32.mxu0 0.0
        %2199 = vmatmul.mubr.f32.gmra.mxu0 %v1949
        %v2200 = vpop.f32.mrf.mxu0
        %v2201 = vadd.f32 %v2008, %v2200
        %v2202 = vpop.f32.mrf.mxu0
        %2203 = vmatprep.mubr.f32.mxu0 0.0
        %2204 = vmatmul.mubr.f32.gmra.mxu0 %v1950
        %v2205 = vpop.f32.mrf.mxu0
        %v2206 = vadd.f32 %v2008, %v2205
        %v2207 = vpop.f32.mrf.mxu0
        %2208 = vmatprep.mubr.f32.mxu0 0.0
        %2209 = vmatmul.mubr.f32.gmra.mxu0 %v1951
        %v2210 = vpop.f32.mrf.mxu0
        %v2211 = vadd.f32 %v2008, %v2210
        %v2212 = vpop.f32.mrf.mxu0
        %2213 = vmatprep.mubr.f32.mxu0 0.0
        %2214 = vmatmul.mubr.f32.gmra.mxu0 %v1952
        %v2215 = vpop.f32.mrf.mxu0
        %v2216 = vadd.f32 %v2008, %v2215
        %v2217 = vpop.f32.mrf.mxu0
        %2218 = vmatprep.mubr.f32.mxu0 0.0
        %2219 = vmatmul.mubr.f32.gmra.mxu0 %v1953
        %v2220 = vpop.f32.mrf.mxu0
        %v2221 = vadd.f32 %v2008, %v2220
        %v2222 = vpop.f32.mrf.mxu0
        %2223 = vmatprep.mubr.f32.mxu0 0.0
        %2224 = vmatmul.mubr.f32.gmra.mxu0 %v1954
        %v2225 = vpop.f32.mrf.mxu0
        %v2226 = vadd.f32 %v2008, %v2225
        %v2227 = vpop.f32.mrf.mxu0
        %2228 = vmatprep.mubr.f32.mxu0 0.0
        %2229 = vmatmul.mubr.f32.gmra.mxu0 %v1955
        %v2230 = vpop.f32.mrf.mxu0
        %v2231 = vadd.f32 %v2008, %v2230
        %v2232 = vpop.f32.mrf.mxu0
        %2233 = vmatprep.mubr.f32.mxu0 0.0
        %2234 = vmatmul.mubr.f32.gmra.mxu0 %v1956
        %v2235 = vpop.f32.mrf.mxu0
        %v2236 = vadd.f32 %v2008, %v2235
        %v2237 = vpop.f32.mrf.mxu0
        %2238 = vmatprep.mubr.f32.mxu0 0.0
        %2239 = vmatmul.mubr.f32.gmra.mxu0 %v1957
        %v2240 = vpop.f32.mrf.mxu0
        %v2241 = vadd.f32 %v2008, %v2240
        %v2242 = vpop.f32.mrf.mxu0
        %2243 = vmatprep.mubr.f32.mxu0 0.0
        %2244 = vmatmul.mubr.f32.gmra.mxu0 %v1958
        %v2245 = vpop.f32.mrf.mxu0
        %v2246 = vadd.f32 %v2008, %v2245
        %v2247 = vpop.f32.mrf.mxu0
        %2248 = vmatprep.mubr.f32.mxu0 0.0
        %2249 = vmatmul.mubr.f32.gmra.mxu0 %v1959
        %v2250 = vpop.f32.mrf.mxu0
        %v2251 = vadd.f32 %v2008, %v2250
        %v2252 = vpop.f32.mrf.mxu0
        %2253 = vmatprep.mubr.f32.mxu0 0.0
        %2254 = vmatmul.mubr.f32.gmra.mxu0 %v1960
        %v2255 = vpop.f32.mrf.mxu0
        %v2256 = vadd.f32 %v2008, %v2255
        %v2257 = vpop.f32.mrf.mxu0
        %2258 = vmatprep.mubr.f32.mxu0 0.0
        %2259 = vmatmul.mubr.f32.gmra.mxu0 %v1961
        %v2260 = vpop.f32.mrf.mxu0
        %v2261 = vadd.f32 %v2008, %v2260
        %v2262 = vpop.f32.mrf.mxu0
        %2263 = vmatprep.mubr.f32.mxu0 0.0
        %2264 = vmatmul.mubr.f32.gmra.mxu0 %v1962
        %v2265 = vpop.f32.mrf.mxu0
        %v2266 = vadd.f32 %v2008, %v2265
        %v2267 = vpop.f32.mrf.mxu0
        %2268 = vmatprep.mubr.f32.mxu0 0.0
        %2269 = vmatmul.mubr.f32.gmra.mxu0 %v1963
        %v2270 = vpop.f32.mrf.mxu0
        %v2271 = vadd.f32 %v2008, %v2270
        %v2272 = vpop.f32.mrf.mxu0
        %2273 = vmatprep.mubr.f32.mxu0 0.0
        %2274 = vmatmul.mubr.f32.gmra.mxu0 %v1964
        %v2275 = vpop.f32.mrf.mxu0
        %v2276 = vadd.f32 %v2008, %v2275
        %v2277 = vpop.f32.mrf.mxu0
        %2278 = vmatprep.mubr.f32.mxu0 0.0
        %2279 = vmatmul.mubr.f32.gmra.mxu0 %v1965
        %v2280 = vpop.f32.mrf.mxu0
        %v2281 = vadd.f32 %v2008, %v2280
        %v2282 = vpop.f32.mrf.mxu0
        %2283 = vmatprep.mubr.f32.mxu0 0.0
        %2284 = vmatmul.mubr.f32.gmra.mxu0 %v1966
        %v2285 = vpop.f32.mrf.mxu0
        %v2286 = vadd.f32 %v2008, %v2285
        %v2287 = vpop.f32.mrf.mxu0
        %2288 = vmatprep.mubr.f32.mxu0 0.0
        %2289 = vmatmul.mubr.f32.gmra.mxu0 %v1967
        %v2290 = vpop.f32.mrf.mxu0
        %v2291 = vadd.f32 %v2008, %v2290
        %v2292 = vpop.f32.mrf.mxu0
        %2293 = vmatprep.mubr.f32.mxu0 0.0
        %2294 = vmatmul.mubr.f32.gmra.mxu0 %v1968
        %v2295 = vpop.f32.mrf.mxu0
        %v2296 = vadd.f32 %v2008, %v2295
        %v2297 = vpop.f32.mrf.mxu0
        %2298 = vmatprep.mubr.f32.mxu0 0.0
        %2299 = vmatmul.mubr.f32.gmra.mxu0 %v1969
        %v2300 = vpop.f32.mrf.mxu0
        %v2301 = vadd.f32 %v2008, %v2300
        %v2302 = vpop.f32.mrf.mxu0
        %2303 = vmatprep.mubr.f32.mxu0 0.0
        %2304 = vmatmul.mubr.f32.gmra.mxu0 %v1970
        %v2305 = vpop.f32.mrf.mxu0
        %v2306 = vadd.f32 %v2008, %v2305
        %v2307 = vpop.f32.mrf.mxu0
        %2308 = vmatprep.mubr.f32.mxu0 0.0
        %2309 = vmatmul.mubr.f32.gmra.mxu0 %v1971
        %v2310 = vpop.f32.mrf.mxu0
        %v2311 = vadd.f32 %v2008, %v2310
        %v2312 = vpop.f32.mrf.mxu0
        %2313 = vmatprep.mubr.f32.mxu0 0.0
        %2314 = vmatmul.mubr.f32.gmra.mxu0 %v1972
        %v2315 = vpop.f32.mrf.mxu0
        %v2316 = vadd.f32 %v2008, %v2315
        %v2317 = vpop.f32.mrf.mxu0
        %2318 = vmatprep.mubr.f32.mxu0 0.0
        %2319 = vmatmul.mubr.f32.gmra.mxu0 %v1973
        %v2320 = vpop.f32.mrf.mxu0
        %v2321 = vadd.f32 %v2008, %v2320
        %v2322 = vpop.f32.mrf.mxu0
        %2323 = vmatprep.mubr.f32.mxu0 0.0
        %2324 = vmatmul.mubr.f32.gmra.mxu0 %v1974
        %v2325 = vpop.f32.mrf.mxu0
        %v2326 = vadd.f32 %v2008, %v2325
        %v2327 = vpop.f32.mrf.mxu0
        %2328 = vmatprep.mubr.f32.mxu0 0.0
        %2329 = vmatmul.mubr.f32.gmra.mxu0 %v1975
        %v2330 = vpop.f32.mrf.mxu0
        %v2331 = vadd.f32 %v2008, %v2330
        %v2332 = vpop.f32.mrf.mxu0
        %2333 = vmatprep.mubr.f32.mxu0 0.0
        %2334 = vmatmul.mubr.f32.gmra.mxu0 %v1976
        %v2335 = vpop.f32.mrf.mxu0
        %v2336 = vadd.f32 %v2008, %v2335
        %v2337 = vpop.f32.mrf.mxu0
        %2338 = vmatprep.mubr.f32.mxu0 0.0
        %2339 = vmatmul.mubr.f32.gmra.mxu0 %v1977
        %v2340 = vpop.f32.mrf.mxu0
        %v2341 = vadd.f32 %v2008, %v2340
        %v2342 = vpop.f32.mrf.mxu0
        %2343 = vmatprep.mubr.f32.mxu0 0.0
        %2344 = vmatmul.mubr.f32.gmra.mxu0 %v1978
        %v2345 = vpop.f32.mrf.mxu0
        %v2346 = vadd.f32 %v2008, %v2345
        %v2347 = vpop.f32.mrf.mxu0
        %2348 = vmatprep.mubr.f32.mxu0 0.0
        %2349 = vmatmul.mubr.f32.gmra.mxu0 %v1979
        %v2350 = vpop.f32.mrf.mxu0
        %v2351 = vadd.f32 %v2008, %v2350
        %v2352 = vpop.f32.mrf.mxu0
        %2353 = vmatprep.mubr.f32.mxu0 0.0
        %2354 = vmatmul.mubr.f32.gmra.mxu0 %v1980
        %v2355 = vpop.f32.mrf.mxu0
        %v2356 = vadd.f32 %v2008, %v2355
        %v2357 = vpop.f32.mrf.mxu0
        %2358 = vmatprep.mubr.f32.mxu0 0.0
        %2359 = vmatmul.mubr.f32.gmra.mxu0 %v1981
        %v2360 = vpop.f32.mrf.mxu0
        %v2361 = vadd.f32 %v2008, %v2360
        %v2362 = vpop.f32.mrf.mxu0
        %2363 = vmatprep.mubr.f32.mxu0 0.0
        %2364 = vmatmul.mubr.f32.gmra.mxu0 %v1982
        %v2365 = vpop.f32.mrf.mxu0
        %v2366 = vadd.f32 %v2008, %v2365
        %v2367 = vpop.f32.mrf.mxu0
        %2368 = vmatprep.mubr.f32.mxu0 0.0
        %2369 = vmatmul.mubr.f32.gmra.mxu0 %v1983
        %v2370 = vpop.f32.mrf.mxu0
        %v2371 = vadd.f32 %v2008, %v2370
        %v2372 = vpop.f32.mrf.mxu0
        %2373 = vmatprep.mubr.f32.mxu0 0.0
        %2374 = vmatmul.mubr.f32.gmra.mxu0 %v1984
        %v2375 = vpop.f32.mrf.mxu0
        %v2376 = vadd.f32 %v2008, %v2375
        %v2377 = vpop.f32.mrf.mxu0
        %2378 = vmatprep.mubr.f32.mxu0 0.0
        %2379 = vmatmul.mubr.f32.gmra.mxu0 %v1985
        %v2380 = vpop.f32.mrf.mxu0
        %v2381 = vadd.f32 %v2008, %v2380
        %v2382 = vpop.f32.mrf.mxu0
        %2383 = vmatprep.mubr.f32.mxu0 0.0
        %2384 = vmatmul.mubr.f32.gmra.mxu0 %v1986
        %v2385 = vpop.f32.mrf.mxu0
        %v2386 = vadd.f32 %v2008, %v2385
        %v2387 = vpop.f32.mrf.mxu0
        %2388 = vmatprep.mubr.f32.mxu0 0.0
        %2389 = vmatmul.mubr.f32.gmra.mxu0 %v1987
        %v2390 = vpop.f32.mrf.mxu0
        %v2391 = vadd.f32 %v2008, %v2390
        %v2392 = vpop.f32.mrf.mxu0
        %2393 = vdwg.mxu0
        %v2394 = vtanh.pop %v2076
        %v2395 = vtanh.pop %v2081
        %v2396 = vtanh.pop %v2086
        %v2397 = vtanh.pop %v2091
        %v2398 = vtanh.pop %v2096
        %v2399 = vtanh.pop %v2101
        %v2400 = vtanh.pop %v2106
        %v2401 = vtanh.pop %v2111
        %v2402 = vtanh.pop %v2116
        %v2403 = vtanh.pop %v2121
        %v2404 = vtanh.pop %v2126
        %v2405 = vtanh.pop %v2131
        %v2406 = vtanh.pop %v2136
        %v2407 = vtanh.pop %v2141
        %v2408 = vtanh.pop %v2146
        %v2409 = vtanh.pop %v2151
        %v2410 = vtanh.pop %v2156
        %v2411 = vtanh.pop %v2161
        %v2412 = vtanh.pop %v2166
        %v2413 = vtanh.pop %v2171
        %v2414 = vtanh.pop %v2176
        %v2415 = vtanh.pop %v2181
        %v2416 = vtanh.pop %v2186
        %v2417 = vtanh.pop %v2191
        %v2418 = vtanh.pop %v2196
        %v2419 = vtanh.pop %v2201
        %v2420 = vtanh.pop %v2206
        %v2421 = vtanh.pop %v2211
        %v2422 = vtanh.pop %v2216
        %v2423 = vtanh.pop %v2221
        %v2424 = vtanh.pop %v2226
        %v2425 = vtanh.pop %v2231
        %v2426 = vtanh.pop %v2236
        %v2427 = vtanh.pop %v2241
        %v2428 = vtanh.pop %v2246
        %v2429 = vtanh.pop %v2251
        %v2430 = vtanh.pop %v2256
        %v2431 = vtanh.pop %v2261
        %v2432 = vtanh.pop %v2266
        %v2433 = vtanh.pop %v2271
        %v2434 = vtanh.pop %v2276
        %v2435 = vtanh.pop %v2281
        %v2436 = vtanh.pop %v2286
        %v2437 = vtanh.pop %v2291
        %v2438 = vtanh.pop %v2296
        %v2439 = vtanh.pop %v2301
        %v2440 = vtanh.pop %v2306
        %v2441 = vtanh.pop %v2311
        %v2442 = vtanh.pop %v2316
        %v2443 = vtanh.pop %v2321
        %v2444 = vtanh.pop %v2326
        %v2445 = vtanh.pop %v2331
        %v2446 = vtanh.pop %v2336
        %v2447 = vtanh.pop %v2341
        %v2448 = vtanh.pop %v2346
        %v2449 = vtanh.pop %v2351
        %v2450 = vtanh.pop %v2356
        %v2451 = vtanh.pop %v2361
        %v2452 = vtanh.pop %v2366
        %v2453 = vtanh.pop %v2371
        %v2454 = vtanh.pop %v2376
        %v2455 = vtanh.pop %v2381
        %v2456 = vtanh.pop %v2386
        %v2457 = vtanh.pop %v2391
        %v2458 = vmul.f32 %v2394, %v2394
        %v2459 = vmul.f32 %v2395, %v2395
        %v2460 = vmul.f32 %v2396, %v2396
        %v2461 = vmul.f32 %v2397, %v2397
        %v2462 = vmul.f32 %v2398, %v2398
        %v2463 = vmul.f32 %v2399, %v2399
        %v2464 = vmul.f32 %v2400, %v2400
        %v2465 = vmul.f32 %v2401, %v2401
        %v2466 = vmul.f32 %v2402, %v2402
        %v2467 = vmul.f32 %v2403, %v2403
        %v2468 = vmul.f32 %v2404, %v2404
        %v2469 = vmul.f32 %v2405, %v2405
        %v2470 = vmul.f32 %v2406, %v2406
        %v2471 = vmul.f32 %v2407, %v2407
        %v2472 = vmul.f32 %v2408, %v2408
        %v2473 = vmul.f32 %v2409, %v2409
        %v2474 = vmul.f32 %v2410, %v2410
        %v2475 = vmul.f32 %v2411, %v2411
        %v2476 = vmul.f32 %v2412, %v2412
        %v2477 = vmul.f32 %v2413, %v2413
        %v2478 = vmul.f32 %v2414, %v2414
        %v2479 = vmul.f32 %v2415, %v2415
        %v2480 = vmul.f32 %v2416, %v2416
        %v2481 = vmul.f32 %v2417, %v2417
        %v2482 = vmul.f32 %v2418, %v2418
        %v2483 = vmul.f32 %v2419, %v2419
        %v2484 = vmul.f32 %v2420, %v2420
        %v2485 = vmul.f32 %v2421, %v2421
        %v2486 = vmul.f32 %v2422, %v2422
        %v2487 = vmul.f32 %v2423, %v2423
        %v2488 = vmul.f32 %v2424, %v2424
        %v2489 = vmul.f32 %v2425, %v2425
        %v2490 = vmul.f32 %v2426, %v2426
        %v2491 = vmul.f32 %v2427, %v2427
        %v2492 = vmul.f32 %v2428, %v2428
        %v2493 = vmul.f32 %v2429, %v2429
        %v2494 = vmul.f32 %v2430, %v2430
        %v2495 = vmul.f32 %v2431, %v2431
        %v2496 = vmul.f32 %v2432, %v2432
        %v2497 = vmul.f32 %v2433, %v2433
        %v2498 = vmul.f32 %v2434, %v2434
        %v2499 = vmul.f32 %v2435, %v2435
        %v2500 = vmul.f32 %v2436, %v2436
        %v2501 = vmul.f32 %v2437, %v2437
        %v2502 = vmul.f32 %v2438, %v2438
        %v2503 = vmul.f32 %v2439, %v2439
        %v2504 = vmul.f32 %v2440, %v2440
        %v2505 = vmul.f32 %v2441, %v2441
        %v2506 = vmul.f32 %v2442, %v2442
        %v2507 = vmul.f32 %v2443, %v2443
        %v2508 = vmul.f32 %v2444, %v2444
        %v2509 = vmul.f32 %v2445, %v2445
        %v2510 = vmul.f32 %v2446, %v2446
        %v2511 = vmul.f32 %v2447, %v2447
        %v2512 = vmul.f32 %v2448, %v2448
        %v2513 = vmul.f32 %v2449, %v2449
        %v2514 = vmul.f32 %v2450, %v2450
        %v2515 = vmul.f32 %v2451, %v2451
        %v2516 = vmul.f32 %v2452, %v2452
        %v2517 = vmul.f32 %v2453, %v2453
        %v2518 = vmul.f32 %v2454, %v2454
        %v2519 = vmul.f32 %v2455, %v2455
        %v2520 = vmul.f32 %v2456, %v2456
        %v2521 = vmul.f32 %v2457, %v2457
        %v2522 = vsub.f32 1.0, %v2458
        %v2523 = vsub.f32 1.0, %v2459
        %v2524 = vsub.f32 1.0, %v2460
        %v2525 = vsub.f32 1.0, %v2461
        %v2526 = vsub.f32 1.0, %v2462
        %v2527 = vsub.f32 1.0, %v2463
        %v2528 = vsub.f32 1.0, %v2464
        %v2529 = vsub.f32 1.0, %v2465
        %v2530 = vsub.f32 1.0, %v2466
        %v2531 = vsub.f32 1.0, %v2467
        %v2532 = vsub.f32 1.0, %v2468
        %v2533 = vsub.f32 1.0, %v2469
        %v2534 = vsub.f32 1.0, %v2470
        %v2535 = vsub.f32 1.0, %v2471
        %v2536 = vsub.f32 1.0, %v2472
        %v2537 = vsub.f32 1.0, %v2473
        %v2538 = vsub.f32 1.0, %v2474
        %v2539 = vsub.f32 1.0, %v2475
        %v2540 = vsub.f32 1.0, %v2476
        %v2541 = vsub.f32 1.0, %v2477
        %v2542 = vsub.f32 1.0, %v2478
        %v2543 = vsub.f32 1.0, %v2479
        %v2544 = vsub.f32 1.0, %v2480
        %v2545 = vsub.f32 1.0, %v2481
        %v2546 = vsub.f32 1.0, %v2482
        %v2547 = vsub.f32 1.0, %v2483
        %v2548 = vsub.f32 1.0, %v2484
        %v2549 = vsub.f32 1.0, %v2485
        %v2550 = vsub.f32 1.0, %v2486
        %v2551 = vsub.f32 1.0, %v2487
        %v2552 = vsub.f32 1.0, %v2488
        %v2553 = vsub.f32 1.0, %v2489
        %v2554 = vsub.f32 1.0, %v2490
        %v2555 = vsub.f32 1.0, %v2491
        %v2556 = vsub.f32 1.0, %v2492
        %v2557 = vsub.f32 1.0, %v2493
        %v2558 = vsub.f32 1.0, %v2494
        %v2559 = vsub.f32 1.0, %v2495
        %v2560 = vsub.f32 1.0, %v2496
        %v2561 = vsub.f32 1.0, %v2497
        %v2562 = vsub.f32 1.0, %v2498
        %v2563 = vsub.f32 1.0, %v2499
        %v2564 = vsub.f32 1.0, %v2500
        %v2565 = vsub.f32 1.0, %v2501
        %v2566 = vsub.f32 1.0, %v2502
        %v2567 = vsub.f32 1.0, %v2503
        %v2568 = vsub.f32 1.0, %v2504
        %v2569 = vsub.f32 1.0, %v2505
        %v2570 = vsub.f32 1.0, %v2506
        %v2571 = vsub.f32 1.0, %v2507
        %v2572 = vsub.f32 1.0, %v2508
        %v2573 = vsub.f32 1.0, %v2509
        %v2574 = vsub.f32 1.0, %v2510
        %v2575 = vsub.f32 1.0, %v2511
        %v2576 = vsub.f32 1.0, %v2512
        %v2577 = vsub.f32 1.0, %v2513
        %v2578 = vsub.f32 1.0, %v2514
        %v2579 = vsub.f32 1.0, %v2515
        %v2580 = vsub.f32 1.0, %v2516
        %v2581 = vsub.f32 1.0, %v2517
        %v2582 = vsub.f32 1.0, %v2518
        %v2583 = vsub.f32 1.0, %v2519
        %v2584 = vsub.f32 1.0, %v2520
        %v2585 = vsub.f32 1.0, %v2521
        %s2586 = sld [smem:[#allocation4 + $0x1]]
        %v2587 = vstv %s2586
        %v2588 = vmul.f32 %v2522, %v2587
        %v2589 = vmul.f32 %v2523, %v2587
        %v2590 = vmul.f32 %v2524, %v2587
        %v2591 = vmul.f32 %v2525, %v2587
        %v2592 = vmul.f32 %v2526, %v2587
        %v2593 = vmul.f32 %v2527, %v2587
        %v2594 = vmul.f32 %v2528, %v2587
        %v2595 = vmul.f32 %v2529, %v2587
        %v2596 = vmul.f32 %v2530, %v2587
        %v2597 = vmul.f32 %v2531, %v2587
        %v2598 = vmul.f32 %v2532, %v2587
        %v2599 = vmul.f32 %v2533, %v2587
        %v2600 = vmul.f32 %v2534, %v2587
        %v2601 = vmul.f32 %v2535, %v2587
        %v2602 = vmul.f32 %v2536, %v2587
        %v2603 = vmul.f32 %v2537, %v2587
        %v2604 = vmul.f32 %v2538, %v2587
        %v2605 = vmul.f32 %v2539, %v2587
        %v2606 = vmul.f32 %v2540, %v2587
        %v2607 = vmul.f32 %v2541, %v2587
        %v2608 = vmul.f32 %v2542, %v2587
        %v2609 = vmul.f32 %v2543, %v2587
        %v2610 = vmul.f32 %v2544, %v2587
        %v2611 = vmul.f32 %v2545, %v2587
        %v2612 = vmul.f32 %v2546, %v2587
        %v2613 = vmul.f32 %v2547, %v2587
        %v2614 = vmul.f32 %v2548, %v2587
        %v2615 = vmul.f32 %v2549, %v2587
        %v2616 = vmul.f32 %v2550, %v2587
        %v2617 = vmul.f32 %v2551, %v2587
        %v2618 = vmul.f32 %v2552, %v2587
        %v2619 = vmul.f32 %v2553, %v2587
        %v2620 = vmul.f32 %v2554, %v2587
        %v2621 = vmul.f32 %v2555, %v2587
        %v2622 = vmul.f32 %v2556, %v2587
        %v2623 = vmul.f32 %v2557, %v2587
        %v2624 = vmul.f32 %v2558, %v2587
        %v2625 = vmul.f32 %v2559, %v2587
        %v2626 = vmul.f32 %v2560, %v2587
        %v2627 = vmul.f32 %v2561, %v2587
        %v2628 = vmul.f32 %v2562, %v2587
        %v2629 = vmul.f32 %v2563, %v2587
        %v2630 = vmul.f32 %v2564, %v2587
        %v2631 = vmul.f32 %v2565, %v2587
        %v2632 = vmul.f32 %v2566, %v2587
        %v2633 = vmul.f32 %v2567, %v2587
        %v2634 = vmul.f32 %v2568, %v2587
        %v2635 = vmul.f32 %v2569, %v2587
        %v2636 = vmul.f32 %v2570, %v2587
        %v2637 = vmul.f32 %v2571, %v2587
        %v2638 = vmul.f32 %v2572, %v2587
        %v2639 = vmul.f32 %v2573, %v2587
        %v2640 = vmul.f32 %v2574, %v2587
        %v2641 = vmul.f32 %v2575, %v2587
        %v2642 = vmul.f32 %v2576, %v2587
        %v2643 = vmul.f32 %v2577, %v2587
        %v2644 = vmul.f32 %v2578, %v2587
        %v2645 = vmul.f32 %v2579, %v2587
        %v2646 = vmul.f32 %v2580, %v2587
        %v2647 = vmul.f32 %v2581, %v2587
        %v2648 = vmul.f32 %v2582, %v2587
        %v2649 = vmul.f32 %v2583, %v2587
        %v2650 = vmul.f32 %v2584, %v2587
        %v2651 = vmul.f32 %v2585, %v2587
        %v2652 = vadd.f32 %v2588, 1.0
        %v2653 = vadd.f32 %v2589, 1.0
        %v2654 = vadd.f32 %v2590, 1.0
        %v2655 = vadd.f32 %v2591, 1.0
        %v2656 = vadd.f32 %v2592, 1.0
        %v2657 = vadd.f32 %v2593, 1.0
        %v2658 = vadd.f32 %v2594, 1.0
        %v2659 = vadd.f32 %v2595, 1.0
        %v2660 = vadd.f32 %v2596, 1.0
        %v2661 = vadd.f32 %v2597, 1.0
        %v2662 = vadd.f32 %v2598, 1.0
        %v2663 = vadd.f32 %v2599, 1.0
        %v2664 = vadd.f32 %v2600, 1.0
        %v2665 = vadd.f32 %v2601, 1.0
        %v2666 = vadd.f32 %v2602, 1.0
        %v2667 = vadd.f32 %v2603, 1.0
        %v2668 = vadd.f32 %v2604, 1.0
        %v2669 = vadd.f32 %v2605, 1.0
        %v2670 = vadd.f32 %v2606, 1.0
        %v2671 = vadd.f32 %v2607, 1.0
        %v2672 = vadd.f32 %v2608, 1.0
        %v2673 = vadd.f32 %v2609, 1.0
        %v2674 = vadd.f32 %v2610, 1.0
        %v2675 = vadd.f32 %v2611, 1.0
        %v2676 = vadd.f32 %v2612, 1.0
        %v2677 = vadd.f32 %v2613, 1.0
        %v2678 = vadd.f32 %v2614, 1.0
        %v2679 = vadd.f32 %v2615, 1.0
        %v2680 = vadd.f32 %v2616, 1.0
        %v2681 = vadd.f32 %v2617, 1.0
        %v2682 = vadd.f32 %v2618, 1.0
        %v2683 = vadd.f32 %v2619, 1.0
        %v2684 = vadd.f32 %v2620, 1.0
        %v2685 = vadd.f32 %v2621, 1.0
        %v2686 = vadd.f32 %v2622, 1.0
        %v2687 = vadd.f32 %v2623, 1.0
        %v2688 = vadd.f32 %v2624, 1.0
        %v2689 = vadd.f32 %v2625, 1.0
        %v2690 = vadd.f32 %v2626, 1.0
        %v2691 = vadd.f32 %v2627, 1.0
        %v2692 = vadd.f32 %v2628, 1.0
        %v2693 = vadd.f32 %v2629, 1.0
        %v2694 = vadd.f32 %v2630, 1.0
        %v2695 = vadd.f32 %v2631, 1.0
        %v2696 = vadd.f32 %v2632, 1.0
        %v2697 = vadd.f32 %v2633, 1.0
        %v2698 = vadd.f32 %v2634, 1.0
        %v2699 = vadd.f32 %v2635, 1.0
        %v2700 = vadd.f32 %v2636, 1.0
        %v2701 = vadd.f32 %v2637, 1.0
        %v2702 = vadd.f32 %v2638, 1.0
        %v2703 = vadd.f32 %v2639, 1.0
        %v2704 = vadd.f32 %v2640, 1.0
        %v2705 = vadd.f32 %v2641, 1.0
        %v2706 = vadd.f32 %v2642, 1.0
        %v2707 = vadd.f32 %v2643, 1.0
        %v2708 = vadd.f32 %v2644, 1.0
        %v2709 = vadd.f32 %v2645, 1.0
        %v2710 = vadd.f32 %v2646, 1.0
        %v2711 = vadd.f32 %v2647, 1.0
        %v2712 = vadd.f32 %v2648, 1.0
        %v2713 = vadd.f32 %v2649, 1.0
        %v2714 = vadd.f32 %v2650, 1.0
        %v2715 = vadd.f32 %v2651, 1.0
        %v2716 = vand.u32 2147483647, %v2652
        %v2717 = vand.u32 2147483647, %v2653
        %v2718 = vand.u32 2147483647, %v2654
        %v2719 = vand.u32 2147483647, %v2655
        %v2720 = vand.u32 2147483647, %v2656
        %v2721 = vand.u32 2147483647, %v2657
        %v2722 = vand.u32 2147483647, %v2658
        %v2723 = vand.u32 2147483647, %v2659
        %v2724 = vand.u32 2147483647, %v2660
        %v2725 = vand.u32 2147483647, %v2661
        %v2726 = vand.u32 2147483647, %v2662
        %v2727 = vand.u32 2147483647, %v2663
        %v2728 = vand.u32 2147483647, %v2664
        %v2729 = vand.u32 2147483647, %v2665
        %v2730 = vand.u32 2147483647, %v2666
        %v2731 = vand.u32 2147483647, %v2667
        %v2732 = vand.u32 2147483647, %v2668
        %v2733 = vand.u32 2147483647, %v2669
        %v2734 = vand.u32 2147483647, %v2670
        %v2735 = vand.u32 2147483647, %v2671
        %v2736 = vand.u32 2147483647, %v2672
        %v2737 = vand.u32 2147483647, %v2673
        %v2738 = vand.u32 2147483647, %v2674
        %v2739 = vand.u32 2147483647, %v2675
        %v2740 = vand.u32 2147483647, %v2676
        %v2741 = vand.u32 2147483647, %v2677
        %v2742 = vand.u32 2147483647, %v2678
        %v2743 = vand.u32 2147483647, %v2679
        %v2744 = vand.u32 2147483647, %v2680
        %v2745 = vand.u32 2147483647, %v2681
        %v2746 = vand.u32 2147483647, %v2682
        %v2747 = vand.u32 2147483647, %v2683
        %v2748 = vand.u32 2147483647, %v2684
        %v2749 = vand.u32 2147483647, %v2685
        %v2750 = vand.u32 2147483647, %v2686
        %v2751 = vand.u32 2147483647, %v2687
        %v2752 = vand.u32 2147483647, %v2688
        %v2753 = vand.u32 2147483647, %v2689
        %v2754 = vand.u32 2147483647, %v2690
        %v2755 = vand.u32 2147483647, %v2691
        %v2756 = vand.u32 2147483647, %v2692
        %v2757 = vand.u32 2147483647, %v2693
        %v2758 = vand.u32 2147483647, %v2694
        %v2759 = vand.u32 2147483647, %v2695
        %v2760 = vand.u32 2147483647, %v2696
        %v2761 = vand.u32 2147483647, %v2697
        %v2762 = vand.u32 2147483647, %v2698
        %v2763 = vand.u32 2147483647, %v2699
        %v2764 = vand.u32 2147483647, %v2700
        %v2765 = vand.u32 2147483647, %v2701
        %v2766 = vand.u32 2147483647, %v2702
        %v2767 = vand.u32 2147483647, %v2703
        %v2768 = vand.u32 2147483647, %v2704
        %v2769 = vand.u32 2147483647, %v2705
        %v2770 = vand.u32 2147483647, %v2706
        %v2771 = vand.u32 2147483647, %v2707
        %v2772 = vand.u32 2147483647, %v2708
        %v2773 = vand.u32 2147483647, %v2709
        %v2774 = vand.u32 2147483647, %v2710
        %v2775 = vand.u32 2147483647, %v2711
        %v2776 = vand.u32 2147483647, %v2712
        %v2777 = vand.u32 2147483647, %v2713
        %v2778 = vand.u32 2147483647, %v2714
        %v2779 = vand.u32 2147483647, %v2715
        %v2780 = vlog2.pop %v2716
        %v2781 = vmul.f32 %v2780, 0.6931472
        %v2782 = vlog2.pop %v2717
        %v2783 = vmul.f32 %v2782, 0.6931472
        %v2784 = vlog2.pop %v2718
        %v2785 = vmul.f32 %v2784, 0.6931472
        %v2786 = vlog2.pop %v2719
        %v2787 = vmul.f32 %v2786, 0.6931472
        %v2788 = vlog2.pop %v2720
        %v2789 = vmul.f32 %v2788, 0.6931472
        %v2790 = vlog2.pop %v2721
        %v2791 = vmul.f32 %v2790, 0.6931472
        %v2792 = vlog2.pop %v2722
        %v2793 = vmul.f32 %v2792, 0.6931472
        %v2794 = vlog2.pop %v2723
        %v2795 = vmul.f32 %v2794, 0.6931472
        %v2796 = vlog2.pop %v2724
        %v2797 = vmul.f32 %v2796, 0.6931472
        %v2798 = vlog2.pop %v2725
        %v2799 = vmul.f32 %v2798, 0.6931472
        %v2800 = vlog2.pop %v2726
        %v2801 = vmul.f32 %v2800, 0.6931472
        %v2802 = vlog2.pop %v2727
        %v2803 = vmul.f32 %v2802, 0.6931472
        %v2804 = vlog2.pop %v2728
        %v2805 = vmul.f32 %v2804, 0.6931472
        %v2806 = vlog2.pop %v2729
        %v2807 = vmul.f32 %v2806, 0.6931472
        %v2808 = vlog2.pop %v2730
        %v2809 = vmul.f32 %v2808, 0.6931472
        %v2810 = vlog2.pop %v2731
        %v2811 = vmul.f32 %v2810, 0.6931472
        %v2812 = vlog2.pop %v2732
        %v2813 = vmul.f32 %v2812, 0.6931472
        %v2814 = vlog2.pop %v2733
        %v2815 = vmul.f32 %v2814, 0.6931472
        %v2816 = vlog2.pop %v2734
        %v2817 = vmul.f32 %v2816, 0.6931472
        %v2818 = vlog2.pop %v2735
        %v2819 = vmul.f32 %v2818, 0.6931472
        %v2820 = vlog2.pop %v2736
        %v2821 = vmul.f32 %v2820, 0.6931472
        %v2822 = vlog2.pop %v2737
        %v2823 = vmul.f32 %v2822, 0.6931472
        %v2824 = vlog2.pop %v2738
        %v2825 = vmul.f32 %v2824, 0.6931472
        %v2826 = vlog2.pop %v2739
        %v2827 = vmul.f32 %v2826, 0.6931472
        %v2828 = vlog2.pop %v2740
        %v2829 = vmul.f32 %v2828, 0.6931472
        %v2830 = vlog2.pop %v2741
        %v2831 = vmul.f32 %v2830, 0.6931472
        %v2832 = vlog2.pop %v2742
        %v2833 = vmul.f32 %v2832, 0.6931472
        %v2834 = vlog2.pop %v2743
        %v2835 = vmul.f32 %v2834, 0.6931472
        %v2836 = vlog2.pop %v2744
        %v2837 = vmul.f32 %v2836, 0.6931472
        %v2838 = vlog2.pop %v2745
        %v2839 = vmul.f32 %v2838, 0.6931472
        %v2840 = vlog2.pop %v2746
        %v2841 = vmul.f32 %v2840, 0.6931472
        %v2842 = vlog2.pop %v2747
        %v2843 = vmul.f32 %v2842, 0.6931472
        %v2844 = vlog2.pop %v2748
        %v2845 = vmul.f32 %v2844, 0.6931472
        %v2846 = vlog2.pop %v2749
        %v2847 = vmul.f32 %v2846, 0.6931472
        %v2848 = vlog2.pop %v2750
        %v2849 = vmul.f32 %v2848, 0.6931472
        %v2850 = vlog2.pop %v2751
        %v2851 = vmul.f32 %v2850, 0.6931472
        %v2852 = vlog2.pop %v2752
        %v2853 = vmul.f32 %v2852, 0.6931472
        %v2854 = vlog2.pop %v2753
        %v2855 = vmul.f32 %v2854, 0.6931472
        %v2856 = vlog2.pop %v2754
        %v2857 = vmul.f32 %v2856, 0.6931472
        %v2858 = vlog2.pop %v2755
        %v2859 = vmul.f32 %v2858, 0.6931472
        %v2860 = vlog2.pop %v2756
        %v2861 = vmul.f32 %v2860, 0.6931472
        %v2862 = vlog2.pop %v2757
        %v2863 = vmul.f32 %v2862, 0.6931472
        %v2864 = vlog2.pop %v2758
        %v2865 = vmul.f32 %v2864, 0.6931472
        %v2866 = vlog2.pop %v2759
        %v2867 = vmul.f32 %v2866, 0.6931472
        %v2868 = vlog2.pop %v2760
        %v2869 = vmul.f32 %v2868, 0.6931472
        %v2870 = vlog2.pop %v2761
        %v2871 = vmul.f32 %v2870, 0.6931472
        %v2872 = vlog2.pop %v2762
        %v2873 = vmul.f32 %v2872, 0.6931472
        %v2874 = vlog2.pop %v2763
        %v2875 = vmul.f32 %v2874, 0.6931472
        %v2876 = vlog2.pop %v2764
        %v2877 = vmul.f32 %v2876, 0.6931472
        %v2878 = vlog2.pop %v2765
        %v2879 = vmul.f32 %v2878, 0.6931472
        %v2880 = vlog2.pop %v2766
        %v2881 = vmul.f32 %v2880, 0.6931472
        %v2882 = vlog2.pop %v2767
        %v2883 = vmul.f32 %v2882, 0.6931472
        %v2884 = vlog2.pop %v2768
        %v2885 = vmul.f32 %v2884, 0.6931472
        %v2886 = vlog2.pop %v2769
        %v2887 = vmul.f32 %v2886, 0.6931472
        %v2888 = vlog2.pop %v2770
        %v2889 = vmul.f32 %v2888, 0.6931472
        %v2890 = vlog2.pop %v2771
        %v2891 = vmul.f32 %v2890, 0.6931472
        %v2892 = vlog2.pop %v2772
        %v2893 = vmul.f32 %v2892, 0.6931472
        %v2894 = vlog2.pop %v2773
        %v2895 = vmul.f32 %v2894, 0.6931472
        %v2896 = vlog2.pop %v2774
        %v2897 = vmul.f32 %v2896, 0.6931472
        %v2898 = vlog2.pop %v2775
        %v2899 = vmul.f32 %v2898, 0.6931472
        %v2900 = vlog2.pop %v2776
        %v2901 = vmul.f32 %v2900, 0.6931472
        %v2902 = vlog2.pop %v2777
        %v2903 = vmul.f32 %v2902, 0.6931472
        %v2904 = vlog2.pop %v2778
        %v2905 = vmul.f32 %v2904, 0.6931472
        %v2906 = vlog2.pop %v2779
        %v2907 = vmul.f32 %v2906, 0.6931472
        %v2908 = vadd.f32 %v1278, %v2781
        %v2909 = vadd.f32 %v1279, %v2783
        %v2910 = vadd.f32 %v1280, %v2785
        %v2911 = vadd.f32 %v1281, %v2787
        %v2912 = vadd.f32 %v1282, %v2789
        %v2913 = vadd.f32 %v1283, %v2791
        %v2914 = vadd.f32 %v1284, %v2793
        %v2915 = vadd.f32 %v1285, %v2795
        %v2916 = vadd.f32 %v1286, %v2797
        %v2917 = vadd.f32 %v1287, %v2799
        %v2918 = vadd.f32 %v1288, %v2801
        %v2919 = vadd.f32 %v1289, %v2803
        %v2920 = vadd.f32 %v1290, %v2805
        %v2921 = vadd.f32 %v1291, %v2807
        %v2922 = vadd.f32 %v1292, %v2809
        %v2923 = vadd.f32 %v1293, %v2811
        %v2924 = vadd.f32 %v1294, %v2813
        %v2925 = vadd.f32 %v1295, %v2815
        %v2926 = vadd.f32 %v1296, %v2817
        %v2927 = vadd.f32 %v1297, %v2819
        %v2928 = vadd.f32 %v1298, %v2821
        %v2929 = vadd.f32 %v1299, %v2823
        %v2930 = vadd.f32 %v1300, %v2825
        %v2931 = vadd.f32 %v1301, %v2827
        %v2932 = vadd.f32 %v1302, %v2829
        %v2933 = vadd.f32 %v1303, %v2831
        %v2934 = vadd.f32 %v1304, %v2833
        %v2935 = vadd.f32 %v1305, %v2835
        %v2936 = vadd.f32 %v1306, %v2837
        %v2937 = vadd.f32 %v1307, %v2839
        %v2938 = vadd.f32 %v1308, %v2841
        %v2939 = vadd.f32 %v1309, %v2843
        %v2940 = vadd.f32 %v1310, %v2845
        %v2941 = vadd.f32 %v1311, %v2847
        %v2942 = vadd.f32 %v1312, %v2849
        %v2943 = vadd.f32 %v1313, %v2851
        %v2944 = vadd.f32 %v1314, %v2853
        %v2945 = vadd.f32 %v1315, %v2855
        %v2946 = vadd.f32 %v1316, %v2857
        %v2947 = vadd.f32 %v1317, %v2859
        %v2948 = vadd.f32 %v1318, %v2861
        %v2949 = vadd.f32 %v1319, %v2863
        %v2950 = vadd.f32 %v1320, %v2865
        %v2951 = vadd.f32 %v1321, %v2867
        %v2952 = vadd.f32 %v1322, %v2869
        %v2953 = vadd.f32 %v1323, %v2871
        %v2954 = vadd.f32 %v1324, %v2873
        %v2955 = vadd.f32 %v1325, %v2875
        %v2956 = vadd.f32 %v1326, %v2877
        %v2957 = vadd.f32 %v1327, %v2879
        %v2958 = vadd.f32 %v1328, %v2881
        %v2959 = vadd.f32 %v1329, %v2883
        %v2960 = vadd.f32 %v1330, %v2885
        %v2961 = vadd.f32 %v1331, %v2887
        %v2962 = vadd.f32 %v1332, %v2889
        %v2963 = vadd.f32 %v1333, %v2891
        %v2964 = vadd.f32 %v1334, %v2893
        %v2965 = vadd.f32 %v1335, %v2895
        %v2966 = vadd.f32 %v1336, %v2897
        %v2967 = vadd.f32 %v1337, %v2899
        %v2968 = vadd.f32 %v1338, %v2901
        %v2969 = vadd.f32 %v1339, %v2903
        %v2970 = vadd.f32 %v1340, %v2905
        %v2971 = vadd.f32 %v1341, %v2907
        %v2973 = vsel %vm1342, %v2394, 0
        %v2976 = vsel %vm1342, %v2395, 0
        %v2979 = vsel %vm1342, %v2396, 0
        %v2982 = vsel %vm1342, %v2397, 0
        %v2985 = vsel %vm1342, %v2398, 0
        %v2988 = vsel %vm1342, %v2399, 0
        %v2991 = vsel %vm1342, %v2400, 0
        %v2994 = vsel %vm1342, %v2401, 0
        %v2997 = vsel %vm1342, %v2402, 0
        %v3000 = vsel %vm1342, %v2403, 0
        %v3003 = vsel %vm1342, %v2404, 0
        %v3006 = vsel %vm1342, %v2405, 0
        %v3009 = vsel %vm1342, %v2406, 0
        %v3012 = vsel %vm1342, %v2407, 0
        %v3015 = vsel %vm1342, %v2408, 0
        %v3018 = vsel %vm1342, %v2409, 0
        %v3021 = vsel %vm1342, %v2410, 0
        %v3024 = vsel %vm1342, %v2411, 0
        %v3027 = vsel %vm1342, %v2412, 0
        %v3030 = vsel %vm1342, %v2413, 0
        %v3033 = vsel %vm1342, %v2414, 0
        %v3036 = vsel %vm1342, %v2415, 0
        %v3039 = vsel %vm1342, %v2416, 0
        %v3042 = vsel %vm1342, %v2417, 0
        %v3045 = vsel %vm1342, %v2418, 0
        %v3048 = vsel %vm1342, %v2419, 0
        %v3051 = vsel %vm1342, %v2420, 0
        %v3054 = vsel %vm1342, %v2421, 0
        %v3057 = vsel %vm1342, %v2422, 0
        %v3060 = vsel %vm1342, %v2423, 0
        %v3063 = vsel %vm1342, %v2424, 0
        %v3066 = vsel %vm1342, %v2425, 0
        %v3069 = vsel %vm1342, %v2426, 0
        %v3072 = vsel %vm1342, %v2427, 0
        %v3075 = vsel %vm1342, %v2428, 0
        %v3078 = vsel %vm1342, %v2429, 0
        %v3081 = vsel %vm1342, %v2430, 0
        %v3084 = vsel %vm1342, %v2431, 0
        %v3087 = vsel %vm1342, %v2432, 0
        %v3090 = vsel %vm1342, %v2433, 0
        %v3093 = vsel %vm1342, %v2434, 0
        %v3096 = vsel %vm1342, %v2435, 0
        %v3099 = vsel %vm1342, %v2436, 0
        %v3102 = vsel %vm1342, %v2437, 0
        %v3105 = vsel %vm1342, %v2438, 0
        %v3108 = vsel %vm1342, %v2439, 0
        %v3111 = vsel %vm1342, %v2440, 0
        %v3114 = vsel %vm1342, %v2441, 0
        %v3117 = vsel %vm1342, %v2442, 0
        %v3120 = vsel %vm1342, %v2443, 0
        %v3123 = vsel %vm1342, %v2444, 0
        %v3126 = vsel %vm1342, %v2445, 0
        %v3129 = vsel %vm1342, %v2446, 0
        %v3132 = vsel %vm1342, %v2447, 0
        %v3135 = vsel %vm1342, %v2448, 0
        %v3138 = vsel %vm1342, %v2449, 0
        %v3141 = vsel %vm1342, %v2450, 0
        %v3144 = vsel %vm1342, %v2451, 0
        %v3147 = vsel %vm1342, %v2452, 0
        %v3150 = vsel %vm1342, %v2453, 0
        %v3153 = vsel %vm1342, %v2454, 0
        %v3156 = vsel %vm1342, %v2455, 0
        %v3159 = vsel %vm1342, %v2456, 0
        %v3162 = vsel %vm1342, %v2457, 0
        %v3165 = vsel %vm1535, %v2006, 0
        %3167 = vmatprep.subr.mxu0 0.0
        %3168 = vmatpush1.msra.mxu0 0.0
        %3169 = vmatprep.subr.mxu0 0.0
        %3170 = vmatpush1.msra.mxu0 0.0
        %3171 = vmatprep.subr.mxu0 0.0
        %3172 = vmatpush1.msra.mxu0 0.0
        %3173 = vmatprep.subr.mxu0 0.0
        %3174 = vmatpush1.msra.mxu0 0.0
        %3175 = vmatprep.subr.mxu0 0.0
        %3176 = vmatpush1.msra.mxu0 0.0
        %3177 = vmatprep.subr.mxu0 0.0
        %3178 = vmatpush1.msra.mxu0 0.0
        %3179 = vmatprep.subr.mxu0 0.0
        %3180 = vmatpush1.msra.mxu0 0.0
        %3181 = vmatprep.subr.mxu0 0.0
        %3182 = vmatpush1.msra.mxu0 0.0
        %3183 = vmatprep.subr.mxu0 0.0
        %3184 = vmatpush1.msra.mxu0 0.0
        %3185 = vmatprep.subr.mxu0 0.0
        %3186 = vmatpush1.msra.mxu0 0.0
        %3187 = vmatprep.subr.mxu0 0.0
        %3188 = vmatpush1.msra.mxu0 0.0
        %3189 = vmatprep.subr.mxu0 0.0
        %3190 = vmatpush1.msra.mxu0 0.0
        %3191 = vmatprep.subr.mxu0 0.0
        %3192 = vmatpush1.msra.mxu0 0.0
        %3193 = vmatprep.subr.mxu0 0.0
        %3194 = vmatpush1.msra.mxu0 0.0
        %3195 = vmatprep.subr.mxu0 0.0
        %3196 = vmatpush1.msra.mxu0 0.0
        %3197 = vmatprep.subr.mxu0 0.0
        %3198 = vmatpush1.msra.mxu0 %v3165
        %3199 = vmatprep.subr.mxu0 0.0
        %3200 = vmatpush2.msra.mxu0 0.0
        %3201 = vmatprep.subr.mxu0 0.0
        %3202 = vmatpush2.msra.mxu0 0.0
        %3203 = vmatprep.subr.mxu0 0.0
        %3204 = vmatpush2.msra.mxu0 0.0
        %3205 = vmatprep.subr.mxu0 0.0
        %3206 = vmatpush2.msra.mxu0 0.0
        %3207 = vmatprep.subr.mxu0 0.0
        %3208 = vmatpush2.msra.mxu0 0.0
        %3209 = vmatprep.subr.mxu0 0.0
        %3210 = vmatpush2.msra.mxu0 0.0
        %3211 = vmatprep.subr.mxu0 0.0
        %3212 = vmatpush2.msra.mxu0 0.0
        %3213 = vmatprep.subr.mxu0 0.0
        %3214 = vmatpush2.msra.mxu0 0.0
        %3215 = vmatprep.subr.mxu0 0.0
        %3216 = vmatpush2.msra.mxu0 0.0
        %3217 = vmatprep.subr.mxu0 0.0
        %3218 = vmatpush2.msra.mxu0 0.0
        %3219 = vmatprep.subr.mxu0 0.0
        %3220 = vmatpush2.msra.mxu0 0.0
        %3221 = vmatprep.subr.mxu0 0.0
        %3222 = vmatpush2.msra.mxu0 0.0
        %3223 = vmatprep.subr.mxu0 0.0
        %3224 = vmatpush2.msra.mxu0 0.0
        %3225 = vmatprep.subr.mxu0 0.0
        %3226 = vmatpush2.msra.mxu0 0.0
        %3227 = vmatprep.subr.mxu0 0.0
        %3228 = vmatpush2.msra.mxu0 0.0
        %3229 = vmatprep.subr.mxu0 0.0
        %3230 = vmatpush2.msra.mxu0 0.0
        %3231 = vmatprep.mubr.f32.mxu0 0.0
        %3232 = vmatmul.mubr.f32.gmra.mxu0 %v2973
        %v3233 = vpop.f32.mrf.mxu0
        %v3234 = vadd.f32 0.0, %v3233
        %v3235 = vpop.f32.mrf.mxu0
        %3236 = vmatprep.mubr.f32.mxu0 0.0
        %3237 = vmatmul.mubr.f32.gmra.mxu0 %v2976
        %v3238 = vpop.f32.mrf.mxu0
        %v3239 = vadd.f32 0.0, %v3238
        %v3240 = vpop.f32.mrf.mxu0
        %3241 = vmatprep.mubr.f32.mxu0 0.0
        %3242 = vmatmul.mubr.f32.gmra.mxu0 %v2979
        %v3243 = vpop.f32.mrf.mxu0
        %v3244 = vadd.f32 0.0, %v3243
        %v3245 = vpop.f32.mrf.mxu0
        %3246 = vmatprep.mubr.f32.mxu0 0.0
        %3247 = vmatmul.mubr.f32.gmra.mxu0 %v2982
        %v3248 = vpop.f32.mrf.mxu0
        %v3249 = vadd.f32 0.0, %v3248
        %v3250 = vpop.f32.mrf.mxu0
        %3251 = vmatprep.mubr.f32.mxu0 0.0
        %3252 = vmatmul.mubr.f32.gmra.mxu0 %v2985
        %v3253 = vpop.f32.mrf.mxu0
        %v3254 = vadd.f32 0.0, %v3253
        %v3255 = vpop.f32.mrf.mxu0
        %3256 = vmatprep.mubr.f32.mxu0 0.0
        %3257 = vmatmul.mubr.f32.gmra.mxu0 %v2988
        %v3258 = vpop.f32.mrf.mxu0
        %v3259 = vadd.f32 0.0, %v3258
        %v3260 = vpop.f32.mrf.mxu0
        %3261 = vmatprep.mubr.f32.mxu0 0.0
        %3262 = vmatmul.mubr.f32.gmra.mxu0 %v2991
        %v3263 = vpop.f32.mrf.mxu0
        %v3264 = vadd.f32 0.0, %v3263
        %v3265 = vpop.f32.mrf.mxu0
        %3266 = vmatprep.mubr.f32.mxu0 0.0
        %3267 = vmatmul.mubr.f32.gmra.mxu0 %v2994
        %v3268 = vpop.f32.mrf.mxu0
        %v3269 = vadd.f32 0.0, %v3268
        %v3270 = vpop.f32.mrf.mxu0
        %3271 = vmatprep.mubr.f32.mxu0 0.0
        %3272 = vmatmul.mubr.f32.gmra.mxu0 %v2997
        %v3273 = vpop.f32.mrf.mxu0
        %v3274 = vadd.f32 0.0, %v3273
        %v3275 = vpop.f32.mrf.mxu0
        %3276 = vmatprep.mubr.f32.mxu0 0.0
        %3277 = vmatmul.mubr.f32.gmra.mxu0 %v3000
        %v3278 = vpop.f32.mrf.mxu0
        %v3279 = vadd.f32 0.0, %v3278
        %v3280 = vpop.f32.mrf.mxu0
        %3281 = vmatprep.mubr.f32.mxu0 0.0
        %3282 = vmatmul.mubr.f32.gmra.mxu0 %v3003
        %v3283 = vpop.f32.mrf.mxu0
        %v3284 = vadd.f32 0.0, %v3283
        %v3285 = vpop.f32.mrf.mxu0
        %3286 = vmatprep.mubr.f32.mxu0 0.0
        %3287 = vmatmul.mubr.f32.gmra.mxu0 %v3006
        %v3288 = vpop.f32.mrf.mxu0
        %v3289 = vadd.f32 0.0, %v3288
        %v3290 = vpop.f32.mrf.mxu0
        %3291 = vmatprep.mubr.f32.mxu0 0.0
        %3292 = vmatmul.mubr.f32.gmra.mxu0 %v3009
        %v3293 = vpop.f32.mrf.mxu0
        %v3294 = vadd.f32 0.0, %v3293
        %v3295 = vpop.f32.mrf.mxu0
        %3296 = vmatprep.mubr.f32.mxu0 0.0
        %3297 = vmatmul.mubr.f32.gmra.mxu0 %v3012
        %v3298 = vpop.f32.mrf.mxu0
        %v3299 = vadd.f32 0.0, %v3298
        %v3300 = vpop.f32.mrf.mxu0
        %3301 = vmatprep.mubr.f32.mxu0 0.0
        %3302 = vmatmul.mubr.f32.gmra.mxu0 %v3015
        %v3303 = vpop.f32.mrf.mxu0
        %v3304 = vadd.f32 0.0, %v3303
        %v3305 = vpop.f32.mrf.mxu0
        %3306 = vmatprep.mubr.f32.mxu0 0.0
        %3307 = vmatmul.mubr.f32.gmra.mxu0 %v3018
        %v3308 = vpop.f32.mrf.mxu0
        %v3309 = vadd.f32 0.0, %v3308
        %v3310 = vpop.f32.mrf.mxu0
        %3311 = vmatprep.mubr.f32.mxu0 0.0
        %3312 = vmatmul.mubr.f32.gmra.mxu0 %v3021
        %v3313 = vpop.f32.mrf.mxu0
        %v3314 = vadd.f32 0.0, %v3313
        %v3315 = vpop.f32.mrf.mxu0
        %3316 = vmatprep.mubr.f32.mxu0 0.0
        %3317 = vmatmul.mubr.f32.gmra.mxu0 %v3024
        %v3318 = vpop.f32.mrf.mxu0
        %v3319 = vadd.f32 0.0, %v3318
        %v3320 = vpop.f32.mrf.mxu0
        %3321 = vmatprep.mubr.f32.mxu0 0.0
        %3322 = vmatmul.mubr.f32.gmra.mxu0 %v3027
        %v3323 = vpop.f32.mrf.mxu0
        %v3324 = vadd.f32 0.0, %v3323
        %v3325 = vpop.f32.mrf.mxu0
        %3326 = vmatprep.mubr.f32.mxu0 0.0
        %3327 = vmatmul.mubr.f32.gmra.mxu0 %v3030
        %v3328 = vpop.f32.mrf.mxu0
        %v3329 = vadd.f32 0.0, %v3328
        %v3330 = vpop.f32.mrf.mxu0
        %3331 = vmatprep.mubr.f32.mxu0 0.0
        %3332 = vmatmul.mubr.f32.gmra.mxu0 %v3033
        %v3333 = vpop.f32.mrf.mxu0
        %v3334 = vadd.f32 0.0, %v3333
        %v3335 = vpop.f32.mrf.mxu0
        %3336 = vmatprep.mubr.f32.mxu0 0.0
        %3337 = vmatmul.mubr.f32.gmra.mxu0 %v3036
        %v3338 = vpop.f32.mrf.mxu0
        %v3339 = vadd.f32 0.0, %v3338
        %v3340 = vpop.f32.mrf.mxu0
        %3341 = vmatprep.mubr.f32.mxu0 0.0
        %3342 = vmatmul.mubr.f32.gmra.mxu0 %v3039
        %v3343 = vpop.f32.mrf.mxu0
        %v3344 = vadd.f32 0.0, %v3343
        %v3345 = vpop.f32.mrf.mxu0
        %3346 = vmatprep.mubr.f32.mxu0 0.0
        %3347 = vmatmul.mubr.f32.gmra.mxu0 %v3042
        %v3348 = vpop.f32.mrf.mxu0
        %v3349 = vadd.f32 0.0, %v3348
        %v3350 = vpop.f32.mrf.mxu0
        %3351 = vmatprep.mubr.f32.mxu0 0.0
        %3352 = vmatmul.mubr.f32.gmra.mxu0 %v3045
        %v3353 = vpop.f32.mrf.mxu0
        %v3354 = vadd.f32 0.0, %v3353
        %v3355 = vpop.f32.mrf.mxu0
        %3356 = vmatprep.mubr.f32.mxu0 0.0
        %3357 = vmatmul.mubr.f32.gmra.mxu0 %v3048
        %v3358 = vpop.f32.mrf.mxu0
        %v3359 = vadd.f32 0.0, %v3358
        %v3360 = vpop.f32.mrf.mxu0
        %3361 = vmatprep.mubr.f32.mxu0 0.0
        %3362 = vmatmul.mubr.f32.gmra.mxu0 %v3051
        %v3363 = vpop.f32.mrf.mxu0
        %v3364 = vadd.f32 0.0, %v3363
        %v3365 = vpop.f32.mrf.mxu0
        %3366 = vmatprep.mubr.f32.mxu0 0.0
        %3367 = vmatmul.mubr.f32.gmra.mxu0 %v3054
        %v3368 = vpop.f32.mrf.mxu0
        %v3369 = vadd.f32 0.0, %v3368
        %v3370 = vpop.f32.mrf.mxu0
        %3371 = vmatprep.mubr.f32.mxu0 0.0
        %3372 = vmatmul.mubr.f32.gmra.mxu0 %v3057
        %v3373 = vpop.f32.mrf.mxu0
        %v3374 = vadd.f32 0.0, %v3373
        %v3375 = vpop.f32.mrf.mxu0
        %3376 = vmatprep.mubr.f32.mxu0 0.0
        %3377 = vmatmul.mubr.f32.gmra.mxu0 %v3060
        %v3378 = vpop.f32.mrf.mxu0
        %v3379 = vadd.f32 0.0, %v3378
        %v3380 = vpop.f32.mrf.mxu0
        %3381 = vmatprep.mubr.f32.mxu0 0.0
        %3382 = vmatmul.mubr.f32.gmra.mxu0 %v3063
        %v3383 = vpop.f32.mrf.mxu0
        %v3384 = vadd.f32 0.0, %v3383
        %v3385 = vpop.f32.mrf.mxu0
        %3386 = vmatprep.mubr.f32.mxu0 0.0
        %3387 = vmatmul.mubr.f32.gmra.mxu0 %v3066
        %v3388 = vpop.f32.mrf.mxu0
        %v3389 = vadd.f32 0.0, %v3388
        %v3390 = vpop.f32.mrf.mxu0
        %3391 = vmatprep.mubr.f32.mxu0 0.0
        %3392 = vmatmul.mubr.f32.gmra.mxu0 %v3069
        %v3393 = vpop.f32.mrf.mxu0
        %v3394 = vadd.f32 0.0, %v3393
        %v3395 = vpop.f32.mrf.mxu0
        %3396 = vmatprep.mubr.f32.mxu0 0.0
        %3397 = vmatmul.mubr.f32.gmra.mxu0 %v3072
        %v3398 = vpop.f32.mrf.mxu0
        %v3399 = vadd.f32 0.0, %v3398
        %v3400 = vpop.f32.mrf.mxu0
        %3401 = vmatprep.mubr.f32.mxu0 0.0
        %3402 = vmatmul.mubr.f32.gmra.mxu0 %v3075
        %v3403 = vpop.f32.mrf.mxu0
        %v3404 = vadd.f32 0.0, %v3403
        %v3405 = vpop.f32.mrf.mxu0
        %3406 = vmatprep.mubr.f32.mxu0 0.0
        %3407 = vmatmul.mubr.f32.gmra.mxu0 %v3078
        %v3408 = vpop.f32.mrf.mxu0
        %v3409 = vadd.f32 0.0, %v3408
        %v3410 = vpop.f32.mrf.mxu0
        %3411 = vmatprep.mubr.f32.mxu0 0.0
        %3412 = vmatmul.mubr.f32.gmra.mxu0 %v3081
        %v3413 = vpop.f32.mrf.mxu0
        %v3414 = vadd.f32 0.0, %v3413
        %v3415 = vpop.f32.mrf.mxu0
        %3416 = vmatprep.mubr.f32.mxu0 0.0
        %3417 = vmatmul.mubr.f32.gmra.mxu0 %v3084
        %v3418 = vpop.f32.mrf.mxu0
        %v3419 = vadd.f32 0.0, %v3418
        %v3420 = vpop.f32.mrf.mxu0
        %3421 = vmatprep.mubr.f32.mxu0 0.0
        %3422 = vmatmul.mubr.f32.gmra.mxu0 %v3087
        %v3423 = vpop.f32.mrf.mxu0
        %v3424 = vadd.f32 0.0, %v3423
        %v3425 = vpop.f32.mrf.mxu0
        %3426 = vmatprep.mubr.f32.mxu0 0.0
        %3427 = vmatmul.mubr.f32.gmra.mxu0 %v3090
        %v3428 = vpop.f32.mrf.mxu0
        %v3429 = vadd.f32 0.0, %v3428
        %v3430 = vpop.f32.mrf.mxu0
        %3431 = vmatprep.mubr.f32.mxu0 0.0
        %3432 = vmatmul.mubr.f32.gmra.mxu0 %v3093
        %v3433 = vpop.f32.mrf.mxu0
        %v3434 = vadd.f32 0.0, %v3433
        %v3435 = vpop.f32.mrf.mxu0
        %3436 = vmatprep.mubr.f32.mxu0 0.0
        %3437 = vmatmul.mubr.f32.gmra.mxu0 %v3096
        %v3438 = vpop.f32.mrf.mxu0
        %v3439 = vadd.f32 0.0, %v3438
        %v3440 = vpop.f32.mrf.mxu0
        %3441 = vmatprep.mubr.f32.mxu0 0.0
        %3442 = vmatmul.mubr.f32.gmra.mxu0 %v3099
        %v3443 = vpop.f32.mrf.mxu0
        %v3444 = vadd.f32 0.0, %v3443
        %v3445 = vpop.f32.mrf.mxu0
        %3446 = vmatprep.mubr.f32.mxu0 0.0
        %3447 = vmatmul.mubr.f32.gmra.mxu0 %v3102
        %v3448 = vpop.f32.mrf.mxu0
        %v3449 = vadd.f32 0.0, %v3448
        %v3450 = vpop.f32.mrf.mxu0
        %3451 = vmatprep.mubr.f32.mxu0 0.0
        %3452 = vmatmul.mubr.f32.gmra.mxu0 %v3105
        %v3453 = vpop.f32.mrf.mxu0
        %v3454 = vadd.f32 0.0, %v3453
        %v3455 = vpop.f32.mrf.mxu0
        %3456 = vmatprep.mubr.f32.mxu0 0.0
        %3457 = vmatmul.mubr.f32.gmra.mxu0 %v3108
        %v3458 = vpop.f32.mrf.mxu0
        %v3459 = vadd.f32 0.0, %v3458
        %v3460 = vpop.f32.mrf.mxu0
        %3461 = vmatprep.mubr.f32.mxu0 0.0
        %3462 = vmatmul.mubr.f32.gmra.mxu0 %v3111
        %v3463 = vpop.f32.mrf.mxu0
        %v3464 = vadd.f32 0.0, %v3463
        %v3465 = vpop.f32.mrf.mxu0
        %3466 = vmatprep.mubr.f32.mxu0 0.0
        %3467 = vmatmul.mubr.f32.gmra.mxu0 %v3114
        %v3468 = vpop.f32.mrf.mxu0
        %v3469 = vadd.f32 0.0, %v3468
        %v3470 = vpop.f32.mrf.mxu0
        %3471 = vmatprep.mubr.f32.mxu0 0.0
        %3472 = vmatmul.mubr.f32.gmra.mxu0 %v3117
        %v3473 = vpop.f32.mrf.mxu0
        %v3474 = vadd.f32 0.0, %v3473
        %v3475 = vpop.f32.mrf.mxu0
        %3476 = vmatprep.mubr.f32.mxu0 0.0
        %3477 = vmatmul.mubr.f32.gmra.mxu0 %v3120
        %v3478 = vpop.f32.mrf.mxu0
        %v3479 = vadd.f32 0.0, %v3478
        %v3480 = vpop.f32.mrf.mxu0
        %3481 = vmatprep.mubr.f32.mxu0 0.0
        %3482 = vmatmul.mubr.f32.gmra.mxu0 %v3123
        %v3483 = vpop.f32.mrf.mxu0
        %v3484 = vadd.f32 0.0, %v3483
        %v3485 = vpop.f32.mrf.mxu0
        %3486 = vmatprep.mubr.f32.mxu0 0.0
        %3487 = vmatmul.mubr.f32.gmra.mxu0 %v3126
        %v3488 = vpop.f32.mrf.mxu0
        %v3489 = vadd.f32 0.0, %v3488
        %v3490 = vpop.f32.mrf.mxu0
        %3491 = vmatprep.mubr.f32.mxu0 0.0
        %3492 = vmatmul.mubr.f32.gmra.mxu0 %v3129
        %v3493 = vpop.f32.mrf.mxu0
        %v3494 = vadd.f32 0.0, %v3493
        %v3495 = vpop.f32.mrf.mxu0
        %3496 = vmatprep.mubr.f32.mxu0 0.0
        %3497 = vmatmul.mubr.f32.gmra.mxu0 %v3132
        %v3498 = vpop.f32.mrf.mxu0
        %v3499 = vadd.f32 0.0, %v3498
        %v3500 = vpop.f32.mrf.mxu0
        %3501 = vmatprep.mubr.f32.mxu0 0.0
        %3502 = vmatmul.mubr.f32.gmra.mxu0 %v3135
        %v3503 = vpop.f32.mrf.mxu0
        %v3504 = vadd.f32 0.0, %v3503
        %v3505 = vpop.f32.mrf.mxu0
        %3506 = vmatprep.mubr.f32.mxu0 0.0
        %3507 = vmatmul.mubr.f32.gmra.mxu0 %v3138
        %v3508 = vpop.f32.mrf.mxu0
        %v3509 = vadd.f32 0.0, %v3508
        %v3510 = vpop.f32.mrf.mxu0
        %3511 = vmatprep.mubr.f32.mxu0 0.0
        %3512 = vmatmul.mubr.f32.gmra.mxu0 %v3141
        %v3513 = vpop.f32.mrf.mxu0
        %v3514 = vadd.f32 0.0, %v3513
        %v3515 = vpop.f32.mrf.mxu0
        %3516 = vmatprep.mubr.f32.mxu0 0.0
        %3517 = vmatmul.mubr.f32.gmra.mxu0 %v3144
        %v3518 = vpop.f32.mrf.mxu0
        %v3519 = vadd.f32 0.0, %v3518
        %v3520 = vpop.f32.mrf.mxu0
        %3521 = vmatprep.mubr.f32.mxu0 0.0
        %3522 = vmatmul.mubr.f32.gmra.mxu0 %v3147
        %v3523 = vpop.f32.mrf.mxu0
        %v3524 = vadd.f32 0.0, %v3523
        %v3525 = vpop.f32.mrf.mxu0
        %3526 = vmatprep.mubr.f32.mxu0 0.0
        %3527 = vmatmul.mubr.f32.gmra.mxu0 %v3150
        %v3528 = vpop.f32.mrf.mxu0
        %v3529 = vadd.f32 0.0, %v3528
        %v3530 = vpop.f32.mrf.mxu0
        %3531 = vmatprep.mubr.f32.mxu0 0.0
        %3532 = vmatmul.mubr.f32.gmra.mxu0 %v3153
        %v3533 = vpop.f32.mrf.mxu0
        %v3534 = vadd.f32 0.0, %v3533
        %v3535 = vpop.f32.mrf.mxu0
        %3536 = vmatprep.mubr.f32.mxu0 0.0
        %3537 = vmatmul.mubr.f32.gmra.mxu0 %v3156
        %v3538 = vpop.f32.mrf.mxu0
        %v3539 = vadd.f32 0.0, %v3538
        %v3540 = vpop.f32.mrf.mxu0
        %3541 = vmatprep.mubr.f32.mxu0 0.0
        %3542 = vmatmul.mubr.f32.gmra.mxu0 %v3159
        %v3543 = vpop.f32.mrf.mxu0
        %v3544 = vadd.f32 0.0, %v3543
        %v3545 = vpop.f32.mrf.mxu0
        %3546 = vmatprep.mubr.f32.mxu0 0.0
        %3547 = vmatmul.mubr.f32.gmra.mxu0 %v3162
        %v3548 = vpop.f32.mrf.mxu0
        %v3549 = vadd.f32 0.0, %v3548
        %v3550 = vpop.f32.mrf.mxu0
        %3551 = vdwg.mxu0
        %v3552 = vadd.f32 %v1924, %v3234
        %v3553 = vadd.f32 %v1925, %v3239
        %v3554 = vadd.f32 %v1926, %v3244
        %v3555 = vadd.f32 %v1927, %v3249
        %v3556 = vadd.f32 %v1928, %v3254
        %v3557 = vadd.f32 %v1929, %v3259
        %v3558 = vadd.f32 %v1930, %v3264
        %v3559 = vadd.f32 %v1931, %v3269
        %v3560 = vadd.f32 %v1932, %v3274
        %v3561 = vadd.f32 %v1933, %v3279
        %v3562 = vadd.f32 %v1934, %v3284
        %v3563 = vadd.f32 %v1935, %v3289
        %v3564 = vadd.f32 %v1936, %v3294
        %v3565 = vadd.f32 %v1937, %v3299
        %v3566 = vadd.f32 %v1938, %v3304
        %v3567 = vadd.f32 %v1939, %v3309
        %v3568 = vadd.f32 %v1940, %v3314
        %v3569 = vadd.f32 %v1941, %v3319
        %v3570 = vadd.f32 %v1942, %v3324
        %v3571 = vadd.f32 %v1943, %v3329
        %v3572 = vadd.f32 %v1944, %v3334
        %v3573 = vadd.f32 %v1945, %v3339
        %v3574 = vadd.f32 %v1946, %v3344
        %v3575 = vadd.f32 %v1947, %v3349
        %v3576 = vadd.f32 %v1948, %v3354
        %v3577 = vadd.f32 %v1949, %v3359
        %v3578 = vadd.f32 %v1950, %v3364
        %v3579 = vadd.f32 %v1951, %v3369
        %v3580 = vadd.f32 %v1952, %v3374
        %v3581 = vadd.f32 %v1953, %v3379
        %v3582 = vadd.f32 %v1954, %v3384
        %v3583 = vadd.f32 %v1955, %v3389
        %v3584 = vadd.f32 %v1956, %v3394
        %v3585 = vadd.f32 %v1957, %v3399
        %v3586 = vadd.f32 %v1958, %v3404
        %v3587 = vadd.f32 %v1959, %v3409
        %v3588 = vadd.f32 %v1960, %v3414
        %v3589 = vadd.f32 %v1961, %v3419
        %v3590 = vadd.f32 %v1962, %v3424
        %v3591 = vadd.f32 %v1963, %v3429
        %v3592 = vadd.f32 %v1964, %v3434
        %v3593 = vadd.f32 %v1965, %v3439
        %v3594 = vadd.f32 %v1966, %v3444
        %v3595 = vadd.f32 %v1967, %v3449
        %v3596 = vadd.f32 %v1968, %v3454
        %v3597 = vadd.f32 %v1969, %v3459
        %v3598 = vadd.f32 %v1970, %v3464
        %v3599 = vadd.f32 %v1971, %v3469
        %v3600 = vadd.f32 %v1972, %v3474
        %v3601 = vadd.f32 %v1973, %v3479
        %v3602 = vadd.f32 %v1974, %v3484
        %v3603 = vadd.f32 %v1975, %v3489
        %v3604 = vadd.f32 %v1976, %v3494
        %v3605 = vadd.f32 %v1977, %v3499
        %v3606 = vadd.f32 %v1978, %v3504
        %v3607 = vadd.f32 %v1979, %v3509
        %v3608 = vadd.f32 %v1980, %v3514
        %v3609 = vadd.f32 %v1981, %v3519
        %v3610 = vadd.f32 %v1982, %v3524
        %v3611 = vadd.f32 %v1983, %v3529
        %v3612 = vadd.f32 %v1984, %v3534
        %v3613 = vadd.f32 %v1985, %v3539
        %v3614 = vadd.f32 %v1986, %v3544
        %v3615 = vadd.f32 %v1987, %v3549
        %3616 = vst [vmem:[%s288] sm:$0xff] %v3552
        %3617 = vst [vmem:[%s288 + $0x8] sm:$0xff] %v3553
        %3618 = vst [vmem:[%s288 + $0x10] sm:$0xff] %v3554
        %3619 = vst [vmem:[%s288 + $0x18] sm:$0xff] %v3555
        %3620 = vst [vmem:[%s288 + $0x20] sm:$0xff] %v3556
        %3621 = vst [vmem:[%s288 + $0x28] sm:$0xff] %v3557
        %3622 = vst [vmem:[%s288 + $0x30] sm:$0xff] %v3558
        %3623 = vst [vmem:[%s288 + $0x38] sm:$0xff] %v3559
        %3624 = vst [vmem:[%s288 + $0x40] sm:$0xff] %v3560
        %3625 = vst [vmem:[%s288 + $0x48] sm:$0xff] %v3561
        %3626 = vst [vmem:[%s288 + $0x50] sm:$0xff] %v3562
        %3627 = vst [vmem:[%s288 + $0x58] sm:$0xff] %v3563
        %3628 = vst [vmem:[%s288 + $0x60] sm:$0xff] %v3564
        %3629 = vst [vmem:[%s288 + $0x68] sm:$0xff] %v3565
        %3630 = vst [vmem:[%s288 + $0x70] sm:$0xff] %v3566
        %3631 = vst [vmem:[%s288 + $0x78] sm:$0xff] %v3567
        %3632 = vst [vmem:[%s288 + $0x80] sm:$0xff] %v3568
        %3633 = vst [vmem:[%s288 + $0x88] sm:$0xff] %v3569
        %3634 = vst [vmem:[%s288 + $0x90] sm:$0xff] %v3570
        %3635 = vst [vmem:[%s288 + $0x98] sm:$0xff] %v3571
        %3636 = vst [vmem:[%s288 + $0xa0] sm:$0xff] %v3572
        %3637 = vst [vmem:[%s288 + $0xa8] sm:$0xff] %v3573
        %3638 = vst [vmem:[%s288 + $0xb0] sm:$0xff] %v3574
        %3639 = vst [vmem:[%s288 + $0xb8] sm:$0xff] %v3575
        %3640 = vst [vmem:[%s288 + $0xc0] sm:$0xff] %v3576
        %3641 = vst [vmem:[%s288 + $0xc8] sm:$0xff] %v3577
        %3642 = vst [vmem:[%s288 + $0xd0] sm:$0xff] %v3578
        %3643 = vst [vmem:[%s288 + $0xd8] sm:$0xff] %v3579
        %3644 = vst [vmem:[%s288 + $0xe0] sm:$0xff] %v3580
        %3645 = vst [vmem:[%s288 + $0xe8] sm:$0xff] %v3581
        %3646 = vst [vmem:[%s288 + $0xf0] sm:$0xff] %v3582
        %3647 = vst [vmem:[%s288 + $0xf8] sm:$0xff] %v3583
        %3648 = vst [vmem:[%s288 + $0x100] sm:$0xff] %v3584
        %3649 = vst [vmem:[%s288 + $0x108] sm:$0xff] %v3585
        %3650 = vst [vmem:[%s288 + $0x110] sm:$0xff] %v3586
        %3651 = vst [vmem:[%s288 + $0x118] sm:$0xff] %v3587
        %3652 = vst [vmem:[%s288 + $0x120] sm:$0xff] %v3588
        %3653 = vst [vmem:[%s288 + $0x128] sm:$0xff] %v3589
        %3654 = vst [vmem:[%s288 + $0x130] sm:$0xff] %v3590
        %3655 = vst [vmem:[%s288 + $0x138] sm:$0xff] %v3591
        %3656 = vst [vmem:[%s288 + $0x140] sm:$0xff] %v3592
        %3657 = vst [vmem:[%s288 + $0x148] sm:$0xff] %v3593
        %3658 = vst [vmem:[%s288 + $0x150] sm:$0xff] %v3594
        %3659 = vst [vmem:[%s288 + $0x158] sm:$0xff] %v3595
        %3660 = vst [vmem:[%s288 + $0x160] sm:$0xff] %v3596
        %3661 = vst [vmem:[%s288 + $0x168] sm:$0xff] %v3597
        %3662 = vst [vmem:[%s288 + $0x170] sm:$0xff] %v3598
        %3663 = vst [vmem:[%s288 + $0x178] sm:$0xff] %v3599
        %3664 = vst [vmem:[%s288 + $0x180] sm:$0xff] %v3600
        %3665 = vst [vmem:[%s288 + $0x188] sm:$0xff] %v3601
        %3666 = vst [vmem:[%s288 + $0x190] sm:$0xff] %v3602
        %3667 = vst [vmem:[%s288 + $0x198] sm:$0xff] %v3603
        %3668 = vst [vmem:[%s288 + $0x1a0] sm:$0xff] %v3604
        %3669 = vst [vmem:[%s288 + $0x1a8] sm:$0xff] %v3605
        %3670 = vst [vmem:[%s288 + $0x1b0] sm:$0xff] %v3606
        %3671 = vst [vmem:[%s288 + $0x1b8] sm:$0xff] %v3607
        %3672 = vst [vmem:[%s288 + $0x1c0] sm:$0xff] %v3608
        %3673 = vst [vmem:[%s288 + $0x1c8] sm:$0xff] %v3609
        %3674 = vst [vmem:[%s288 + $0x1d0] sm:$0xff] %v3610
        %3675 = vst [vmem:[%s288 + $0x1d8] sm:$0xff] %v3611
        %3676 = vst [vmem:[%s288 + $0x1e0] sm:$0xff] %v3612
        %3677 = vst [vmem:[%s288 + $0x1e8] sm:$0xff] %v3613
        %3678 = vst [vmem:[%s288 + $0x1f0] sm:$0xff] %v3614
        %3679 = vst [vmem:[%s288 + $0x1f8] sm:$0xff] %v3615
        %3680 = vst.msk [vmem:[%s294] sm:$0xff] %vm1342, %v2908
        %3681 = vst.msk [vmem:[%s294 + $0x8] sm:$0xff] %vm1342, %v2909
        %3682 = vst.msk [vmem:[%s294 + $0x10] sm:$0xff] %vm1342, %v2910
        %3683 = vst.msk [vmem:[%s294 + $0x18] sm:$0xff] %vm1342, %v2911
        %3684 = vst.msk [vmem:[%s294 + $0x20] sm:$0xff] %vm1342, %v2912
        %3685 = vst.msk [vmem:[%s294 + $0x28] sm:$0xff] %vm1342, %v2913
        %3686 = vst.msk [vmem:[%s294 + $0x30] sm:$0xff] %vm1342, %v2914
        %3687 = vst.msk [vmem:[%s294 + $0x38] sm:$0xff] %vm1342, %v2915
        %3688 = vst.msk [vmem:[%s294 + $0x40] sm:$0xff] %vm1342, %v2916
        %3689 = vst.msk [vmem:[%s294 + $0x48] sm:$0xff] %vm1342, %v2917
        %3690 = vst.msk [vmem:[%s294 + $0x50] sm:$0xff] %vm1342, %v2918
        %3691 = vst.msk [vmem:[%s294 + $0x58] sm:$0xff] %vm1342, %v2919
        %3692 = vst.msk [vmem:[%s294 + $0x60] sm:$0xff] %vm1342, %v2920
        %3693 = vst.msk [vmem:[%s294 + $0x68] sm:$0xff] %vm1342, %v2921
        %3694 = vst.msk [vmem:[%s294 + $0x70] sm:$0xff] %vm1342, %v2922
        %3695 = vst.msk [vmem:[%s294 + $0x78] sm:$0xff] %vm1342, %v2923
        %3696 = vst.msk [vmem:[%s294 + $0x80] sm:$0xff] %vm1342, %v2924
        %3697 = vst.msk [vmem:[%s294 + $0x88] sm:$0xff] %vm1342, %v2925
        %3698 = vst.msk [vmem:[%s294 + $0x90] sm:$0xff] %vm1342, %v2926
        %3699 = vst.msk [vmem:[%s294 + $0x98] sm:$0xff] %vm1342, %v2927
        %3700 = vst.msk [vmem:[%s294 + $0xa0] sm:$0xff] %vm1342, %v2928
        %3701 = vst.msk [vmem:[%s294 + $0xa8] sm:$0xff] %vm1342, %v2929
        %3702 = vst.msk [vmem:[%s294 + $0xb0] sm:$0xff] %vm1342, %v2930
        %3703 = vst.msk [vmem:[%s294 + $0xb8] sm:$0xff] %vm1342, %v2931
        %3704 = vst.msk [vmem:[%s294 + $0xc0] sm:$0xff] %vm1342, %v2932
        %3705 = vst.msk [vmem:[%s294 + $0xc8] sm:$0xff] %vm1342, %v2933
        %3706 = vst.msk [vmem:[%s294 + $0xd0] sm:$0xff] %vm1342, %v2934
        %3707 = vst.msk [vmem:[%s294 + $0xd8] sm:$0xff] %vm1342, %v2935
        %3708 = vst.msk [vmem:[%s294 + $0xe0] sm:$0xff] %vm1342, %v2936
        %3709 = vst.msk [vmem:[%s294 + $0xe8] sm:$0xff] %vm1342, %v2937
        %3710 = vst.msk [vmem:[%s294 + $0xf0] sm:$0xff] %vm1342, %v2938
        %3711 = vst.msk [vmem:[%s294 + $0xf8] sm:$0xff] %vm1342, %v2939
        %3712 = vst.msk [vmem:[%s294 + $0x100] sm:$0xff] %vm1342, %v2940
        %3713 = vst.msk [vmem:[%s294 + $0x108] sm:$0xff] %vm1342, %v2941
        %3714 = vst.msk [vmem:[%s294 + $0x110] sm:$0xff] %vm1342, %v2942
        %3715 = vst.msk [vmem:[%s294 + $0x118] sm:$0xff] %vm1342, %v2943
        %3716 = vst.msk [vmem:[%s294 + $0x120] sm:$0xff] %vm1342, %v2944
        %3717 = vst.msk [vmem:[%s294 + $0x128] sm:$0xff] %vm1342, %v2945
        %3718 = vst.msk [vmem:[%s294 + $0x130] sm:$0xff] %vm1342, %v2946
        %3719 = vst.msk [vmem:[%s294 + $0x138] sm:$0xff] %vm1342, %v2947
        %3720 = vst.msk [vmem:[%s294 + $0x140] sm:$0xff] %vm1342, %v2948
        %3721 = vst.msk [vmem:[%s294 + $0x148] sm:$0xff] %vm1342, %v2949
        %3722 = vst.msk [vmem:[%s294 + $0x150] sm:$0xff] %vm1342, %v2950
        %3723 = vst.msk [vmem:[%s294 + $0x158] sm:$0xff] %vm1342, %v2951
        %3724 = vst.msk [vmem:[%s294 + $0x160] sm:$0xff] %vm1342, %v2952
        %3725 = vst.msk [vmem:[%s294 + $0x168] sm:$0xff] %vm1342, %v2953
        %3726 = vst.msk [vmem:[%s294 + $0x170] sm:$0xff] %vm1342, %v2954
        %3727 = vst.msk [vmem:[%s294 + $0x178] sm:$0xff] %vm1342, %v2955
        %3728 = vst.msk [vmem:[%s294 + $0x180] sm:$0xff] %vm1342, %v2956
        %3729 = vst.msk [vmem:[%s294 + $0x188] sm:$0xff] %vm1342, %v2957
        %3730 = vst.msk [vmem:[%s294 + $0x190] sm:$0xff] %vm1342, %v2958
        %3731 = vst.msk [vmem:[%s294 + $0x198] sm:$0xff] %vm1342, %v2959
        %3732 = vst.msk [vmem:[%s294 + $0x1a0] sm:$0xff] %vm1342, %v2960
        %3733 = vst.msk [vmem:[%s294 + $0x1a8] sm:$0xff] %vm1342, %v2961
        %3734 = vst.msk [vmem:[%s294 + $0x1b0] sm:$0xff] %vm1342, %v2962
        %3735 = vst.msk [vmem:[%s294 + $0x1b8] sm:$0xff] %vm1342, %v2963
        %3736 = vst.msk [vmem:[%s294 + $0x1c0] sm:$0xff] %vm1342, %v2964
        %3737 = vst.msk [vmem:[%s294 + $0x1c8] sm:$0xff] %vm1342, %v2965
        %3738 = vst.msk [vmem:[%s294 + $0x1d0] sm:$0xff] %vm1342, %v2966
        %3739 = vst.msk [vmem:[%s294 + $0x1d8] sm:$0xff] %vm1342, %v2967
        %3740 = vst.msk [vmem:[%s294 + $0x1e0] sm:$0xff] %vm1342, %v2968
        %3741 = vst.msk [vmem:[%s294 + $0x1e8] sm:$0xff] %vm1342, %v2969
        %3742 = vst.msk [vmem:[%s294 + $0x1f0] sm:$0xff] %vm1342, %v2970
        %3743 = vst.msk [vmem:[%s294 + $0x1f8] sm:$0xff] %vm1342, %v2971
        %s3744 = smul.u32 64, %s20
        %p3745 = scmp.lt.s32.totalorder %s3744, 127
        %s3746 = scalar_select %p3745, %s3744, 127
        %s3747 = smul.addr %s3746, 8
        %s3748 = scalar_lea.vmem %s5, %s3747
        %s3749 = smul.u32 64, %s20
        %p3750 = scmp.lt.s32.totalorder %s3749, 127
        %s3751 = scalar_select %p3750, %s3749, 127
        %s3752 = smul.addr %s3751, 8
        %s3753 = scalar_lea.vmem %s6, %s3752
        // Predicated region
        $region49: #{normalizing_flow.1} parent=39 // pred_check
          %p3754 = pneg %p148
        $region50: #{normalizing_flow.1} parent=39 // pred_check_branch
          %3756 = sbr.rel (%p3754) target = $region52
        $region51: #{normalizing_flow.1} parent=39 // pred_region
          %s3757 = smul.u32 64, %s20
        $region52: #{normalizing_flow.1} parent=39 // pred_fallthru
          _
        // Predicated region
        $region53: #{normalizing_flow.1} parent=39 // pred_check
          %p3758 = pneg %p174
        $region54: #{normalizing_flow.1} parent=39 // pred_check_branch
          %3760 = sbr.rel (%p3758) target = $region56
        $region55: #{normalizing_flow.1} parent=39 // pred_region
          %s3761 = smul.u32 64, %s20
        $region56: #{normalizing_flow.1} parent=39 // pred_fallthru
          _
      $region40: #{normalizing_flow.1} parent=5 // pred_fallthru
        _
      %p3762 = scmp.le.s32.totalorder 2, %s15
      // Predicated region
      $region57: #{normalizing_flow.1} parent=5 // pred_check
        %p3763 = pneg %p3762
      $region58: #{normalizing_flow.1} parent=5 // pred_check_branch
        %3765 = sbr.rel (%p3763) target = $region60
      $region59: #{normalizing_flow.1} parent=5 // pred_region
        %s3766 = ssub.s32 %s15, 2
        // Predicated region
        $region61: #{normalizing_flow.1} parent=59 // pred_check
          %p3767 = pneg %p154
        $region62: #{normalizing_flow.1} parent=59 // pred_check_branch
          %3769 = sbr.rel (%p3767) target = $region64
        $region63: #{normalizing_flow.1} parent=59 // pred_region
          %s3770 = smul.u32 64, %s21
          %p3771 = scmp.lt.s32.totalorder %s3770, 127
          %s3772 = scalar_select %p3771, %s3770, 127
          %s3773 = smul.addr %s3772, 8
          %s3774 = scalar_lea.vmem %s5, %s3773
        $region64: #{normalizing_flow.1} parent=59 // pred_fallthru
          _
        // Predicated region
        $region65: #{normalizing_flow.1} parent=59 // pred_check
          %p3775 = pneg %p180
        $region66: #{normalizing_flow.1} parent=59 // pred_check_branch
          %3777 = sbr.rel (%p3775) target = $region68
        $region67: #{normalizing_flow.1} parent=59 // pred_region
          %s3778 = smul.u32 64, %s21
          %p3779 = scmp.lt.s32.totalorder %s3778, 127
          %s3780 = scalar_select %p3779, %s3778, 127
          %s3781 = smul.addr %s3780, 8
          %s3782 = scalar_lea.vmem %s6, %s3781
        $region68: #{normalizing_flow.1} parent=59 // pred_fallthru
          _
      $region60: #{normalizing_flow.1} parent=5 // pred_fallthru
        _
    $region6: #{normalizing_flow.1} parent=1 // loop_footer
      %s19 = sadd.s32 1, %s15
    $region7: #{normalizing_flow.1} parent=1 // loop_footer_branch
      %14 = sbr.rel target = $region3
    $region8: #{normalizing_flow.1} parent=1 // loop_exit
      _
    %3783 = vsyncpa [#allocation3], 1
    %s3784 = scalar_lea.sflag [#allocation3], 1
    %3785 = vsyncpa %s3784, 1
    %3786 = vsyncpa [#allocation5], 1

</llo_original>
